<compile_context>
chip_gen: v6e
topology: v6e:2x2x1
jax: 0.10.0
libtpu: 0.0.40
codegen_flags: <defaults>
</compile_context>

<pallas_src>
import functools

import numpy as np

import jax
import jax.numpy as jnp
from jax.experimental import pallas as pl
from jax.experimental.pallas import tpu as pltpu


def _build_tap_masks(H, W):
    """(8, 9*H*W) f32 0/1 validity masks for the 9 taps of a 3x3 SAME conv on a
    row-major flattened plane.  tap t covers offset (oy, ox); mask is 1 where the
    2-D neighbour (row+oy, col+ox) is in bounds.  All 8 sublane rows identical so
    it multiplies (8, HW) chunk slabs directly.  Tiny (a few KB) VMEM constant."""
    HW = H * W
    lin = np.arange(HW)
    col = lin % W
    row = lin // W
    cols = []
    for oy in (-1, 0, 1):
        for ox in (-1, 0, 1):
            valid = ((col + ox >= 0) & (col + ox < W) &
                     (row + oy >= 0) & (row + oy < H)).astype(np.float32)
            cols.append(valid)
    flat = np.concatenate(cols)                       # (9*HW,)
    return jnp.asarray(np.tile(flat[None, :], (8, 1)))  # (8, 9*HW)


def _pick_batch_tile(n_pad):
    """n_pad is a multiple of 8.  Pick a block of batch rows that is a multiple
    of 8, capped at 32 (the kernel chunks it into 8-row pieces internally), and
    keep at least 2 grid steps whenever possible so both v7x TensorCores get
    work.  Bigger blocks amortize the ~0.35 us per-grid-step overhead."""
    nb = 8
    while (nb * 2 <= 32) and (n_pad % (nb * 2) == 0) and (n_pad // (nb * 2) >= 2):
        nb *= 2
    return nb


def eca_basic_block_kernel(x_ref, mask_ref, w1_ref, b1_ref, w2_ref, b2_ref,
                           ecaw_ref, o_ref, *, C, H, W, n_chunks):
    HW = H * W
    inv_hw = 1.0 / float(HW)

    # ---- hoist every scalar read (SMEM slds) out of the conv loops ----------
    w1 = [w1_ref[i] for i in range(C * C * 9)]
    w2 = [w2_ref[i] for i in range(C * C * 9)]
    b1 = [b1_ref[c] for c in range(C)]
    b2 = [b2_ref[c] for c in range(C)]
    e0, e1, e2 = ecaw_ref[0], ecaw_ref[1], ecaw_ref[2]

    # np.roll semantics: rolled[l] = p[l + oy*W + ox]  ->  shift = -(oy*W+ox) mod HW
    shifts = []
    for oy in (-1, 0, 1):
        for ox in (-1, 0, 1):
            shifts.append((-(oy * W + ox)) % HW)

    # precomputed edge-validity masks (center tap t=4 needs none)
    tap_masks = [None] * 9
    for t in range(9):
        if t != 4:
            tap_masks[t] = mask_ref[:, t * HW:(t + 1) * HW]      # (8, HW)

    def conv3x3(planes, w, b):
        """3x3 SAME conv on C flattened (8, HW) planes.  Accumulators start at
        the folded BN bias.  Each rolled/masked tap is computed once per input
        channel and reused for all C output channels (VPU scalar-FMA)."""
        accs = [jnp.full((8, HW), b[co], dtype=jnp.float32) for co in range(C)]
        for ci in range(C):
            p = planes[ci]
            for t in range(9):
                s = shifts[t]
                tap = pltpu.roll(p, s, axis=1) if s else p
                if tap_masks[t] is not None:
                    tap = tap * tap_masks[t]
                for co in range(C):
                    accs[co] = accs[co] + w[(co * C + ci) * 9 + t] * tap
        return accs

    def chunk(r0):
        # channel c occupies lanes [c*HW, (c+1)*HW): 128-aligned lane slices.
        planes = [x_ref[pl.ds(r0, 8), pl.ds(c * HW, HW)].astype(jnp.float32)
                  for c in range(C)]

        # conv1 (+ folded BN1) -> relu
        h1 = [jnp.maximum(v, 0.0) for v in conv3x3(planes, w1, b1)]
        # conv2 (+ folded BN2)
        h2 = conv3x3(h1, w2, b2)

        # ECA: per-channel global average -> 1-D conv (k=3, zero pad) across
        # channels -> sigmoid gate; then residual add and final relu.
        means = [jnp.sum(h2[c], axis=1, keepdims=True) * inv_hw for c in range(C)]
        for c in range(C):
            z = e1 * means[c]
            if c - 1 >= 0:
                z = z + e0 * means[c - 1]
            if c + 1 < C:
                z = z + e2 * means[c + 1]
            gate = jax.nn.sigmoid(z)                              # (8, 1)
            res = x_ref[pl.ds(r0, 8), pl.ds(c * HW, HW)].astype(jnp.float32)
            out = jnp.maximum(h2[c] * gate + res, 0.0)
            # lane-dense, 128-aligned, unmasked store
            o_ref[pl.ds(r0, 8), pl.ds(c * HW, HW)] = out.astype(o_ref.dtype)

    if n_chunks == 1:
        chunk(0)
    else:
        def body(i, carry):
            chunk(pl.multiple_of(i * 8, 8))
            return carry
        jax.lax.fori_loop(0, n_chunks, body, 0, unroll=True)


def eca_basic_block(x, w1, w2, bn1, bn2, eca_w, eps=1e-5):
    """x: (N, C, H, W).  w1, w2: (C, C, 3, 3) OIHW.  bn*: dicts with
    gamma/beta/mean/var of shape (C,).  eca_w: (3,).  Eval-mode BatchNorm."""
    N, C, H, W = x.shape
    HW = H * W

    def fold(bn):
        scale = bn["gamma"].astype(jnp.float32) / jnp.sqrt(
            bn["var"].astype(jnp.float32) + eps)
        bias = bn["beta"].astype(jnp.float32) - bn["mean"].astype(jnp.float32) * scale
        return scale, bias

    s1, b1 = fold(bn1)
    s2, b2 = fold(bn2)
    # Fold BN scale into conv weights host-side; kernel only adds the bias.
    w1f = (w1.astype(jnp.float32) * s1[:, None, None, None]).reshape(-1)
    w2f = (w2.astype(jnp.float32) * s2[:, None, None, None]).reshape(-1)
    ecaf = eca_w.reshape(-1).astype(jnp.float32)

    masks = _build_tap_masks(H, W)                    # (8, 9*HW) f32 constant

    # Free layout change (pure reshape, no transpose / extra HBM pass):
    # (N, C, H, W) -> (N, C*HW); channel c = lanes [c*HW, (c+1)*HW).
    x2 = x.reshape(N, C * HW)
    N_pad = ((N + 7) // 8) * 8
    if N_pad != N:
        x2 = jnp.pad(x2, ((0, N_pad - N), (0, 0)))    # tail rows computed, discarded

    nb = _pick_batch_tile(N_pad)
    n_chunks = nb // 8
    grid = (N_pad // nb,)

    smem = pl.BlockSpec(memory_space=pltpu.MemorySpace.SMEM)
    kern = functools.partial(eca_basic_block_kernel, C=C, H=H, W=W,
                             n_chunks=n_chunks)

    out = pl.pallas_call(
        kern,
        out_shape=jax.ShapeDtypeStruct((N_pad, C * HW), x.dtype),
        grid=grid,
        in_specs=[
            pl.BlockSpec((nb, C * HW), lambda n: (n, 0)),   # x block (VMEM)
            pl.BlockSpec((8, 9 * HW), lambda n: (0, 0)),    # tap masks (VMEM const)
            smem, smem,                                     # conv1 w (BN-scaled), bias1
            smem, smem,                                     # conv2 w (BN-scaled), bias2
            smem,                                           # eca weights
        ],
        out_specs=pl.BlockSpec((nb, C * HW), lambda n: (n, 0)),
        compiler_params=pltpu.CompilerParams(
            dimension_semantics=("parallel",)),
    )(x2, masks, w1f, b1, w2f, b2, ecaf)

    return out[:N].reshape(N, C, H, W)


def reference(x, w1, w2, bn1, bn2, eca_w, eps=1e-5):
    """Pure-JAX reference of the PyTorch forward (eval-mode BN, downsample=None)."""
    def bn(y, p):
        g = p["gamma"][None, :, None, None]
        b = p["beta"][None, :, None, None]
        m = p["mean"][None, :, None, None]
        v = p["var"][None, :, None, None]
        return (y - m) / jnp.sqrt(v + eps) * g + b

    dn = ("NCHW", "OIHW", "NCHW")
    out = jax.lax.conv_general_dilated(x, w1, (1, 1), "SAME",
                                       dimension_numbers=dn)
    out = jax.nn.relu(bn(out, bn1))
    out = jax.lax.conv_general_dilated(out, w2, (1, 1), "SAME",
                                       dimension_numbers=dn)
    out = bn(out, bn2)
    y = out.mean(axis=(2, 3))                         # (N, C)
    yp = jnp.pad(y, ((0, 0), (1, 1)))
    z = eca_w[0] * yp[:, :-2] + eca_w[1] * yp[:, 1:-1] + eca_w[2] * yp[:, 2:]
    gate = jax.nn.sigmoid(z)[:, :, None, None]
    out = out * gate + x
    return jax.nn.relu(out)


if __name__ == "__main__":
    N, C, H, W = 2, 4, 16, 16
    key = jax.random.PRNGKey(0)
    ks = jax.random.split(key, 12)

    x = jax.random.normal(ks[0], (N, C, H, W), jnp.float32)
    w1 = jax.random.normal(ks[1], (C, C, 3, 3), jnp.float32) * 0.2
    w2 = jax.random.normal(ks[2], (C, C, 3, 3), jnp.float32) * 0.2
    bn1 = dict(
        gamma=jax.random.uniform(ks[3], (C,), minval=0.5, maxval=1.5),
        beta=jax.random.normal(ks[4], (C,)) * 0.1,
        mean=jax.random.normal(ks[5], (C,)) * 0.1,
        var=jax.random.uniform(ks[6], (C,), minval=0.5, maxval=1.5),
    )
    bn2 = dict(
        gamma=jax.random.uniform(ks[7], (C,), minval=0.5, maxval=1.5),
        beta=jax.random.normal(ks[8], (C,)) * 0.1,
        mean=jax.random.normal(ks[9], (C,)) * 0.1,
        var=jax.random.uniform(ks[10], (C,), minval=0.5, maxval=1.5),
    )
    eca_w = jax.random.normal(ks[11], (3,), jnp.float32) * 0.5

    out = eca_basic_block(x, w1, w2, bn1, bn2, eca_w)
    out = jax.block_until_ready(out)

    ref = reference(x, w1, w2, bn1, bn2, eca_w)
    assert out.shape == (N, C, H, W)
    if not jnp.allclose(out, ref, atol=1e-4, rtol=1e-4):
        raise AssertionError(
            f"mismatch: max abs err = {jnp.max(jnp.abs(out - ref))}")
    print("KERNEL_OK")
</pallas_src>

<mosaic_0001>
module attributes {stable_mosaic.version = 11 : i64} {
  func.func @eca_basic_block_kernel(%arg0: i32, %arg1: memref<8x1024xf32, #tpu.memory_space<vmem>>, %arg2: memref<8x2304xf32, #tpu.memory_space<vmem>>, %arg3: memref<144xf32, #tpu.memory_space<smem>>, %arg4: memref<4xf32, #tpu.memory_space<smem>>, %arg5: memref<144xf32, #tpu.memory_space<smem>>, %arg6: memref<4xf32, #tpu.memory_space<smem>>, %arg7: memref<3xf32, #tpu.memory_space<smem>>, %arg8: memref<8x1024xf32, #tpu.memory_space<vmem>>) attributes {dimension_semantics = [#tpu.dimension_semantics<parallel>], iteration_bounds = array<i64: 1>, scalar_prefetch = 0 : i64, scratch_operands = 0 : i64, tpu.core_type = #tpu.core_type<tc>, window_params = [{transform_indices = @transform_0, window_bounds = array<i64: 8, 1024>}, {pipeline_mode = #tpu.pipeline_mode<synchronous>, transform_indices = @transform_1, window_bounds = array<i64: 8, 2304>}, {transform_indices = @transform_2, window_bounds = array<i64: 144>}, {transform_indices = @transform_3, window_bounds = array<i64: 4>}, {transform_indices = @transform_4, window_bounds = array<i64: 144>}, {transform_indices = @transform_5, window_bounds = array<i64: 4>}, {transform_indices = @transform_6, window_bounds = array<i64: 3>}, {transform_indices = @transform_7, window_bounds = array<i64: 8, 1024>}]} {
    %c0 = arith.constant 0 : index
    %0 = memref.load %arg3[%c0] : memref<144xf32, #tpu.memory_space<smem>>
    %c1 = arith.constant 1 : index
    %1 = memref.load %arg3[%c1] : memref<144xf32, #tpu.memory_space<smem>>
    %c2 = arith.constant 2 : index
    %2 = memref.load %arg3[%c2] : memref<144xf32, #tpu.memory_space<smem>>
    %c3 = arith.constant 3 : index
    %3 = memref.load %arg3[%c3] : memref<144xf32, #tpu.memory_space<smem>>
    %c4 = arith.constant 4 : index
    %4 = memref.load %arg3[%c4] : memref<144xf32, #tpu.memory_space<smem>>
    %c5 = arith.constant 5 : index
    %5 = memref.load %arg3[%c5] : memref<144xf32, #tpu.memory_space<smem>>
    %c6 = arith.constant 6 : index
    %6 = memref.load %arg3[%c6] : memref<144xf32, #tpu.memory_space<smem>>
    %c7 = arith.constant 7 : index
    %7 = memref.load %arg3[%c7] : memref<144xf32, #tpu.memory_space<smem>>
    %c8 = arith.constant 8 : index
    %8 = memref.load %arg3[%c8] : memref<144xf32, #tpu.memory_space<smem>>
    %c9 = arith.constant 9 : index
    %9 = memref.load %arg3[%c9] : memref<144xf32, #tpu.memory_space<smem>>
    %c10 = arith.constant 10 : index
    %10 = memref.load %arg3[%c10] : memref<144xf32, #tpu.memory_space<smem>>
    %c11 = arith.constant 11 : index
    %11 = memref.load %arg3[%c11] : memref<144xf32, #tpu.memory_space<smem>>
    %c12 = arith.constant 12 : index
    %12 = memref.load %arg3[%c12] : memref<144xf32, #tpu.memory_space<smem>>
    %c13 = arith.constant 13 : index
    %13 = memref.load %arg3[%c13] : memref<144xf32, #tpu.memory_space<smem>>
    %c14 = arith.constant 14 : index
    %14 = memref.load %arg3[%c14] : memref<144xf32, #tpu.memory_space<smem>>
    %c15 = arith.constant 15 : index
    %15 = memref.load %arg3[%c15] : memref<144xf32, #tpu.memory_space<smem>>
    %c16 = arith.constant 16 : index
    %16 = memref.load %arg3[%c16] : memref<144xf32, #tpu.memory_space<smem>>
    %c17 = arith.constant 17 : index
    %17 = memref.load %arg3[%c17] : memref<144xf32, #tpu.memory_space<smem>>
    %c18 = arith.constant 18 : index
    %18 = memref.load %arg3[%c18] : memref<144xf32, #tpu.memory_space<smem>>
    %c19 = arith.constant 19 : index
    %19 = memref.load %arg3[%c19] : memref<144xf32, #tpu.memory_space<smem>>
    %c20 = arith.constant 20 : index
    %20 = memref.load %arg3[%c20] : memref<144xf32, #tpu.memory_space<smem>>
    %c21 = arith.constant 21 : index
    %21 = memref.load %arg3[%c21] : memref<144xf32, #tpu.memory_space<smem>>
    %c22 = arith.constant 22 : index
    %22 = memref.load %arg3[%c22] : memref<144xf32, #tpu.memory_space<smem>>
    %c23 = arith.constant 23 : index
    %23 = memref.load %arg3[%c23] : memref<144xf32, #tpu.memory_space<smem>>
    %c24 = arith.constant 24 : index
    %24 = memref.load %arg3[%c24] : memref<144xf32, #tpu.memory_space<smem>>
    %c25 = arith.constant 25 : index
    %25 = memref.load %arg3[%c25] : memref<144xf32, #tpu.memory_space<smem>>
    %c26 = arith.constant 26 : index
    %26 = memref.load %arg3[%c26] : memref<144xf32, #tpu.memory_space<smem>>
    %c27 = arith.constant 27 : index
    %27 = memref.load %arg3[%c27] : memref<144xf32, #tpu.memory_space<smem>>
    %c28 = arith.constant 28 : index
    %28 = memref.load %arg3[%c28] : memref<144xf32, #tpu.memory_space<smem>>
    %c29 = arith.constant 29 : index
    %29 = memref.load %arg3[%c29] : memref<144xf32, #tpu.memory_space<smem>>
    %c30 = arith.constant 30 : index
    %30 = memref.load %arg3[%c30] : memref<144xf32, #tpu.memory_space<smem>>
    %c31 = arith.constant 31 : index
    %31 = memref.load %arg3[%c31] : memref<144xf32, #tpu.memory_space<smem>>
    %c32 = arith.constant 32 : index
    %32 = memref.load %arg3[%c32] : memref<144xf32, #tpu.memory_space<smem>>
    %c33 = arith.constant 33 : index
    %33 = memref.load %arg3[%c33] : memref<144xf32, #tpu.memory_space<smem>>
    %c34 = arith.constant 34 : index
    %34 = memref.load %arg3[%c34] : memref<144xf32, #tpu.memory_space<smem>>
    %c35 = arith.constant 35 : index
    %35 = memref.load %arg3[%c35] : memref<144xf32, #tpu.memory_space<smem>>
    %c36 = arith.constant 36 : index
    %36 = memref.load %arg3[%c36] : memref<144xf32, #tpu.memory_space<smem>>
    %c37 = arith.constant 37 : index
    %37 = memref.load %arg3[%c37] : memref<144xf32, #tpu.memory_space<smem>>
    %c38 = arith.constant 38 : index
    %38 = memref.load %arg3[%c38] : memref<144xf32, #tpu.memory_space<smem>>
    %c39 = arith.constant 39 : index
    %39 = memref.load %arg3[%c39] : memref<144xf32, #tpu.memory_space<smem>>
    %c40 = arith.constant 40 : index
    %40 = memref.load %arg3[%c40] : memref<144xf32, #tpu.memory_space<smem>>
    %c41 = arith.constant 41 : index
    %41 = memref.load %arg3[%c41] : memref<144xf32, #tpu.memory_space<smem>>
    %c42 = arith.constant 42 : index
    %42 = memref.load %arg3[%c42] : memref<144xf32, #tpu.memory_space<smem>>
    %c43 = arith.constant 43 : index
    %43 = memref.load %arg3[%c43] : memref<144xf32, #tpu.memory_space<smem>>
    %c44 = arith.constant 44 : index
    %44 = memref.load %arg3[%c44] : memref<144xf32, #tpu.memory_space<smem>>
    %c45 = arith.constant 45 : index
    %45 = memref.load %arg3[%c45] : memref<144xf32, #tpu.memory_space<smem>>
    %c46 = arith.constant 46 : index
    %46 = memref.load %arg3[%c46] : memref<144xf32, #tpu.memory_space<smem>>
    %c47 = arith.constant 47 : index
    %47 = memref.load %arg3[%c47] : memref<144xf32, #tpu.memory_space<smem>>
    %c48 = arith.constant 48 : index
    %48 = memref.load %arg3[%c48] : memref<144xf32, #tpu.memory_space<smem>>
    %c49 = arith.constant 49 : index
    %49 = memref.load %arg3[%c49] : memref<144xf32, #tpu.memory_space<smem>>
    %c50 = arith.constant 50 : index
    %50 = memref.load %arg3[%c50] : memref<144xf32, #tpu.memory_space<smem>>
    %c51 = arith.constant 51 : index
    %51 = memref.load %arg3[%c51] : memref<144xf32, #tpu.memory_space<smem>>
    %c52 = arith.constant 52 : index
    %52 = memref.load %arg3[%c52] : memref<144xf32, #tpu.memory_space<smem>>
    %c53 = arith.constant 53 : index
    %53 = memref.load %arg3[%c53] : memref<144xf32, #tpu.memory_space<smem>>
    %c54 = arith.constant 54 : index
    %54 = memref.load %arg3[%c54] : memref<144xf32, #tpu.memory_space<smem>>
    %c55 = arith.constant 55 : index
    %55 = memref.load %arg3[%c55] : memref<144xf32, #tpu.memory_space<smem>>
    %c56 = arith.constant 56 : index
    %56 = memref.load %arg3[%c56] : memref<144xf32, #tpu.memory_space<smem>>
    %c57 = arith.constant 57 : index
    %57 = memref.load %arg3[%c57] : memref<144xf32, #tpu.memory_space<smem>>
    %c58 = arith.constant 58 : index
    %58 = memref.load %arg3[%c58] : memref<144xf32, #tpu.memory_space<smem>>
    %c59 = arith.constant 59 : index
    %59 = memref.load %arg3[%c59] : memref<144xf32, #tpu.memory_space<smem>>
    %c60 = arith.constant 60 : index
    %60 = memref.load %arg3[%c60] : memref<144xf32, #tpu.memory_space<smem>>
    %c61 = arith.constant 61 : index
    %61 = memref.load %arg3[%c61] : memref<144xf32, #tpu.memory_space<smem>>
    %c62 = arith.constant 62 : index
    %62 = memref.load %arg3[%c62] : memref<144xf32, #tpu.memory_space<smem>>
    %c63 = arith.constant 63 : index
    %63 = memref.load %arg3[%c63] : memref<144xf32, #tpu.memory_space<smem>>
    %c64 = arith.constant 64 : index
    %64 = memref.load %arg3[%c64] : memref<144xf32, #tpu.memory_space<smem>>
    %c65 = arith.constant 65 : index
    %65 = memref.load %arg3[%c65] : memref<144xf32, #tpu.memory_space<smem>>
    %c66 = arith.constant 66 : index
    %66 = memref.load %arg3[%c66] : memref<144xf32, #tpu.memory_space<smem>>
    %c67 = arith.constant 67 : index
    %67 = memref.load %arg3[%c67] : memref<144xf32, #tpu.memory_space<smem>>
    %c68 = arith.constant 68 : index
    %68 = memref.load %arg3[%c68] : memref<144xf32, #tpu.memory_space<smem>>
    %c69 = arith.constant 69 : index
    %69 = memref.load %arg3[%c69] : memref<144xf32, #tpu.memory_space<smem>>
    %c70 = arith.constant 70 : index
    %70 = memref.load %arg3[%c70] : memref<144xf32, #tpu.memory_space<smem>>
    %c71 = arith.constant 71 : index
    %71 = memref.load %arg3[%c71] : memref<144xf32, #tpu.memory_space<smem>>
    %c72 = arith.constant 72 : index
    %72 = memref.load %arg3[%c72] : memref<144xf32, #tpu.memory_space<smem>>
    %c73 = arith.constant 73 : index
    %73 = memref.load %arg3[%c73] : memref<144xf32, #tpu.memory_space<smem>>
    %c74 = arith.constant 74 : index
    %74 = memref.load %arg3[%c74] : memref<144xf32, #tpu.memory_space<smem>>
    %c75 = arith.constant 75 : index
    %75 = memref.load %arg3[%c75] : memref<144xf32, #tpu.memory_space<smem>>
    %c76 = arith.constant 76 : index
    %76 = memref.load %arg3[%c76] : memref<144xf32, #tpu.memory_space<smem>>
    %c77 = arith.constant 77 : index
    %77 = memref.load %arg3[%c77] : memref<144xf32, #tpu.memory_space<smem>>
    %c78 = arith.constant 78 : index
    %78 = memref.load %arg3[%c78] : memref<144xf32, #tpu.memory_space<smem>>
    %c79 = arith.constant 79 : index
    %79 = memref.load %arg3[%c79] : memref<144xf32, #tpu.memory_space<smem>>
    %c80 = arith.constant 80 : index
    %80 = memref.load %arg3[%c80] : memref<144xf32, #tpu.memory_space<smem>>
    %c81 = arith.constant 81 : index
    %81 = memref.load %arg3[%c81] : memref<144xf32, #tpu.memory_space<smem>>
    %c82 = arith.constant 82 : index
    %82 = memref.load %arg3[%c82] : memref<144xf32, #tpu.memory_space<smem>>
    %c83 = arith.constant 83 : index
    %83 = memref.load %arg3[%c83] : memref<144xf32, #tpu.memory_space<smem>>
    %c84 = arith.constant 84 : index
    %84 = memref.load %arg3[%c84] : memref<144xf32, #tpu.memory_space<smem>>
    %c85 = arith.constant 85 : index
    %85 = memref.load %arg3[%c85] : memref<144xf32, #tpu.memory_space<smem>>
    %c86 = arith.constant 86 : index
    %86 = memref.load %arg3[%c86] : memref<144xf32, #tpu.memory_space<smem>>
    %c87 = arith.constant 87 : index
    %87 = memref.load %arg3[%c87] : memref<144xf32, #tpu.memory_space<smem>>
    %c88 = arith.constant 88 : index
    %88 = memref.load %arg3[%c88] : memref<144xf32, #tpu.memory_space<smem>>
    %c89 = arith.constant 89 : index
    %89 = memref.load %arg3[%c89] : memref<144xf32, #tpu.memory_space<smem>>
    %c90 = arith.constant 90 : index
    %90 = memref.load %arg3[%c90] : memref<144xf32, #tpu.memory_space<smem>>
    %c91 = arith.constant 91 : index
    %91 = memref.load %arg3[%c91] : memref<144xf32, #tpu.memory_space<smem>>
    %c92 = arith.constant 92 : index
    %92 = memref.load %arg3[%c92] : memref<144xf32, #tpu.memory_space<smem>>
    %c93 = arith.constant 93 : index
    %93 = memref.load %arg3[%c93] : memref<144xf32, #tpu.memory_space<smem>>
    %c94 = arith.constant 94 : index
    %94 = memref.load %arg3[%c94] : memref<144xf32, #tpu.memory_space<smem>>
    %c95 = arith.constant 95 : index
    %95 = memref.load %arg3[%c95] : memref<144xf32, #tpu.memory_space<smem>>
    %c96 = arith.constant 96 : index
    %96 = memref.load %arg3[%c96] : memref<144xf32, #tpu.memory_space<smem>>
    %c97 = arith.constant 97 : index
    %97 = memref.load %arg3[%c97] : memref<144xf32, #tpu.memory_space<smem>>
    %c98 = arith.constant 98 : index
    %98 = memref.load %arg3[%c98] : memref<144xf32, #tpu.memory_space<smem>>
    %c99 = arith.constant 99 : index
    %99 = memref.load %arg3[%c99] : memref<144xf32, #tpu.memory_space<smem>>
    %c100 = arith.constant 100 : index
    %100 = memref.load %arg3[%c100] : memref<144xf32, #tpu.memory_space<smem>>
    %c101 = arith.constant 101 : index
    %101 = memref.load %arg3[%c101] : memref<144xf32, #tpu.memory_space<smem>>
    %c102 = arith.constant 102 : index
    %102 = memref.load %arg3[%c102] : memref<144xf32, #tpu.memory_space<smem>>
    %c103 = arith.constant 103 : index
    %103 = memref.load %arg3[%c103] : memref<144xf32, #tpu.memory_space<smem>>
    %c104 = arith.constant 104 : index
    %104 = memref.load %arg3[%c104] : memref<144xf32, #tpu.memory_space<smem>>
    %c105 = arith.constant 105 : index
    %105 = memref.load %arg3[%c105] : memref<144xf32, #tpu.memory_space<smem>>
    %c106 = arith.constant 106 : index
    %106 = memref.load %arg3[%c106] : memref<144xf32, #tpu.memory_space<smem>>
    %c107 = arith.constant 107 : index
    %107 = memref.load %arg3[%c107] : memref<144xf32, #tpu.memory_space<smem>>
    %c108 = arith.constant 108 : index
    %108 = memref.load %arg3[%c108] : memref<144xf32, #tpu.memory_space<smem>>
    %c109 = arith.constant 109 : index
    %109 = memref.load %arg3[%c109] : memref<144xf32, #tpu.memory_space<smem>>
    %c110 = arith.constant 110 : index
    %110 = memref.load %arg3[%c110] : memref<144xf32, #tpu.memory_space<smem>>
    %c111 = arith.constant 111 : index
    %111 = memref.load %arg3[%c111] : memref<144xf32, #tpu.memory_space<smem>>
    %c112 = arith.constant 112 : index
    %112 = memref.load %arg3[%c112] : memref<144xf32, #tpu.memory_space<smem>>
    %c113 = arith.constant 113 : index
    %113 = memref.load %arg3[%c113] : memref<144xf32, #tpu.memory_space<smem>>
    %c114 = arith.constant 114 : index
    %114 = memref.load %arg3[%c114] : memref<144xf32, #tpu.memory_space<smem>>
    %c115 = arith.constant 115 : index
    %115 = memref.load %arg3[%c115] : memref<144xf32, #tpu.memory_space<smem>>
    %c116 = arith.constant 116 : index
    %116 = memref.load %arg3[%c116] : memref<144xf32, #tpu.memory_space<smem>>
    %c117 = arith.constant 117 : index
    %117 = memref.load %arg3[%c117] : memref<144xf32, #tpu.memory_space<smem>>
    %c118 = arith.constant 118 : index
    %118 = memref.load %arg3[%c118] : memref<144xf32, #tpu.memory_space<smem>>
    %c119 = arith.constant 119 : index
    %119 = memref.load %arg3[%c119] : memref<144xf32, #tpu.memory_space<smem>>
    %c120 = arith.constant 120 : index
    %120 = memref.load %arg3[%c120] : memref<144xf32, #tpu.memory_space<smem>>
    %c121 = arith.constant 121 : index
    %121 = memref.load %arg3[%c121] : memref<144xf32, #tpu.memory_space<smem>>
    %c122 = arith.constant 122 : index
    %122 = memref.load %arg3[%c122] : memref<144xf32, #tpu.memory_space<smem>>
    %c123 = arith.constant 123 : index
    %123 = memref.load %arg3[%c123] : memref<144xf32, #tpu.memory_space<smem>>
    %c124 = arith.constant 124 : index
    %124 = memref.load %arg3[%c124] : memref<144xf32, #tpu.memory_space<smem>>
    %c125 = arith.constant 125 : index
    %125 = memref.load %arg3[%c125] : memref<144xf32, #tpu.memory_space<smem>>
    %c126 = arith.constant 126 : index
    %126 = memref.load %arg3[%c126] : memref<144xf32, #tpu.memory_space<smem>>
    %c127 = arith.constant 127 : index
    %127 = memref.load %arg3[%c127] : memref<144xf32, #tpu.memory_space<smem>>
    %c128 = arith.constant 128 : index
    %128 = memref.load %arg3[%c128] : memref<144xf32, #tpu.memory_space<smem>>
    %c129 = arith.constant 129 : index
    %129 = memref.load %arg3[%c129] : memref<144xf32, #tpu.memory_space<smem>>
    %c130 = arith.constant 130 : index
    %130 = memref.load %arg3[%c130] : memref<144xf32, #tpu.memory_space<smem>>
    %c131 = arith.constant 131 : index
    %131 = memref.load %arg3[%c131] : memref<144xf32, #tpu.memory_space<smem>>
    %c132 = arith.constant 132 : index
    %132 = memref.load %arg3[%c132] : memref<144xf32, #tpu.memory_space<smem>>
    %c133 = arith.constant 133 : index
    %133 = memref.load %arg3[%c133] : memref<144xf32, #tpu.memory_space<smem>>
    %c134 = arith.constant 134 : index
    %134 = memref.load %arg3[%c134] : memref<144xf32, #tpu.memory_space<smem>>
    %c135 = arith.constant 135 : index
    %135 = memref.load %arg3[%c135] : memref<144xf32, #tpu.memory_space<smem>>
    %c136 = arith.constant 136 : index
    %136 = memref.load %arg3[%c136] : memref<144xf32, #tpu.memory_space<smem>>
    %c137 = arith.constant 137 : index
    %137 = memref.load %arg3[%c137] : memref<144xf32, #tpu.memory_space<smem>>
    %c138 = arith.constant 138 : index
    %138 = memref.load %arg3[%c138] : memref<144xf32, #tpu.memory_space<smem>>
    %c139 = arith.constant 139 : index
    %139 = memref.load %arg3[%c139] : memref<144xf32, #tpu.memory_space<smem>>
    %c140 = arith.constant 140 : index
    %140 = memref.load %arg3[%c140] : memref<144xf32, #tpu.memory_space<smem>>
    %c141 = arith.constant 141 : index
    %141 = memref.load %arg3[%c141] : memref<144xf32, #tpu.memory_space<smem>>
    %c142 = arith.constant 142 : index
    %142 = memref.load %arg3[%c142] : memref<144xf32, #tpu.memory_space<smem>>
    %c143 = arith.constant 143 : index
    %143 = memref.load %arg3[%c143] : memref<144xf32, #tpu.memory_space<smem>>
    %c0_0 = arith.constant 0 : index
    %144 = memref.load %arg5[%c0_0] : memref<144xf32, #tpu.memory_space<smem>>
    %c1_1 = arith.constant 1 : index
    %145 = memref.load %arg5[%c1_1] : memref<144xf32, #tpu.memory_space<smem>>
    %c2_2 = arith.constant 2 : index
    %146 = memref.load %arg5[%c2_2] : memref<144xf32, #tpu.memory_space<smem>>
    %c3_3 = arith.constant 3 : index
    %147 = memref.load %arg5[%c3_3] : memref<144xf32, #tpu.memory_space<smem>>
    %c4_4 = arith.constant 4 : index
    %148 = memref.load %arg5[%c4_4] : memref<144xf32, #tpu.memory_space<smem>>
    %c5_5 = arith.constant 5 : index
    %149 = memref.load %arg5[%c5_5] : memref<144xf32, #tpu.memory_space<smem>>
    %c6_6 = arith.constant 6 : index
    %150 = memref.load %arg5[%c6_6] : memref<144xf32, #tpu.memory_space<smem>>
    %c7_7 = arith.constant 7 : index
    %151 = memref.load %arg5[%c7_7] : memref<144xf32, #tpu.memory_space<smem>>
    %c8_8 = arith.constant 8 : index
    %152 = memref.load %arg5[%c8_8] : memref<144xf32, #tpu.memory_space<smem>>
    %c9_9 = arith.constant 9 : index
    %153 = memref.load %arg5[%c9_9] : memref<144xf32, #tpu.memory_space<smem>>
    %c10_10 = arith.constant 10 : index
    %154 = memref.load %arg5[%c10_10] : memref<144xf32, #tpu.memory_space<smem>>
    %c11_11 = arith.constant 11 : index
    %155 = memref.load %arg5[%c11_11] : memref<144xf32, #tpu.memory_space<smem>>
    %c12_12 = arith.constant 12 : index
    %156 = memref.load %arg5[%c12_12] : memref<144xf32, #tpu.memory_space<smem>>
    %c13_13 = arith.constant 13 : index
    %157 = memref.load %arg5[%c13_13] : memref<144xf32, #tpu.memory_space<smem>>
    %c14_14 = arith.constant 14 : index
    %158 = memref.load %arg5[%c14_14] : memref<144xf32, #tpu.memory_space<smem>>
    %c15_15 = arith.constant 15 : index
    %159 = memref.load %arg5[%c15_15] : memref<144xf32, #tpu.memory_space<smem>>
    %c16_16 = arith.constant 16 : index
    %160 = memref.load %arg5[%c16_16] : memref<144xf32, #tpu.memory_space<smem>>
    %c17_17 = arith.constant 17 : index
    %161 = memref.load %arg5[%c17_17] : memref<144xf32, #tpu.memory_space<smem>>
    %c18_18 = arith.constant 18 : index
    %162 = memref.load %arg5[%c18_18] : memref<144xf32, #tpu.memory_space<smem>>
    %c19_19 = arith.constant 19 : index
    %163 = memref.load %arg5[%c19_19] : memref<144xf32, #tpu.memory_space<smem>>
    %c20_20 = arith.constant 20 : index
    %164 = memref.load %arg5[%c20_20] : memref<144xf32, #tpu.memory_space<smem>>
    %c21_21 = arith.constant 21 : index
    %165 = memref.load %arg5[%c21_21] : memref<144xf32, #tpu.memory_space<smem>>
    %c22_22 = arith.constant 22 : index
    %166 = memref.load %arg5[%c22_22] : memref<144xf32, #tpu.memory_space<smem>>
    %c23_23 = arith.constant 23 : index
    %167 = memref.load %arg5[%c23_23] : memref<144xf32, #tpu.memory_space<smem>>
    %c24_24 = arith.constant 24 : index
    %168 = memref.load %arg5[%c24_24] : memref<144xf32, #tpu.memory_space<smem>>
    %c25_25 = arith.constant 25 : index
    %169 = memref.load %arg5[%c25_25] : memref<144xf32, #tpu.memory_space<smem>>
    %c26_26 = arith.constant 26 : index
    %170 = memref.load %arg5[%c26_26] : memref<144xf32, #tpu.memory_space<smem>>
    %c27_27 = arith.constant 27 : index
    %171 = memref.load %arg5[%c27_27] : memref<144xf32, #tpu.memory_space<smem>>
    %c28_28 = arith.constant 28 : index
    %172 = memref.load %arg5[%c28_28] : memref<144xf32, #tpu.memory_space<smem>>
    %c29_29 = arith.constant 29 : index
    %173 = memref.load %arg5[%c29_29] : memref<144xf32, #tpu.memory_space<smem>>
    %c30_30 = arith.constant 30 : index
    %174 = memref.load %arg5[%c30_30] : memref<144xf32, #tpu.memory_space<smem>>
    %c31_31 = arith.constant 31 : index
    %175 = memref.load %arg5[%c31_31] : memref<144xf32, #tpu.memory_space<smem>>
    %c32_32 = arith.constant 32 : index
    %176 = memref.load %arg5[%c32_32] : memref<144xf32, #tpu.memory_space<smem>>
    %c33_33 = arith.constant 33 : index
    %177 = memref.load %arg5[%c33_33] : memref<144xf32, #tpu.memory_space<smem>>
    %c34_34 = arith.constant 34 : index
    %178 = memref.load %arg5[%c34_34] : memref<144xf32, #tpu.memory_space<smem>>
    %c35_35 = arith.constant 35 : index
    %179 = memref.load %arg5[%c35_35] : memref<144xf32, #tpu.memory_space<smem>>
    %c36_36 = arith.constant 36 : index
    %180 = memref.load %arg5[%c36_36] : memref<144xf32, #tpu.memory_space<smem>>
    %c37_37 = arith.constant 37 : index
    %181 = memref.load %arg5[%c37_37] : memref<144xf32, #tpu.memory_space<smem>>
    %c38_38 = arith.constant 38 : index
    %182 = memref.load %arg5[%c38_38] : memref<144xf32, #tpu.memory_space<smem>>
    %c39_39 = arith.constant 39 : index
    %183 = memref.load %arg5[%c39_39] : memref<144xf32, #tpu.memory_space<smem>>
    %c40_40 = arith.constant 40 : index
    %184 = memref.load %arg5[%c40_40] : memref<144xf32, #tpu.memory_space<smem>>
    %c41_41 = arith.constant 41 : index
    %185 = memref.load %arg5[%c41_41] : memref<144xf32, #tpu.memory_space<smem>>
    %c42_42 = arith.constant 42 : index
    %186 = memref.load %arg5[%c42_42] : memref<144xf32, #tpu.memory_space<smem>>
    %c43_43 = arith.constant 43 : index
    %187 = memref.load %arg5[%c43_43] : memref<144xf32, #tpu.memory_space<smem>>
    %c44_44 = arith.constant 44 : index
    %188 = memref.load %arg5[%c44_44] : memref<144xf32, #tpu.memory_space<smem>>
    %c45_45 = arith.constant 45 : index
    %189 = memref.load %arg5[%c45_45] : memref<144xf32, #tpu.memory_space<smem>>
    %c46_46 = arith.constant 46 : index
    %190 = memref.load %arg5[%c46_46] : memref<144xf32, #tpu.memory_space<smem>>
    %c47_47 = arith.constant 47 : index
    %191 = memref.load %arg5[%c47_47] : memref<144xf32, #tpu.memory_space<smem>>
    %c48_48 = arith.constant 48 : index
    %192 = memref.load %arg5[%c48_48] : memref<144xf32, #tpu.memory_space<smem>>
    %c49_49 = arith.constant 49 : index
    %193 = memref.load %arg5[%c49_49] : memref<144xf32, #tpu.memory_space<smem>>
    %c50_50 = arith.constant 50 : index
    %194 = memref.load %arg5[%c50_50] : memref<144xf32, #tpu.memory_space<smem>>
    %c51_51 = arith.constant 51 : index
    %195 = memref.load %arg5[%c51_51] : memref<144xf32, #tpu.memory_space<smem>>
    %c52_52 = arith.constant 52 : index
    %196 = memref.load %arg5[%c52_52] : memref<144xf32, #tpu.memory_space<smem>>
    %c53_53 = arith.constant 53 : index
    %197 = memref.load %arg5[%c53_53] : memref<144xf32, #tpu.memory_space<smem>>
    %c54_54 = arith.constant 54 : index
    %198 = memref.load %arg5[%c54_54] : memref<144xf32, #tpu.memory_space<smem>>
    %c55_55 = arith.constant 55 : index
    %199 = memref.load %arg5[%c55_55] : memref<144xf32, #tpu.memory_space<smem>>
    %c56_56 = arith.constant 56 : index
    %200 = memref.load %arg5[%c56_56] : memref<144xf32, #tpu.memory_space<smem>>
    %c57_57 = arith.constant 57 : index
    %201 = memref.load %arg5[%c57_57] : memref<144xf32, #tpu.memory_space<smem>>
    %c58_58 = arith.constant 58 : index
    %202 = memref.load %arg5[%c58_58] : memref<144xf32, #tpu.memory_space<smem>>
    %c59_59 = arith.constant 59 : index
    %203 = memref.load %arg5[%c59_59] : memref<144xf32, #tpu.memory_space<smem>>
    %c60_60 = arith.constant 60 : index
    %204 = memref.load %arg5[%c60_60] : memref<144xf32, #tpu.memory_space<smem>>
    %c61_61 = arith.constant 61 : index
    %205 = memref.load %arg5[%c61_61] : memref<144xf32, #tpu.memory_space<smem>>
    %c62_62 = arith.constant 62 : index
    %206 = memref.load %arg5[%c62_62] : memref<144xf32, #tpu.memory_space<smem>>
    %c63_63 = arith.constant 63 : index
    %207 = memref.load %arg5[%c63_63] : memref<144xf32, #tpu.memory_space<smem>>
    %c64_64 = arith.constant 64 : index
    %208 = memref.load %arg5[%c64_64] : memref<144xf32, #tpu.memory_space<smem>>
    %c65_65 = arith.constant 65 : index
    %209 = memref.load %arg5[%c65_65] : memref<144xf32, #tpu.memory_space<smem>>
    %c66_66 = arith.constant 66 : index
    %210 = memref.load %arg5[%c66_66] : memref<144xf32, #tpu.memory_space<smem>>
    %c67_67 = arith.constant 67 : index
    %211 = memref.load %arg5[%c67_67] : memref<144xf32, #tpu.memory_space<smem>>
    %c68_68 = arith.constant 68 : index
    %212 = memref.load %arg5[%c68_68] : memref<144xf32, #tpu.memory_space<smem>>
    %c69_69 = arith.constant 69 : index
    %213 = memref.load %arg5[%c69_69] : memref<144xf32, #tpu.memory_space<smem>>
    %c70_70 = arith.constant 70 : index
    %214 = memref.load %arg5[%c70_70] : memref<144xf32, #tpu.memory_space<smem>>
    %c71_71 = arith.constant 71 : index
    %215 = memref.load %arg5[%c71_71] : memref<144xf32, #tpu.memory_space<smem>>
    %c72_72 = arith.constant 72 : index
    %216 = memref.load %arg5[%c72_72] : memref<144xf32, #tpu.memory_space<smem>>
    %c73_73 = arith.constant 73 : index
    %217 = memref.load %arg5[%c73_73] : memref<144xf32, #tpu.memory_space<smem>>
    %c74_74 = arith.constant 74 : index
    %218 = memref.load %arg5[%c74_74] : memref<144xf32, #tpu.memory_space<smem>>
    %c75_75 = arith.constant 75 : index
    %219 = memref.load %arg5[%c75_75] : memref<144xf32, #tpu.memory_space<smem>>
    %c76_76 = arith.constant 76 : index
    %220 = memref.load %arg5[%c76_76] : memref<144xf32, #tpu.memory_space<smem>>
    %c77_77 = arith.constant 77 : index
    %221 = memref.load %arg5[%c77_77] : memref<144xf32, #tpu.memory_space<smem>>
    %c78_78 = arith.constant 78 : index
    %222 = memref.load %arg5[%c78_78] : memref<144xf32, #tpu.memory_space<smem>>
    %c79_79 = arith.constant 79 : index
    %223 = memref.load %arg5[%c79_79] : memref<144xf32, #tpu.memory_space<smem>>
    %c80_80 = arith.constant 80 : index
    %224 = memref.load %arg5[%c80_80] : memref<144xf32, #tpu.memory_space<smem>>
    %c81_81 = arith.constant 81 : index
    %225 = memref.load %arg5[%c81_81] : memref<144xf32, #tpu.memory_space<smem>>
    %c82_82 = arith.constant 82 : index
    %226 = memref.load %arg5[%c82_82] : memref<144xf32, #tpu.memory_space<smem>>
    %c83_83 = arith.constant 83 : index
    %227 = memref.load %arg5[%c83_83] : memref<144xf32, #tpu.memory_space<smem>>
    %c84_84 = arith.constant 84 : index
    %228 = memref.load %arg5[%c84_84] : memref<144xf32, #tpu.memory_space<smem>>
    %c85_85 = arith.constant 85 : index
    %229 = memref.load %arg5[%c85_85] : memref<144xf32, #tpu.memory_space<smem>>
    %c86_86 = arith.constant 86 : index
    %230 = memref.load %arg5[%c86_86] : memref<144xf32, #tpu.memory_space<smem>>
    %c87_87 = arith.constant 87 : index
    %231 = memref.load %arg5[%c87_87] : memref<144xf32, #tpu.memory_space<smem>>
    %c88_88 = arith.constant 88 : index
    %232 = memref.load %arg5[%c88_88] : memref<144xf32, #tpu.memory_space<smem>>
    %c89_89 = arith.constant 89 : index
    %233 = memref.load %arg5[%c89_89] : memref<144xf32, #tpu.memory_space<smem>>
    %c90_90 = arith.constant 90 : index
    %234 = memref.load %arg5[%c90_90] : memref<144xf32, #tpu.memory_space<smem>>
    %c91_91 = arith.constant 91 : index
    %235 = memref.load %arg5[%c91_91] : memref<144xf32, #tpu.memory_space<smem>>
    %c92_92 = arith.constant 92 : index
    %236 = memref.load %arg5[%c92_92] : memref<144xf32, #tpu.memory_space<smem>>
    %c93_93 = arith.constant 93 : index
    %237 = memref.load %arg5[%c93_93] : memref<144xf32, #tpu.memory_space<smem>>
    %c94_94 = arith.constant 94 : index
    %238 = memref.load %arg5[%c94_94] : memref<144xf32, #tpu.memory_space<smem>>
    %c95_95 = arith.constant 95 : index
    %239 = memref.load %arg5[%c95_95] : memref<144xf32, #tpu.memory_space<smem>>
    %c96_96 = arith.constant 96 : index
    %240 = memref.load %arg5[%c96_96] : memref<144xf32, #tpu.memory_space<smem>>
    %c97_97 = arith.constant 97 : index
    %241 = memref.load %arg5[%c97_97] : memref<144xf32, #tpu.memory_space<smem>>
    %c98_98 = arith.constant 98 : index
    %242 = memref.load %arg5[%c98_98] : memref<144xf32, #tpu.memory_space<smem>>
    %c99_99 = arith.constant 99 : index
    %243 = memref.load %arg5[%c99_99] : memref<144xf32, #tpu.memory_space<smem>>
    %c100_100 = arith.constant 100 : index
    %244 = memref.load %arg5[%c100_100] : memref<144xf32, #tpu.memory_space<smem>>
    %c101_101 = arith.constant 101 : index
    %245 = memref.load %arg5[%c101_101] : memref<144xf32, #tpu.memory_space<smem>>
    %c102_102 = arith.constant 102 : index
    %246 = memref.load %arg5[%c102_102] : memref<144xf32, #tpu.memory_space<smem>>
    %c103_103 = arith.constant 103 : index
    %247 = memref.load %arg5[%c103_103] : memref<144xf32, #tpu.memory_space<smem>>
    %c104_104 = arith.constant 104 : index
    %248 = memref.load %arg5[%c104_104] : memref<144xf32, #tpu.memory_space<smem>>
    %c105_105 = arith.constant 105 : index
    %249 = memref.load %arg5[%c105_105] : memref<144xf32, #tpu.memory_space<smem>>
    %c106_106 = arith.constant 106 : index
    %250 = memref.load %arg5[%c106_106] : memref<144xf32, #tpu.memory_space<smem>>
    %c107_107 = arith.constant 107 : index
    %251 = memref.load %arg5[%c107_107] : memref<144xf32, #tpu.memory_space<smem>>
    %c108_108 = arith.constant 108 : index
    %252 = memref.load %arg5[%c108_108] : memref<144xf32, #tpu.memory_space<smem>>
    %c109_109 = arith.constant 109 : index
    %253 = memref.load %arg5[%c109_109] : memref<144xf32, #tpu.memory_space<smem>>
    %c110_110 = arith.constant 110 : index
    %254 = memref.load %arg5[%c110_110] : memref<144xf32, #tpu.memory_space<smem>>
    %c111_111 = arith.constant 111 : index
    %255 = memref.load %arg5[%c111_111] : memref<144xf32, #tpu.memory_space<smem>>
    %c112_112 = arith.constant 112 : index
    %256 = memref.load %arg5[%c112_112] : memref<144xf32, #tpu.memory_space<smem>>
    %c113_113 = arith.constant 113 : index
    %257 = memref.load %arg5[%c113_113] : memref<144xf32, #tpu.memory_space<smem>>
    %c114_114 = arith.constant 114 : index
    %258 = memref.load %arg5[%c114_114] : memref<144xf32, #tpu.memory_space<smem>>
    %c115_115 = arith.constant 115 : index
    %259 = memref.load %arg5[%c115_115] : memref<144xf32, #tpu.memory_space<smem>>
    %c116_116 = arith.constant 116 : index
    %260 = memref.load %arg5[%c116_116] : memref<144xf32, #tpu.memory_space<smem>>
    %c117_117 = arith.constant 117 : index
    %261 = memref.load %arg5[%c117_117] : memref<144xf32, #tpu.memory_space<smem>>
    %c118_118 = arith.constant 118 : index
    %262 = memref.load %arg5[%c118_118] : memref<144xf32, #tpu.memory_space<smem>>
    %c119_119 = arith.constant 119 : index
    %263 = memref.load %arg5[%c119_119] : memref<144xf32, #tpu.memory_space<smem>>
    %c120_120 = arith.constant 120 : index
    %264 = memref.load %arg5[%c120_120] : memref<144xf32, #tpu.memory_space<smem>>
    %c121_121 = arith.constant 121 : index
    %265 = memref.load %arg5[%c121_121] : memref<144xf32, #tpu.memory_space<smem>>
    %c122_122 = arith.constant 122 : index
    %266 = memref.load %arg5[%c122_122] : memref<144xf32, #tpu.memory_space<smem>>
    %c123_123 = arith.constant 123 : index
    %267 = memref.load %arg5[%c123_123] : memref<144xf32, #tpu.memory_space<smem>>
    %c124_124 = arith.constant 124 : index
    %268 = memref.load %arg5[%c124_124] : memref<144xf32, #tpu.memory_space<smem>>
    %c125_125 = arith.constant 125 : index
    %269 = memref.load %arg5[%c125_125] : memref<144xf32, #tpu.memory_space<smem>>
    %c126_126 = arith.constant 126 : index
    %270 = memref.load %arg5[%c126_126] : memref<144xf32, #tpu.memory_space<smem>>
    %c127_127 = arith.constant 127 : index
    %271 = memref.load %arg5[%c127_127] : memref<144xf32, #tpu.memory_space<smem>>
    %c128_128 = arith.constant 128 : index
    %272 = memref.load %arg5[%c128_128] : memref<144xf32, #tpu.memory_space<smem>>
    %c129_129 = arith.constant 129 : index
    %273 = memref.load %arg5[%c129_129] : memref<144xf32, #tpu.memory_space<smem>>
    %c130_130 = arith.constant 130 : index
    %274 = memref.load %arg5[%c130_130] : memref<144xf32, #tpu.memory_space<smem>>
    %c131_131 = arith.constant 131 : index
    %275 = memref.load %arg5[%c131_131] : memref<144xf32, #tpu.memory_space<smem>>
    %c132_132 = arith.constant 132 : index
    %276 = memref.load %arg5[%c132_132] : memref<144xf32, #tpu.memory_space<smem>>
    %c133_133 = arith.constant 133 : index
    %277 = memref.load %arg5[%c133_133] : memref<144xf32, #tpu.memory_space<smem>>
    %c134_134 = arith.constant 134 : index
    %278 = memref.load %arg5[%c134_134] : memref<144xf32, #tpu.memory_space<smem>>
    %c135_135 = arith.constant 135 : index
    %279 = memref.load %arg5[%c135_135] : memref<144xf32, #tpu.memory_space<smem>>
    %c136_136 = arith.constant 136 : index
    %280 = memref.load %arg5[%c136_136] : memref<144xf32, #tpu.memory_space<smem>>
    %c137_137 = arith.constant 137 : index
    %281 = memref.load %arg5[%c137_137] : memref<144xf32, #tpu.memory_space<smem>>
    %c138_138 = arith.constant 138 : index
    %282 = memref.load %arg5[%c138_138] : memref<144xf32, #tpu.memory_space<smem>>
    %c139_139 = arith.constant 139 : index
    %283 = memref.load %arg5[%c139_139] : memref<144xf32, #tpu.memory_space<smem>>
    %c140_140 = arith.constant 140 : index
    %284 = memref.load %arg5[%c140_140] : memref<144xf32, #tpu.memory_space<smem>>
    %c141_141 = arith.constant 141 : index
    %285 = memref.load %arg5[%c141_141] : memref<144xf32, #tpu.memory_space<smem>>
    %c142_142 = arith.constant 142 : index
    %286 = memref.load %arg5[%c142_142] : memref<144xf32, #tpu.memory_space<smem>>
    %c143_143 = arith.constant 143 : index
    %287 = memref.load %arg5[%c143_143] : memref<144xf32, #tpu.memory_space<smem>>
    %c0_144 = arith.constant 0 : index
    %288 = memref.load %arg4[%c0_144] : memref<4xf32, #tpu.memory_space<smem>>
    %c1_145 = arith.constant 1 : index
    %289 = memref.load %arg4[%c1_145] : memref<4xf32, #tpu.memory_space<smem>>
    %c2_146 = arith.constant 2 : index
    %290 = memref.load %arg4[%c2_146] : memref<4xf32, #tpu.memory_space<smem>>
    %c3_147 = arith.constant 3 : index
    %291 = memref.load %arg4[%c3_147] : memref<4xf32, #tpu.memory_space<smem>>
    %c0_148 = arith.constant 0 : index
    %292 = memref.load %arg6[%c0_148] : memref<4xf32, #tpu.memory_space<smem>>
    %c1_149 = arith.constant 1 : index
    %293 = memref.load %arg6[%c1_149] : memref<4xf32, #tpu.memory_space<smem>>
    %c2_150 = arith.constant 2 : index
    %294 = memref.load %arg6[%c2_150] : memref<4xf32, #tpu.memory_space<smem>>
    %c3_151 = arith.constant 3 : index
    %295 = memref.load %arg6[%c3_151] : memref<4xf32, #tpu.memory_space<smem>>
    %c0_152 = arith.constant 0 : index
    %296 = memref.load %arg7[%c0_152] : memref<3xf32, #tpu.memory_space<smem>>
    %c1_153 = arith.constant 1 : index
    %297 = memref.load %arg7[%c1_153] : memref<3xf32, #tpu.memory_space<smem>>
    %c2_154 = arith.constant 2 : index
    %298 = memref.load %arg7[%c2_154] : memref<3xf32, #tpu.memory_space<smem>>
    %c0_155 = arith.constant 0 : index
    %c0_156 = arith.constant 0 : index
    %299 = vector.load %arg2[%c0_155, %c0_156] : memref<8x2304xf32, #tpu.memory_space<vmem>>, vector<8x256xf32>
    %c0_157 = arith.constant 0 : index
    %c256 = arith.constant 256 : index
    %300 = vector.load %arg2[%c0_157, %c256] : memref<8x2304xf32, #tpu.memory_space<vmem>>, vector<8x256xf32>
    %c0_158 = arith.constant 0 : index
    %c512 = arith.constant 512 : index
    %301 = vector.load %arg2[%c0_158, %c512] : memref<8x2304xf32, #tpu.memory_space<vmem>>, vector<8x256xf32>
    %c0_159 = arith.constant 0 : index
    %c768 = arith.constant 768 : index
    %302 = vector.load %arg2[%c0_159, %c768] : memref<8x2304xf32, #tpu.memory_space<vmem>>, vector<8x256xf32>
    %c0_160 = arith.constant 0 : index
    %c1280 = arith.constant 1280 : index
    %303 = vector.load %arg2[%c0_160, %c1280] : memref<8x2304xf32, #tpu.memory_space<vmem>>, vector<8x256xf32>
    %c0_161 = arith.constant 0 : index
    %c1536 = arith.constant 1536 : index
    %304 = vector.load %arg2[%c0_161, %c1536] : memref<8x2304xf32, #tpu.memory_space<vmem>>, vector<8x256xf32>
    %c0_162 = arith.constant 0 : index
    %c1792 = arith.constant 1792 : index
    %305 = vector.load %arg2[%c0_162, %c1792] : memref<8x2304xf32, #tpu.memory_space<vmem>>, vector<8x256xf32>
    %c0_163 = arith.constant 0 : index
    %c2048 = arith.constant 2048 : index
    %306 = vector.load %arg2[%c0_163, %c2048] : memref<8x2304xf32, #tpu.memory_space<vmem>>, vector<8x256xf32>
    %c0_164 = arith.constant 0 : index
    %c0_165 = arith.constant 0 : index
    %307 = vector.load %arg1[%c0_164, %c0_165] : memref<8x1024xf32, #tpu.memory_space<vmem>>, vector<8x256xf32>
    %c0_166 = arith.constant 0 : index
    %c256_167 = arith.constant 256 : index
    %308 = vector.load %arg1[%c0_166, %c256_167] : memref<8x1024xf32, #tpu.memory_space<vmem>>, vector<8x256xf32>
    %c0_168 = arith.constant 0 : index
    %c512_169 = arith.constant 512 : index
    %309 = vector.load %arg1[%c0_168, %c512_169] : memref<8x1024xf32, #tpu.memory_space<vmem>>, vector<8x256xf32>
    %c0_170 = arith.constant 0 : index
    %c768_171 = arith.constant 768 : index
    %310 = vector.load %arg1[%c0_170, %c768_171] : memref<8x1024xf32, #tpu.memory_space<vmem>>, vector<8x256xf32>
    %311 = vector.broadcast %288 : f32 to vector<8x256xf32>
    %312 = vector.broadcast %289 : f32 to vector<8x256xf32>
    %313 = vector.broadcast %290 : f32 to vector<8x256xf32>
    %314 = vector.broadcast %291 : f32 to vector<8x256xf32>
    %c17_i32 = arith.constant 17 : i32
    %315 = tpu.dynamic_rotate %307 by %c17_i32 dim 1 : vector<8x256xf32>, i32 -> vector<8x256xf32>
    %316 = arith.mulf %315, %299 : vector<8x256xf32>
    %317 = vector.broadcast %0 : f32 to vector<8x256xf32>
    %318 = arith.mulf %317, %316 : vector<8x256xf32>
    %319 = arith.addf %311, %318 : vector<8x256xf32>
    %320 = vector.broadcast %36 : f32 to vector<8x256xf32>
    %321 = arith.mulf %320, %316 : vector<8x256xf32>
    %322 = arith.addf %312, %321 : vector<8x256xf32>
    %323 = vector.broadcast %72 : f32 to vector<8x256xf32>
    %324 = arith.mulf %323, %316 : vector<8x256xf32>
    %325 = arith.addf %313, %324 : vector<8x256xf32>
    %326 = vector.broadcast %108 : f32 to vector<8x256xf32>
    %327 = arith.mulf %326, %316 : vector<8x256xf32>
    %328 = arith.addf %314, %327 : vector<8x256xf32>
    %c16_i32 = arith.constant 16 : i32
    %329 = tpu.dynamic_rotate %307 by %c16_i32 dim 1 : vector<8x256xf32>, i32 -> vector<8x256xf32>
    %330 = arith.mulf %329, %300 : vector<8x256xf32>
    %331 = vector.broadcast %1 : f32 to vector<8x256xf32>
    %332 = arith.mulf %331, %330 : vector<8x256xf32>
    %333 = arith.addf %319, %332 : vector<8x256xf32>
    %334 = vector.broadcast %37 : f32 to vector<8x256xf32>
    %335 = arith.mulf %334, %330 : vector<8x256xf32>
    %336 = arith.addf %322, %335 : vector<8x256xf32>
    %337 = vector.broadcast %73 : f32 to vector<8x256xf32>
    %338 = arith.mulf %337, %330 : vector<8x256xf32>
    %339 = arith.addf %325, %338 : vector<8x256xf32>
    %340 = vector.broadcast %109 : f32 to vector<8x256xf32>
    %341 = arith.mulf %340, %330 : vector<8x256xf32>
    %342 = arith.addf %328, %341 : vector<8x256xf32>
    %c15_i32 = arith.constant 15 : i32
    %343 = tpu.dynamic_rotate %307 by %c15_i32 dim 1 : vector<8x256xf32>, i32 -> vector<8x256xf32>
    %344 = arith.mulf %343, %301 : vector<8x256xf32>
    %345 = vector.broadcast %2 : f32 to vector<8x256xf32>
    %346 = arith.mulf %345, %344 : vector<8x256xf32>
    %347 = arith.addf %333, %346 : vector<8x256xf32>
    %348 = vector.broadcast %38 : f32 to vector<8x256xf32>
    %349 = arith.mulf %348, %344 : vector<8x256xf32>
    %350 = arith.addf %336, %349 : vector<8x256xf32>
    %351 = vector.broadcast %74 : f32 to vector<8x256xf32>
    %352 = arith.mulf %351, %344 : vector<8x256xf32>
    %353 = arith.addf %339, %352 : vector<8x256xf32>
    %354 = vector.broadcast %110 : f32 to vector<8x256xf32>
    %355 = arith.mulf %354, %344 : vector<8x256xf32>
    %356 = arith.addf %342, %355 : vector<8x256xf32>
    %c1_i32 = arith.constant 1 : i32
    %357 = tpu.dynamic_rotate %307 by %c1_i32 dim 1 : vector<8x256xf32>, i32 -> vector<8x256xf32>
    %358 = arith.mulf %357, %302 : vector<8x256xf32>
    %359 = vector.broadcast %3 : f32 to vector<8x256xf32>
    %360 = arith.mulf %359, %358 : vector<8x256xf32>
    %361 = arith.addf %347, %360 : vector<8x256xf32>
    %362 = vector.broadcast %39 : f32 to vector<8x256xf32>
    %363 = arith.mulf %362, %358 : vector<8x256xf32>
    %364 = arith.addf %350, %363 : vector<8x256xf32>
    %365 = vector.broadcast %75 : f32 to vector<8x256xf32>
    %366 = arith.mulf %365, %358 : vector<8x256xf32>
    %367 = arith.addf %353, %366 : vector<8x256xf32>
    %368 = vector.broadcast %111 : f32 to vector<8x256xf32>
    %369 = arith.mulf %368, %358 : vector<8x256xf32>
    %370 = arith.addf %356, %369 : vector<8x256xf32>
    %371 = vector.broadcast %4 : f32 to vector<8x256xf32>
    %372 = arith.mulf %371, %307 : vector<8x256xf32>
    %373 = arith.addf %361, %372 : vector<8x256xf32>
    %374 = vector.broadcast %40 : f32 to vector<8x256xf32>
    %375 = arith.mulf %374, %307 : vector<8x256xf32>
    %376 = arith.addf %364, %375 : vector<8x256xf32>
    %377 = vector.broadcast %76 : f32 to vector<8x256xf32>
    %378 = arith.mulf %377, %307 : vector<8x256xf32>
    %379 = arith.addf %367, %378 : vector<8x256xf32>
    %380 = vector.broadcast %112 : f32 to vector<8x256xf32>
    %381 = arith.mulf %380, %307 : vector<8x256xf32>
    %382 = arith.addf %370, %381 : vector<8x256xf32>
    %c255_i32 = arith.constant 255 : i32
    %383 = tpu.dynamic_rotate %307 by %c255_i32 dim 1 : vector<8x256xf32>, i32 -> vector<8x256xf32>
    %384 = arith.mulf %383, %303 : vector<8x256xf32>
    %385 = vector.broadcast %5 : f32 to vector<8x256xf32>
    %386 = arith.mulf %385, %384 : vector<8x256xf32>
    %387 = arith.addf %373, %386 : vector<8x256xf32>
    %388 = vector.broadcast %41 : f32 to vector<8x256xf32>
    %389 = arith.mulf %388, %384 : vector<8x256xf32>
    %390 = arith.addf %376, %389 : vector<8x256xf32>
    %391 = vector.broadcast %77 : f32 to vector<8x256xf32>
    %392 = arith.mulf %391, %384 : vector<8x256xf32>
    %393 = arith.addf %379, %392 : vector<8x256xf32>
    %394 = vector.broadcast %113 : f32 to vector<8x256xf32>
    %395 = arith.mulf %394, %384 : vector<8x256xf32>
    %396 = arith.addf %382, %395 : vector<8x256xf32>
    %c241_i32 = arith.constant 241 : i32
    %397 = tpu.dynamic_rotate %307 by %c241_i32 dim 1 : vector<8x256xf32>, i32 -> vector<8x256xf32>
    %398 = arith.mulf %397, %304 : vector<8x256xf32>
    %399 = vector.broadcast %6 : f32 to vector<8x256xf32>
    %400 = arith.mulf %399, %398 : vector<8x256xf32>
    %401 = arith.addf %387, %400 : vector<8x256xf32>
    %402 = vector.broadcast %42 : f32 to vector<8x256xf32>
    %403 = arith.mulf %402, %398 : vector<8x256xf32>
    %404 = arith.addf %390, %403 : vector<8x256xf32>
    %405 = vector.broadcast %78 : f32 to vector<8x256xf32>
    %406 = arith.mulf %405, %398 : vector<8x256xf32>
    %407 = arith.addf %393, %406 : vector<8x256xf32>
    %408 = vector.broadcast %114 : f32 to vector<8x256xf32>
    %409 = arith.mulf %408, %398 : vector<8x256xf32>
    %410 = arith.addf %396, %409 : vector<8x256xf32>
    %c240_i32 = arith.constant 240 : i32
    %411 = tpu.dynamic_rotate %307 by %c240_i32 dim 1 : vector<8x256xf32>, i32 -> vector<8x256xf32>
    %412 = arith.mulf %411, %305 : vector<8x256xf32>
    %413 = vector.broadcast %7 : f32 to vector<8x256xf32>
    %414 = arith.mulf %413, %412 : vector<8x256xf32>
    %415 = arith.addf %401, %414 : vector<8x256xf32>
    %416 = vector.broadcast %43 : f32 to vector<8x256xf32>
    %417 = arith.mulf %416, %412 : vector<8x256xf32>
    %418 = arith.addf %404, %417 : vector<8x256xf32>
    %419 = vector.broadcast %79 : f32 to vector<8x256xf32>
    %420 = arith.mulf %419, %412 : vector<8x256xf32>
    %421 = arith.addf %407, %420 : vector<8x256xf32>
    %422 = vector.broadcast %115 : f32 to vector<8x256xf32>
    %423 = arith.mulf %422, %412 : vector<8x256xf32>
    %424 = arith.addf %410, %423 : vector<8x256xf32>
    %c239_i32 = arith.constant 239 : i32
    %425 = tpu.dynamic_rotate %307 by %c239_i32 dim 1 : vector<8x256xf32>, i32 -> vector<8x256xf32>
    %426 = arith.mulf %425, %306 : vector<8x256xf32>
    %427 = vector.broadcast %8 : f32 to vector<8x256xf32>
    %428 = arith.mulf %427, %426 : vector<8x256xf32>
    %429 = arith.addf %415, %428 : vector<8x256xf32>
    %430 = vector.broadcast %44 : f32 to vector<8x256xf32>
    %431 = arith.mulf %430, %426 : vector<8x256xf32>
    %432 = arith.addf %418, %431 : vector<8x256xf32>
    %433 = vector.broadcast %80 : f32 to vector<8x256xf32>
    %434 = arith.mulf %433, %426 : vector<8x256xf32>
    %435 = arith.addf %421, %434 : vector<8x256xf32>
    %436 = vector.broadcast %116 : f32 to vector<8x256xf32>
    %437 = arith.mulf %436, %426 : vector<8x256xf32>
    %438 = arith.addf %424, %437 : vector<8x256xf32>
    %c17_i32_172 = arith.constant 17 : i32
    %439 = tpu.dynamic_rotate %308 by %c17_i32_172 dim 1 : vector<8x256xf32>, i32 -> vector<8x256xf32>
    %440 = arith.mulf %439, %299 : vector<8x256xf32>
    %441 = vector.broadcast %9 : f32 to vector<8x256xf32>
    %442 = arith.mulf %441, %440 : vector<8x256xf32>
    %443 = arith.addf %429, %442 : vector<8x256xf32>
    %444 = vector.broadcast %45 : f32 to vector<8x256xf32>
    %445 = arith.mulf %444, %440 : vector<8x256xf32>
    %446 = arith.addf %432, %445 : vector<8x256xf32>
    %447 = vector.broadcast %81 : f32 to vector<8x256xf32>
    %448 = arith.mulf %447, %440 : vector<8x256xf32>
    %449 = arith.addf %435, %448 : vector<8x256xf32>
    %450 = vector.broadcast %117 : f32 to vector<8x256xf32>
    %451 = arith.mulf %450, %440 : vector<8x256xf32>
    %452 = arith.addf %438, %451 : vector<8x256xf32>
    %c16_i32_173 = arith.constant 16 : i32
    %453 = tpu.dynamic_rotate %308 by %c16_i32_173 dim 1 : vector<8x256xf32>, i32 -> vector<8x256xf32>
    %454 = arith.mulf %453, %300 : vector<8x256xf32>
    %455 = vector.broadcast %10 : f32 to vector<8x256xf32>
    %456 = arith.mulf %455, %454 : vector<8x256xf32>
    %457 = arith.addf %443, %456 : vector<8x256xf32>
    %458 = vector.broadcast %46 : f32 to vector<8x256xf32>
    %459 = arith.mulf %458, %454 : vector<8x256xf32>
    %460 = arith.addf %446, %459 : vector<8x256xf32>
    %461 = vector.broadcast %82 : f32 to vector<8x256xf32>
    %462 = arith.mulf %461, %454 : vector<8x256xf32>
    %463 = arith.addf %449, %462 : vector<8x256xf32>
    %464 = vector.broadcast %118 : f32 to vector<8x256xf32>
    %465 = arith.mulf %464, %454 : vector<8x256xf32>
    %466 = arith.addf %452, %465 : vector<8x256xf32>
    %c15_i32_174 = arith.constant 15 : i32
    %467 = tpu.dynamic_rotate %308 by %c15_i32_174 dim 1 : vector<8x256xf32>, i32 -> vector<8x256xf32>
    %468 = arith.mulf %467, %301 : vector<8x256xf32>
    %469 = vector.broadcast %11 : f32 to vector<8x256xf32>
    %470 = arith.mulf %469, %468 : vector<8x256xf32>
    %471 = arith.addf %457, %470 : vector<8x256xf32>
    %472 = vector.broadcast %47 : f32 to vector<8x256xf32>
    %473 = arith.mulf %472, %468 : vector<8x256xf32>
    %474 = arith.addf %460, %473 : vector<8x256xf32>
    %475 = vector.broadcast %83 : f32 to vector<8x256xf32>
    %476 = arith.mulf %475, %468 : vector<8x256xf32>
    %477 = arith.addf %463, %476 : vector<8x256xf32>
    %478 = vector.broadcast %119 : f32 to vector<8x256xf32>
    %479 = arith.mulf %478, %468 : vector<8x256xf32>
    %480 = arith.addf %466, %479 : vector<8x256xf32>
    %c1_i32_175 = arith.constant 1 : i32
    %481 = tpu.dynamic_rotate %308 by %c1_i32_175 dim 1 : vector<8x256xf32>, i32 -> vector<8x256xf32>
    %482 = arith.mulf %481, %302 : vector<8x256xf32>
    %483 = vector.broadcast %12 : f32 to vector<8x256xf32>
    %484 = arith.mulf %483, %482 : vector<8x256xf32>
    %485 = arith.addf %471, %484 : vector<8x256xf32>
    %486 = vector.broadcast %48 : f32 to vector<8x256xf32>
    %487 = arith.mulf %486, %482 : vector<8x256xf32>
    %488 = arith.addf %474, %487 : vector<8x256xf32>
    %489 = vector.broadcast %84 : f32 to vector<8x256xf32>
    %490 = arith.mulf %489, %482 : vector<8x256xf32>
    %491 = arith.addf %477, %490 : vector<8x256xf32>
    %492 = vector.broadcast %120 : f32 to vector<8x256xf32>
    %493 = arith.mulf %492, %482 : vector<8x256xf32>
    %494 = arith.addf %480, %493 : vector<8x256xf32>
    %495 = vector.broadcast %13 : f32 to vector<8x256xf32>
    %496 = arith.mulf %495, %308 : vector<8x256xf32>
    %497 = arith.addf %485, %496 : vector<8x256xf32>
    %498 = vector.broadcast %49 : f32 to vector<8x256xf32>
    %499 = arith.mulf %498, %308 : vector<8x256xf32>
    %500 = arith.addf %488, %499 : vector<8x256xf32>
    %501 = vector.broadcast %85 : f32 to vector<8x256xf32>
    %502 = arith.mulf %501, %308 : vector<8x256xf32>
    %503 = arith.addf %491, %502 : vector<8x256xf32>
    %504 = vector.broadcast %121 : f32 to vector<8x256xf32>
    %505 = arith.mulf %504, %308 : vector<8x256xf32>
    %506 = arith.addf %494, %505 : vector<8x256xf32>
    %c255_i32_176 = arith.constant 255 : i32
    %507 = tpu.dynamic_rotate %308 by %c255_i32_176 dim 1 : vector<8x256xf32>, i32 -> vector<8x256xf32>
    %508 = arith.mulf %507, %303 : vector<8x256xf32>
    %509 = vector.broadcast %14 : f32 to vector<8x256xf32>
    %510 = arith.mulf %509, %508 : vector<8x256xf32>
    %511 = arith.addf %497, %510 : vector<8x256xf32>
    %512 = vector.broadcast %50 : f32 to vector<8x256xf32>
    %513 = arith.mulf %512, %508 : vector<8x256xf32>
    %514 = arith.addf %500, %513 : vector<8x256xf32>
    %515 = vector.broadcast %86 : f32 to vector<8x256xf32>
    %516 = arith.mulf %515, %508 : vector<8x256xf32>
    %517 = arith.addf %503, %516 : vector<8x256xf32>
    %518 = vector.broadcast %122 : f32 to vector<8x256xf32>
    %519 = arith.mulf %518, %508 : vector<8x256xf32>
    %520 = arith.addf %506, %519 : vector<8x256xf32>
    %c241_i32_177 = arith.constant 241 : i32
    %521 = tpu.dynamic_rotate %308 by %c241_i32_177 dim 1 : vector<8x256xf32>, i32 -> vector<8x256xf32>
    %522 = arith.mulf %521, %304 : vector<8x256xf32>
    %523 = vector.broadcast %15 : f32 to vector<8x256xf32>
    %524 = arith.mulf %523, %522 : vector<8x256xf32>
    %525 = arith.addf %511, %524 : vector<8x256xf32>
    %526 = vector.broadcast %51 : f32 to vector<8x256xf32>
    %527 = arith.mulf %526, %522 : vector<8x256xf32>
    %528 = arith.addf %514, %527 : vector<8x256xf32>
    %529 = vector.broadcast %87 : f32 to vector<8x256xf32>
    %530 = arith.mulf %529, %522 : vector<8x256xf32>
    %531 = arith.addf %517, %530 : vector<8x256xf32>
    %532 = vector.broadcast %123 : f32 to vector<8x256xf32>
    %533 = arith.mulf %532, %522 : vector<8x256xf32>
    %534 = arith.addf %520, %533 : vector<8x256xf32>
    %c240_i32_178 = arith.constant 240 : i32
    %535 = tpu.dynamic_rotate %308 by %c240_i32_178 dim 1 : vector<8x256xf32>, i32 -> vector<8x256xf32>
    %536 = arith.mulf %535, %305 : vector<8x256xf32>
    %537 = vector.broadcast %16 : f32 to vector<8x256xf32>
    %538 = arith.mulf %537, %536 : vector<8x256xf32>
    %539 = arith.addf %525, %538 : vector<8x256xf32>
    %540 = vector.broadcast %52 : f32 to vector<8x256xf32>
    %541 = arith.mulf %540, %536 : vector<8x256xf32>
    %542 = arith.addf %528, %541 : vector<8x256xf32>
    %543 = vector.broadcast %88 : f32 to vector<8x256xf32>
    %544 = arith.mulf %543, %536 : vector<8x256xf32>
    %545 = arith.addf %531, %544 : vector<8x256xf32>
    %546 = vector.broadcast %124 : f32 to vector<8x256xf32>
    %547 = arith.mulf %546, %536 : vector<8x256xf32>
    %548 = arith.addf %534, %547 : vector<8x256xf32>
    %c239_i32_179 = arith.constant 239 : i32
    %549 = tpu.dynamic_rotate %308 by %c239_i32_179 dim 1 : vector<8x256xf32>, i32 -> vector<8x256xf32>
    %550 = arith.mulf %549, %306 : vector<8x256xf32>
    %551 = vector.broadcast %17 : f32 to vector<8x256xf32>
    %552 = arith.mulf %551, %550 : vector<8x256xf32>
    %553 = arith.addf %539, %552 : vector<8x256xf32>
    %554 = vector.broadcast %53 : f32 to vector<8x256xf32>
    %555 = arith.mulf %554, %550 : vector<8x256xf32>
    %556 = arith.addf %542, %555 : vector<8x256xf32>
    %557 = vector.broadcast %89 : f32 to vector<8x256xf32>
    %558 = arith.mulf %557, %550 : vector<8x256xf32>
    %559 = arith.addf %545, %558 : vector<8x256xf32>
    %560 = vector.broadcast %125 : f32 to vector<8x256xf32>
    %561 = arith.mulf %560, %550 : vector<8x256xf32>
    %562 = arith.addf %548, %561 : vector<8x256xf32>
    %c17_i32_180 = arith.constant 17 : i32
    %563 = tpu.dynamic_rotate %309 by %c17_i32_180 dim 1 : vector<8x256xf32>, i32 -> vector<8x256xf32>
    %564 = arith.mulf %563, %299 : vector<8x256xf32>
    %565 = vector.broadcast %18 : f32 to vector<8x256xf32>
    %566 = arith.mulf %565, %564 : vector<8x256xf32>
    %567 = arith.addf %553, %566 : vector<8x256xf32>
    %568 = vector.broadcast %54 : f32 to vector<8x256xf32>
    %569 = arith.mulf %568, %564 : vector<8x256xf32>
    %570 = arith.addf %556, %569 : vector<8x256xf32>
    %571 = vector.broadcast %90 : f32 to vector<8x256xf32>
    %572 = arith.mulf %571, %564 : vector<8x256xf32>
    %573 = arith.addf %559, %572 : vector<8x256xf32>
    %574 = vector.broadcast %126 : f32 to vector<8x256xf32>
    %575 = arith.mulf %574, %564 : vector<8x256xf32>
    %576 = arith.addf %562, %575 : vector<8x256xf32>
    %c16_i32_181 = arith.constant 16 : i32
    %577 = tpu.dynamic_rotate %309 by %c16_i32_181 dim 1 : vector<8x256xf32>, i32 -> vector<8x256xf32>
    %578 = arith.mulf %577, %300 : vector<8x256xf32>
    %579 = vector.broadcast %19 : f32 to vector<8x256xf32>
    %580 = arith.mulf %579, %578 : vector<8x256xf32>
    %581 = arith.addf %567, %580 : vector<8x256xf32>
    %582 = vector.broadcast %55 : f32 to vector<8x256xf32>
    %583 = arith.mulf %582, %578 : vector<8x256xf32>
    %584 = arith.addf %570, %583 : vector<8x256xf32>
    %585 = vector.broadcast %91 : f32 to vector<8x256xf32>
    %586 = arith.mulf %585, %578 : vector<8x256xf32>
    %587 = arith.addf %573, %586 : vector<8x256xf32>
    %588 = vector.broadcast %127 : f32 to vector<8x256xf32>
    %589 = arith.mulf %588, %578 : vector<8x256xf32>
    %590 = arith.addf %576, %589 : vector<8x256xf32>
    %c15_i32_182 = arith.constant 15 : i32
    %591 = tpu.dynamic_rotate %309 by %c15_i32_182 dim 1 : vector<8x256xf32>, i32 -> vector<8x256xf32>
    %592 = arith.mulf %591, %301 : vector<8x256xf32>
    %593 = vector.broadcast %20 : f32 to vector<8x256xf32>
    %594 = arith.mulf %593, %592 : vector<8x256xf32>
    %595 = arith.addf %581, %594 : vector<8x256xf32>
    %596 = vector.broadcast %56 : f32 to vector<8x256xf32>
    %597 = arith.mulf %596, %592 : vector<8x256xf32>
    %598 = arith.addf %584, %597 : vector<8x256xf32>
    %599 = vector.broadcast %92 : f32 to vector<8x256xf32>
    %600 = arith.mulf %599, %592 : vector<8x256xf32>
    %601 = arith.addf %587, %600 : vector<8x256xf32>
    %602 = vector.broadcast %128 : f32 to vector<8x256xf32>
    %603 = arith.mulf %602, %592 : vector<8x256xf32>
    %604 = arith.addf %590, %603 : vector<8x256xf32>
    %c1_i32_183 = arith.constant 1 : i32
    %605 = tpu.dynamic_rotate %309 by %c1_i32_183 dim 1 : vector<8x256xf32>, i32 -> vector<8x256xf32>
    %606 = arith.mulf %605, %302 : vector<8x256xf32>
    %607 = vector.broadcast %21 : f32 to vector<8x256xf32>
    %608 = arith.mulf %607, %606 : vector<8x256xf32>
    %609 = arith.addf %595, %608 : vector<8x256xf32>
    %610 = vector.broadcast %57 : f32 to vector<8x256xf32>
    %611 = arith.mulf %610, %606 : vector<8x256xf32>
    %612 = arith.addf %598, %611 : vector<8x256xf32>
    %613 = vector.broadcast %93 : f32 to vector<8x256xf32>
    %614 = arith.mulf %613, %606 : vector<8x256xf32>
    %615 = arith.addf %601, %614 : vector<8x256xf32>
    %616 = vector.broadcast %129 : f32 to vector<8x256xf32>
    %617 = arith.mulf %616, %606 : vector<8x256xf32>
    %618 = arith.addf %604, %617 : vector<8x256xf32>
    %619 = vector.broadcast %22 : f32 to vector<8x256xf32>
    %620 = arith.mulf %619, %309 : vector<8x256xf32>
    %621 = arith.addf %609, %620 : vector<8x256xf32>
    %622 = vector.broadcast %58 : f32 to vector<8x256xf32>
    %623 = arith.mulf %622, %309 : vector<8x256xf32>
    %624 = arith.addf %612, %623 : vector<8x256xf32>
    %625 = vector.broadcast %94 : f32 to vector<8x256xf32>
    %626 = arith.mulf %625, %309 : vector<8x256xf32>
    %627 = arith.addf %615, %626 : vector<8x256xf32>
    %628 = vector.broadcast %130 : f32 to vector<8x256xf32>
    %629 = arith.mulf %628, %309 : vector<8x256xf32>
    %630 = arith.addf %618, %629 : vector<8x256xf32>
    %c255_i32_184 = arith.constant 255 : i32
    %631 = tpu.dynamic_rotate %309 by %c255_i32_184 dim 1 : vector<8x256xf32>, i32 -> vector<8x256xf32>
    %632 = arith.mulf %631, %303 : vector<8x256xf32>
    %633 = vector.broadcast %23 : f32 to vector<8x256xf32>
    %634 = arith.mulf %633, %632 : vector<8x256xf32>
    %635 = arith.addf %621, %634 : vector<8x256xf32>
    %636 = vector.broadcast %59 : f32 to vector<8x256xf32>
    %637 = arith.mulf %636, %632 : vector<8x256xf32>
    %638 = arith.addf %624, %637 : vector<8x256xf32>
    %639 = vector.broadcast %95 : f32 to vector<8x256xf32>
    %640 = arith.mulf %639, %632 : vector<8x256xf32>
    %641 = arith.addf %627, %640 : vector<8x256xf32>
    %642 = vector.broadcast %131 : f32 to vector<8x256xf32>
    %643 = arith.mulf %642, %632 : vector<8x256xf32>
    %644 = arith.addf %630, %643 : vector<8x256xf32>
    %c241_i32_185 = arith.constant 241 : i32
    %645 = tpu.dynamic_rotate %309 by %c241_i32_185 dim 1 : vector<8x256xf32>, i32 -> vector<8x256xf32>
    %646 = arith.mulf %645, %304 : vector<8x256xf32>
    %647 = vector.broadcast %24 : f32 to vector<8x256xf32>
    %648 = arith.mulf %647, %646 : vector<8x256xf32>
    %649 = arith.addf %635, %648 : vector<8x256xf32>
    %650 = vector.broadcast %60 : f32 to vector<8x256xf32>
    %651 = arith.mulf %650, %646 : vector<8x256xf32>
    %652 = arith.addf %638, %651 : vector<8x256xf32>
    %653 = vector.broadcast %96 : f32 to vector<8x256xf32>
    %654 = arith.mulf %653, %646 : vector<8x256xf32>
    %655 = arith.addf %641, %654 : vector<8x256xf32>
    %656 = vector.broadcast %132 : f32 to vector<8x256xf32>
    %657 = arith.mulf %656, %646 : vector<8x256xf32>
    %658 = arith.addf %644, %657 : vector<8x256xf32>
    %c240_i32_186 = arith.constant 240 : i32
    %659 = tpu.dynamic_rotate %309 by %c240_i32_186 dim 1 : vector<8x256xf32>, i32 -> vector<8x256xf32>
    %660 = arith.mulf %659, %305 : vector<8x256xf32>
    %661 = vector.broadcast %25 : f32 to vector<8x256xf32>
    %662 = arith.mulf %661, %660 : vector<8x256xf32>
    %663 = arith.addf %649, %662 : vector<8x256xf32>
    %664 = vector.broadcast %61 : f32 to vector<8x256xf32>
    %665 = arith.mulf %664, %660 : vector<8x256xf32>
    %666 = arith.addf %652, %665 : vector<8x256xf32>
    %667 = vector.broadcast %97 : f32 to vector<8x256xf32>
    %668 = arith.mulf %667, %660 : vector<8x256xf32>
    %669 = arith.addf %655, %668 : vector<8x256xf32>
    %670 = vector.broadcast %133 : f32 to vector<8x256xf32>
    %671 = arith.mulf %670, %660 : vector<8x256xf32>
    %672 = arith.addf %658, %671 : vector<8x256xf32>
    %c239_i32_187 = arith.constant 239 : i32
    %673 = tpu.dynamic_rotate %309 by %c239_i32_187 dim 1 : vector<8x256xf32>, i32 -> vector<8x256xf32>
    %674 = arith.mulf %673, %306 : vector<8x256xf32>
    %675 = vector.broadcast %26 : f32 to vector<8x256xf32>
    %676 = arith.mulf %675, %674 : vector<8x256xf32>
    %677 = arith.addf %663, %676 : vector<8x256xf32>
    %678 = vector.broadcast %62 : f32 to vector<8x256xf32>
    %679 = arith.mulf %678, %674 : vector<8x256xf32>
    %680 = arith.addf %666, %679 : vector<8x256xf32>
    %681 = vector.broadcast %98 : f32 to vector<8x256xf32>
    %682 = arith.mulf %681, %674 : vector<8x256xf32>
    %683 = arith.addf %669, %682 : vector<8x256xf32>
    %684 = vector.broadcast %134 : f32 to vector<8x256xf32>
    %685 = arith.mulf %684, %674 : vector<8x256xf32>
    %686 = arith.addf %672, %685 : vector<8x256xf32>
    %c17_i32_188 = arith.constant 17 : i32
    %687 = tpu.dynamic_rotate %310 by %c17_i32_188 dim 1 : vector<8x256xf32>, i32 -> vector<8x256xf32>
    %688 = arith.mulf %687, %299 : vector<8x256xf32>
    %689 = vector.broadcast %27 : f32 to vector<8x256xf32>
    %690 = arith.mulf %689, %688 : vector<8x256xf32>
    %691 = arith.addf %677, %690 : vector<8x256xf32>
    %692 = vector.broadcast %63 : f32 to vector<8x256xf32>
    %693 = arith.mulf %692, %688 : vector<8x256xf32>
    %694 = arith.addf %680, %693 : vector<8x256xf32>
    %695 = vector.broadcast %99 : f32 to vector<8x256xf32>
    %696 = arith.mulf %695, %688 : vector<8x256xf32>
    %697 = arith.addf %683, %696 : vector<8x256xf32>
    %698 = vector.broadcast %135 : f32 to vector<8x256xf32>
    %699 = arith.mulf %698, %688 : vector<8x256xf32>
    %700 = arith.addf %686, %699 : vector<8x256xf32>
    %c16_i32_189 = arith.constant 16 : i32
    %701 = tpu.dynamic_rotate %310 by %c16_i32_189 dim 1 : vector<8x256xf32>, i32 -> vector<8x256xf32>
    %702 = arith.mulf %701, %300 : vector<8x256xf32>
    %703 = vector.broadcast %28 : f32 to vector<8x256xf32>
    %704 = arith.mulf %703, %702 : vector<8x256xf32>
    %705 = arith.addf %691, %704 : vector<8x256xf32>
    %706 = vector.broadcast %64 : f32 to vector<8x256xf32>
    %707 = arith.mulf %706, %702 : vector<8x256xf32>
    %708 = arith.addf %694, %707 : vector<8x256xf32>
    %709 = vector.broadcast %100 : f32 to vector<8x256xf32>
    %710 = arith.mulf %709, %702 : vector<8x256xf32>
    %711 = arith.addf %697, %710 : vector<8x256xf32>
    %712 = vector.broadcast %136 : f32 to vector<8x256xf32>
    %713 = arith.mulf %712, %702 : vector<8x256xf32>
    %714 = arith.addf %700, %713 : vector<8x256xf32>
    %c15_i32_190 = arith.constant 15 : i32
    %715 = tpu.dynamic_rotate %310 by %c15_i32_190 dim 1 : vector<8x256xf32>, i32 -> vector<8x256xf32>
    %716 = arith.mulf %715, %301 : vector<8x256xf32>
    %717 = vector.broadcast %29 : f32 to vector<8x256xf32>
    %718 = arith.mulf %717, %716 : vector<8x256xf32>
    %719 = arith.addf %705, %718 : vector<8x256xf32>
    %720 = vector.broadcast %65 : f32 to vector<8x256xf32>
    %721 = arith.mulf %720, %716 : vector<8x256xf32>
    %722 = arith.addf %708, %721 : vector<8x256xf32>
    %723 = vector.broadcast %101 : f32 to vector<8x256xf32>
    %724 = arith.mulf %723, %716 : vector<8x256xf32>
    %725 = arith.addf %711, %724 : vector<8x256xf32>
    %726 = vector.broadcast %137 : f32 to vector<8x256xf32>
    %727 = arith.mulf %726, %716 : vector<8x256xf32>
    %728 = arith.addf %714, %727 : vector<8x256xf32>
    %c1_i32_191 = arith.constant 1 : i32
    %729 = tpu.dynamic_rotate %310 by %c1_i32_191 dim 1 : vector<8x256xf32>, i32 -> vector<8x256xf32>
    %730 = arith.mulf %729, %302 : vector<8x256xf32>
    %731 = vector.broadcast %30 : f32 to vector<8x256xf32>
    %732 = arith.mulf %731, %730 : vector<8x256xf32>
    %733 = arith.addf %719, %732 : vector<8x256xf32>
    %734 = vector.broadcast %66 : f32 to vector<8x256xf32>
    %735 = arith.mulf %734, %730 : vector<8x256xf32>
    %736 = arith.addf %722, %735 : vector<8x256xf32>
    %737 = vector.broadcast %102 : f32 to vector<8x256xf32>
    %738 = arith.mulf %737, %730 : vector<8x256xf32>
    %739 = arith.addf %725, %738 : vector<8x256xf32>
    %740 = vector.broadcast %138 : f32 to vector<8x256xf32>
    %741 = arith.mulf %740, %730 : vector<8x256xf32>
    %742 = arith.addf %728, %741 : vector<8x256xf32>
    %743 = vector.broadcast %31 : f32 to vector<8x256xf32>
    %744 = arith.mulf %743, %310 : vector<8x256xf32>
    %745 = arith.addf %733, %744 : vector<8x256xf32>
    %746 = vector.broadcast %67 : f32 to vector<8x256xf32>
    %747 = arith.mulf %746, %310 : vector<8x256xf32>
    %748 = arith.addf %736, %747 : vector<8x256xf32>
    %749 = vector.broadcast %103 : f32 to vector<8x256xf32>
    %750 = arith.mulf %749, %310 : vector<8x256xf32>
    %751 = arith.addf %739, %750 : vector<8x256xf32>
    %752 = vector.broadcast %139 : f32 to vector<8x256xf32>
    %753 = arith.mulf %752, %310 : vector<8x256xf32>
    %754 = arith.addf %742, %753 : vector<8x256xf32>
    %c255_i32_192 = arith.constant 255 : i32
    %755 = tpu.dynamic_rotate %310 by %c255_i32_192 dim 1 : vector<8x256xf32>, i32 -> vector<8x256xf32>
    %756 = arith.mulf %755, %303 : vector<8x256xf32>
    %757 = vector.broadcast %32 : f32 to vector<8x256xf32>
    %758 = arith.mulf %757, %756 : vector<8x256xf32>
    %759 = arith.addf %745, %758 : vector<8x256xf32>
    %760 = vector.broadcast %68 : f32 to vector<8x256xf32>
    %761 = arith.mulf %760, %756 : vector<8x256xf32>
    %762 = arith.addf %748, %761 : vector<8x256xf32>
    %763 = vector.broadcast %104 : f32 to vector<8x256xf32>
    %764 = arith.mulf %763, %756 : vector<8x256xf32>
    %765 = arith.addf %751, %764 : vector<8x256xf32>
    %766 = vector.broadcast %140 : f32 to vector<8x256xf32>
    %767 = arith.mulf %766, %756 : vector<8x256xf32>
    %768 = arith.addf %754, %767 : vector<8x256xf32>
    %c241_i32_193 = arith.constant 241 : i32
    %769 = tpu.dynamic_rotate %310 by %c241_i32_193 dim 1 : vector<8x256xf32>, i32 -> vector<8x256xf32>
    %770 = arith.mulf %769, %304 : vector<8x256xf32>
    %771 = vector.broadcast %33 : f32 to vector<8x256xf32>
    %772 = arith.mulf %771, %770 : vector<8x256xf32>
    %773 = arith.addf %759, %772 : vector<8x256xf32>
    %774 = vector.broadcast %69 : f32 to vector<8x256xf32>
    %775 = arith.mulf %774, %770 : vector<8x256xf32>
    %776 = arith.addf %762, %775 : vector<8x256xf32>
    %777 = vector.broadcast %105 : f32 to vector<8x256xf32>
    %778 = arith.mulf %777, %770 : vector<8x256xf32>
    %779 = arith.addf %765, %778 : vector<8x256xf32>
    %780 = vector.broadcast %141 : f32 to vector<8x256xf32>
    %781 = arith.mulf %780, %770 : vector<8x256xf32>
    %782 = arith.addf %768, %781 : vector<8x256xf32>
    %c240_i32_194 = arith.constant 240 : i32
    %783 = tpu.dynamic_rotate %310 by %c240_i32_194 dim 1 : vector<8x256xf32>, i32 -> vector<8x256xf32>
    %784 = arith.mulf %783, %305 : vector<8x256xf32>
    %785 = vector.broadcast %34 : f32 to vector<8x256xf32>
    %786 = arith.mulf %785, %784 : vector<8x256xf32>
    %787 = arith.addf %773, %786 : vector<8x256xf32>
    %788 = vector.broadcast %70 : f32 to vector<8x256xf32>
    %789 = arith.mulf %788, %784 : vector<8x256xf32>
    %790 = arith.addf %776, %789 : vector<8x256xf32>
    %791 = vector.broadcast %106 : f32 to vector<8x256xf32>
    %792 = arith.mulf %791, %784 : vector<8x256xf32>
    %793 = arith.addf %779, %792 : vector<8x256xf32>
    %794 = vector.broadcast %142 : f32 to vector<8x256xf32>
    %795 = arith.mulf %794, %784 : vector<8x256xf32>
    %796 = arith.addf %782, %795 : vector<8x256xf32>
    %c239_i32_195 = arith.constant 239 : i32
    %797 = tpu.dynamic_rotate %310 by %c239_i32_195 dim 1 : vector<8x256xf32>, i32 -> vector<8x256xf32>
    %798 = arith.mulf %797, %306 : vector<8x256xf32>
    %799 = vector.broadcast %35 : f32 to vector<8x256xf32>
    %800 = arith.mulf %799, %798 : vector<8x256xf32>
    %801 = arith.addf %787, %800 : vector<8x256xf32>
    %802 = vector.broadcast %71 : f32 to vector<8x256xf32>
    %803 = arith.mulf %802, %798 : vector<8x256xf32>
    %804 = arith.addf %790, %803 : vector<8x256xf32>
    %805 = vector.broadcast %107 : f32 to vector<8x256xf32>
    %806 = arith.mulf %805, %798 : vector<8x256xf32>
    %807 = arith.addf %793, %806 : vector<8x256xf32>
    %808 = vector.broadcast %143 : f32 to vector<8x256xf32>
    %809 = arith.mulf %808, %798 : vector<8x256xf32>
    %810 = arith.addf %796, %809 : vector<8x256xf32>
    %cst = arith.constant 0.000000e+00 : f32
    %811 = vector.broadcast %cst : f32 to vector<8x256xf32>
    %812 = arith.maximumf %801, %811 : vector<8x256xf32>
    %cst_196 = arith.constant 0.000000e+00 : f32
    %813 = vector.broadcast %cst_196 : f32 to vector<8x256xf32>
    %814 = arith.maximumf %804, %813 : vector<8x256xf32>
    %cst_197 = arith.constant 0.000000e+00 : f32
    %815 = vector.broadcast %cst_197 : f32 to vector<8x256xf32>
    %816 = arith.maximumf %807, %815 : vector<8x256xf32>
    %cst_198 = arith.constant 0.000000e+00 : f32
    %817 = vector.broadcast %cst_198 : f32 to vector<8x256xf32>
    %818 = arith.maximumf %810, %817 : vector<8x256xf32>
    %819 = vector.broadcast %292 : f32 to vector<8x256xf32>
    %820 = vector.broadcast %293 : f32 to vector<8x256xf32>
    %821 = vector.broadcast %294 : f32 to vector<8x256xf32>
    %822 = vector.broadcast %295 : f32 to vector<8x256xf32>
    %c17_i32_199 = arith.constant 17 : i32
    %823 = tpu.dynamic_rotate %812 by %c17_i32_199 dim 1 : vector<8x256xf32>, i32 -> vector<8x256xf32>
    %824 = arith.mulf %823, %299 : vector<8x256xf32>
    %825 = vector.broadcast %144 : f32 to vector<8x256xf32>
    %826 = arith.mulf %825, %824 : vector<8x256xf32>
    %827 = arith.addf %819, %826 : vector<8x256xf32>
    %828 = vector.broadcast %180 : f32 to vector<8x256xf32>
    %829 = arith.mulf %828, %824 : vector<8x256xf32>
    %830 = arith.addf %820, %829 : vector<8x256xf32>
    %831 = vector.broadcast %216 : f32 to vector<8x256xf32>
    %832 = arith.mulf %831, %824 : vector<8x256xf32>
    %833 = arith.addf %821, %832 : vector<8x256xf32>
    %834 = vector.broadcast %252 : f32 to vector<8x256xf32>
    %835 = arith.mulf %834, %824 : vector<8x256xf32>
    %836 = arith.addf %822, %835 : vector<8x256xf32>
    %c16_i32_200 = arith.constant 16 : i32
    %837 = tpu.dynamic_rotate %812 by %c16_i32_200 dim 1 : vector<8x256xf32>, i32 -> vector<8x256xf32>
    %838 = arith.mulf %837, %300 : vector<8x256xf32>
    %839 = vector.broadcast %145 : f32 to vector<8x256xf32>
    %840 = arith.mulf %839, %838 : vector<8x256xf32>
    %841 = arith.addf %827, %840 : vector<8x256xf32>
    %842 = vector.broadcast %181 : f32 to vector<8x256xf32>
    %843 = arith.mulf %842, %838 : vector<8x256xf32>
    %844 = arith.addf %830, %843 : vector<8x256xf32>
    %845 = vector.broadcast %217 : f32 to vector<8x256xf32>
    %846 = arith.mulf %845, %838 : vector<8x256xf32>
    %847 = arith.addf %833, %846 : vector<8x256xf32>
    %848 = vector.broadcast %253 : f32 to vector<8x256xf32>
    %849 = arith.mulf %848, %838 : vector<8x256xf32>
    %850 = arith.addf %836, %849 : vector<8x256xf32>
    %c15_i32_201 = arith.constant 15 : i32
    %851 = tpu.dynamic_rotate %812 by %c15_i32_201 dim 1 : vector<8x256xf32>, i32 -> vector<8x256xf32>
    %852 = arith.mulf %851, %301 : vector<8x256xf32>
    %853 = vector.broadcast %146 : f32 to vector<8x256xf32>
    %854 = arith.mulf %853, %852 : vector<8x256xf32>
    %855 = arith.addf %841, %854 : vector<8x256xf32>
    %856 = vector.broadcast %182 : f32 to vector<8x256xf32>
    %857 = arith.mulf %856, %852 : vector<8x256xf32>
    %858 = arith.addf %844, %857 : vector<8x256xf32>
    %859 = vector.broadcast %218 : f32 to vector<8x256xf32>
    %860 = arith.mulf %859, %852 : vector<8x256xf32>
    %861 = arith.addf %847, %860 : vector<8x256xf32>
    %862 = vector.broadcast %254 : f32 to vector<8x256xf32>
    %863 = arith.mulf %862, %852 : vector<8x256xf32>
    %864 = arith.addf %850, %863 : vector<8x256xf32>
    %c1_i32_202 = arith.constant 1 : i32
    %865 = tpu.dynamic_rotate %812 by %c1_i32_202 dim 1 : vector<8x256xf32>, i32 -> vector<8x256xf32>
    %866 = arith.mulf %865, %302 : vector<8x256xf32>
    %867 = vector.broadcast %147 : f32 to vector<8x256xf32>
    %868 = arith.mulf %867, %866 : vector<8x256xf32>
    %869 = arith.addf %855, %868 : vector<8x256xf32>
    %870 = vector.broadcast %183 : f32 to vector<8x256xf32>
    %871 = arith.mulf %870, %866 : vector<8x256xf32>
    %872 = arith.addf %858, %871 : vector<8x256xf32>
    %873 = vector.broadcast %219 : f32 to vector<8x256xf32>
    %874 = arith.mulf %873, %866 : vector<8x256xf32>
    %875 = arith.addf %861, %874 : vector<8x256xf32>
    %876 = vector.broadcast %255 : f32 to vector<8x256xf32>
    %877 = arith.mulf %876, %866 : vector<8x256xf32>
    %878 = arith.addf %864, %877 : vector<8x256xf32>
    %879 = vector.broadcast %148 : f32 to vector<8x256xf32>
    %880 = arith.mulf %879, %812 : vector<8x256xf32>
    %881 = arith.addf %869, %880 : vector<8x256xf32>
    %882 = vector.broadcast %184 : f32 to vector<8x256xf32>
    %883 = arith.mulf %882, %812 : vector<8x256xf32>
    %884 = arith.addf %872, %883 : vector<8x256xf32>
    %885 = vector.broadcast %220 : f32 to vector<8x256xf32>
    %886 = arith.mulf %885, %812 : vector<8x256xf32>
    %887 = arith.addf %875, %886 : vector<8x256xf32>
    %888 = vector.broadcast %256 : f32 to vector<8x256xf32>
    %889 = arith.mulf %888, %812 : vector<8x256xf32>
    %890 = arith.addf %878, %889 : vector<8x256xf32>
    %c255_i32_203 = arith.constant 255 : i32
    %891 = tpu.dynamic_rotate %812 by %c255_i32_203 dim 1 : vector<8x256xf32>, i32 -> vector<8x256xf32>
    %892 = arith.mulf %891, %303 : vector<8x256xf32>
    %893 = vector.broadcast %149 : f32 to vector<8x256xf32>
    %894 = arith.mulf %893, %892 : vector<8x256xf32>
    %895 = arith.addf %881, %894 : vector<8x256xf32>
    %896 = vector.broadcast %185 : f32 to vector<8x256xf32>
    %897 = arith.mulf %896, %892 : vector<8x256xf32>
    %898 = arith.addf %884, %897 : vector<8x256xf32>
    %899 = vector.broadcast %221 : f32 to vector<8x256xf32>
    %900 = arith.mulf %899, %892 : vector<8x256xf32>
    %901 = arith.addf %887, %900 : vector<8x256xf32>
    %902 = vector.broadcast %257 : f32 to vector<8x256xf32>
    %903 = arith.mulf %902, %892 : vector<8x256xf32>
    %904 = arith.addf %890, %903 : vector<8x256xf32>
    %c241_i32_204 = arith.constant 241 : i32
    %905 = tpu.dynamic_rotate %812 by %c241_i32_204 dim 1 : vector<8x256xf32>, i32 -> vector<8x256xf32>
    %906 = arith.mulf %905, %304 : vector<8x256xf32>
    %907 = vector.broadcast %150 : f32 to vector<8x256xf32>
    %908 = arith.mulf %907, %906 : vector<8x256xf32>
    %909 = arith.addf %895, %908 : vector<8x256xf32>
    %910 = vector.broadcast %186 : f32 to vector<8x256xf32>
    %911 = arith.mulf %910, %906 : vector<8x256xf32>
    %912 = arith.addf %898, %911 : vector<8x256xf32>
    %913 = vector.broadcast %222 : f32 to vector<8x256xf32>
    %914 = arith.mulf %913, %906 : vector<8x256xf32>
    %915 = arith.addf %901, %914 : vector<8x256xf32>
    %916 = vector.broadcast %258 : f32 to vector<8x256xf32>
    %917 = arith.mulf %916, %906 : vector<8x256xf32>
    %918 = arith.addf %904, %917 : vector<8x256xf32>
    %c240_i32_205 = arith.constant 240 : i32
    %919 = tpu.dynamic_rotate %812 by %c240_i32_205 dim 1 : vector<8x256xf32>, i32 -> vector<8x256xf32>
    %920 = arith.mulf %919, %305 : vector<8x256xf32>
    %921 = vector.broadcast %151 : f32 to vector<8x256xf32>
    %922 = arith.mulf %921, %920 : vector<8x256xf32>
    %923 = arith.addf %909, %922 : vector<8x256xf32>
    %924 = vector.broadcast %187 : f32 to vector<8x256xf32>
    %925 = arith.mulf %924, %920 : vector<8x256xf32>
    %926 = arith.addf %912, %925 : vector<8x256xf32>
    %927 = vector.broadcast %223 : f32 to vector<8x256xf32>
    %928 = arith.mulf %927, %920 : vector<8x256xf32>
    %929 = arith.addf %915, %928 : vector<8x256xf32>
    %930 = vector.broadcast %259 : f32 to vector<8x256xf32>
    %931 = arith.mulf %930, %920 : vector<8x256xf32>
    %932 = arith.addf %918, %931 : vector<8x256xf32>
    %c239_i32_206 = arith.constant 239 : i32
    %933 = tpu.dynamic_rotate %812 by %c239_i32_206 dim 1 : vector<8x256xf32>, i32 -> vector<8x256xf32>
    %934 = arith.mulf %933, %306 : vector<8x256xf32>
    %935 = vector.broadcast %152 : f32 to vector<8x256xf32>
    %936 = arith.mulf %935, %934 : vector<8x256xf32>
    %937 = arith.addf %923, %936 : vector<8x256xf32>
    %938 = vector.broadcast %188 : f32 to vector<8x256xf32>
    %939 = arith.mulf %938, %934 : vector<8x256xf32>
    %940 = arith.addf %926, %939 : vector<8x256xf32>
    %941 = vector.broadcast %224 : f32 to vector<8x256xf32>
    %942 = arith.mulf %941, %934 : vector<8x256xf32>
    %943 = arith.addf %929, %942 : vector<8x256xf32>
    %944 = vector.broadcast %260 : f32 to vector<8x256xf32>
    %945 = arith.mulf %944, %934 : vector<8x256xf32>
    %946 = arith.addf %932, %945 : vector<8x256xf32>
    %c17_i32_207 = arith.constant 17 : i32
    %947 = tpu.dynamic_rotate %814 by %c17_i32_207 dim 1 : vector<8x256xf32>, i32 -> vector<8x256xf32>
    %948 = arith.mulf %947, %299 : vector<8x256xf32>
    %949 = vector.broadcast %153 : f32 to vector<8x256xf32>
    %950 = arith.mulf %949, %948 : vector<8x256xf32>
    %951 = arith.addf %937, %950 : vector<8x256xf32>
    %952 = vector.broadcast %189 : f32 to vector<8x256xf32>
    %953 = arith.mulf %952, %948 : vector<8x256xf32>
    %954 = arith.addf %940, %953 : vector<8x256xf32>
    %955 = vector.broadcast %225 : f32 to vector<8x256xf32>
    %956 = arith.mulf %955, %948 : vector<8x256xf32>
    %957 = arith.addf %943, %956 : vector<8x256xf32>
    %958 = vector.broadcast %261 : f32 to vector<8x256xf32>
    %959 = arith.mulf %958, %948 : vector<8x256xf32>
    %960 = arith.addf %946, %959 : vector<8x256xf32>
    %c16_i32_208 = arith.constant 16 : i32
    %961 = tpu.dynamic_rotate %814 by %c16_i32_208 dim 1 : vector<8x256xf32>, i32 -> vector<8x256xf32>
    %962 = arith.mulf %961, %300 : vector<8x256xf32>
    %963 = vector.broadcast %154 : f32 to vector<8x256xf32>
    %964 = arith.mulf %963, %962 : vector<8x256xf32>
    %965 = arith.addf %951, %964 : vector<8x256xf32>
    %966 = vector.broadcast %190 : f32 to vector<8x256xf32>
    %967 = arith.mulf %966, %962 : vector<8x256xf32>
    %968 = arith.addf %954, %967 : vector<8x256xf32>
    %969 = vector.broadcast %226 : f32 to vector<8x256xf32>
    %970 = arith.mulf %969, %962 : vector<8x256xf32>
    %971 = arith.addf %957, %970 : vector<8x256xf32>
    %972 = vector.broadcast %262 : f32 to vector<8x256xf32>
    %973 = arith.mulf %972, %962 : vector<8x256xf32>
    %974 = arith.addf %960, %973 : vector<8x256xf32>
    %c15_i32_209 = arith.constant 15 : i32
    %975 = tpu.dynamic_rotate %814 by %c15_i32_209 dim 1 : vector<8x256xf32>, i32 -> vector<8x256xf32>
    %976 = arith.mulf %975, %301 : vector<8x256xf32>
    %977 = vector.broadcast %155 : f32 to vector<8x256xf32>
    %978 = arith.mulf %977, %976 : vector<8x256xf32>
    %979 = arith.addf %965, %978 : vector<8x256xf32>
    %980 = vector.broadcast %191 : f32 to vector<8x256xf32>
    %981 = arith.mulf %980, %976 : vector<8x256xf32>
    %982 = arith.addf %968, %981 : vector<8x256xf32>
    %983 = vector.broadcast %227 : f32 to vector<8x256xf32>
    %984 = arith.mulf %983, %976 : vector<8x256xf32>
    %985 = arith.addf %971, %984 : vector<8x256xf32>
    %986 = vector.broadcast %263 : f32 to vector<8x256xf32>
    %987 = arith.mulf %986, %976 : vector<8x256xf32>
    %988 = arith.addf %974, %987 : vector<8x256xf32>
    %c1_i32_210 = arith.constant 1 : i32
    %989 = tpu.dynamic_rotate %814 by %c1_i32_210 dim 1 : vector<8x256xf32>, i32 -> vector<8x256xf32>
    %990 = arith.mulf %989, %302 : vector<8x256xf32>
    %991 = vector.broadcast %156 : f32 to vector<8x256xf32>
    %992 = arith.mulf %991, %990 : vector<8x256xf32>
    %993 = arith.addf %979, %992 : vector<8x256xf32>
    %994 = vector.broadcast %192 : f32 to vector<8x256xf32>
    %995 = arith.mulf %994, %990 : vector<8x256xf32>
    %996 = arith.addf %982, %995 : vector<8x256xf32>
    %997 = vector.broadcast %228 : f32 to vector<8x256xf32>
    %998 = arith.mulf %997, %990 : vector<8x256xf32>
    %999 = arith.addf %985, %998 : vector<8x256xf32>
    %1000 = vector.broadcast %264 : f32 to vector<8x256xf32>
    %1001 = arith.mulf %1000, %990 : vector<8x256xf32>
    %1002 = arith.addf %988, %1001 : vector<8x256xf32>
    %1003 = vector.broadcast %157 : f32 to vector<8x256xf32>
    %1004 = arith.mulf %1003, %814 : vector<8x256xf32>
    %1005 = arith.addf %993, %1004 : vector<8x256xf32>
    %1006 = vector.broadcast %193 : f32 to vector<8x256xf32>
    %1007 = arith.mulf %1006, %814 : vector<8x256xf32>
    %1008 = arith.addf %996, %1007 : vector<8x256xf32>
    %1009 = vector.broadcast %229 : f32 to vector<8x256xf32>
    %1010 = arith.mulf %1009, %814 : vector<8x256xf32>
    %1011 = arith.addf %999, %1010 : vector<8x256xf32>
    %1012 = vector.broadcast %265 : f32 to vector<8x256xf32>
    %1013 = arith.mulf %1012, %814 : vector<8x256xf32>
    %1014 = arith.addf %1002, %1013 : vector<8x256xf32>
    %c255_i32_211 = arith.constant 255 : i32
    %1015 = tpu.dynamic_rotate %814 by %c255_i32_211 dim 1 : vector<8x256xf32>, i32 -> vector<8x256xf32>
    %1016 = arith.mulf %1015, %303 : vector<8x256xf32>
    %1017 = vector.broadcast %158 : f32 to vector<8x256xf32>
    %1018 = arith.mulf %1017, %1016 : vector<8x256xf32>
    %1019 = arith.addf %1005, %1018 : vector<8x256xf32>
    %1020 = vector.broadcast %194 : f32 to vector<8x256xf32>
    %1021 = arith.mulf %1020, %1016 : vector<8x256xf32>
    %1022 = arith.addf %1008, %1021 : vector<8x256xf32>
    %1023 = vector.broadcast %230 : f32 to vector<8x256xf32>
    %1024 = arith.mulf %1023, %1016 : vector<8x256xf32>
    %1025 = arith.addf %1011, %1024 : vector<8x256xf32>
    %1026 = vector.broadcast %266 : f32 to vector<8x256xf32>
    %1027 = arith.mulf %1026, %1016 : vector<8x256xf32>
    %1028 = arith.addf %1014, %1027 : vector<8x256xf32>
    %c241_i32_212 = arith.constant 241 : i32
    %1029 = tpu.dynamic_rotate %814 by %c241_i32_212 dim 1 : vector<8x256xf32>, i32 -> vector<8x256xf32>
    %1030 = arith.mulf %1029, %304 : vector<8x256xf32>
    %1031 = vector.broadcast %159 : f32 to vector<8x256xf32>
    %1032 = arith.mulf %1031, %1030 : vector<8x256xf32>
    %1033 = arith.addf %1019, %1032 : vector<8x256xf32>
    %1034 = vector.broadcast %195 : f32 to vector<8x256xf32>
    %1035 = arith.mulf %1034, %1030 : vector<8x256xf32>
    %1036 = arith.addf %1022, %1035 : vector<8x256xf32>
    %1037 = vector.broadcast %231 : f32 to vector<8x256xf32>
    %1038 = arith.mulf %1037, %1030 : vector<8x256xf32>
    %1039 = arith.addf %1025, %1038 : vector<8x256xf32>
    %1040 = vector.broadcast %267 : f32 to vector<8x256xf32>
    %1041 = arith.mulf %1040, %1030 : vector<8x256xf32>
    %1042 = arith.addf %1028, %1041 : vector<8x256xf32>
    %c240_i32_213 = arith.constant 240 : i32
    %1043 = tpu.dynamic_rotate %814 by %c240_i32_213 dim 1 : vector<8x256xf32>, i32 -> vector<8x256xf32>
    %1044 = arith.mulf %1043, %305 : vector<8x256xf32>
    %1045 = vector.broadcast %160 : f32 to vector<8x256xf32>
    %1046 = arith.mulf %1045, %1044 : vector<8x256xf32>
    %1047 = arith.addf %1033, %1046 : vector<8x256xf32>
    %1048 = vector.broadcast %196 : f32 to vector<8x256xf32>
    %1049 = arith.mulf %1048, %1044 : vector<8x256xf32>
    %1050 = arith.addf %1036, %1049 : vector<8x256xf32>
    %1051 = vector.broadcast %232 : f32 to vector<8x256xf32>
    %1052 = arith.mulf %1051, %1044 : vector<8x256xf32>
    %1053 = arith.addf %1039, %1052 : vector<8x256xf32>
    %1054 = vector.broadcast %268 : f32 to vector<8x256xf32>
    %1055 = arith.mulf %1054, %1044 : vector<8x256xf32>
    %1056 = arith.addf %1042, %1055 : vector<8x256xf32>
    %c239_i32_214 = arith.constant 239 : i32
    %1057 = tpu.dynamic_rotate %814 by %c239_i32_214 dim 1 : vector<8x256xf32>, i32 -> vector<8x256xf32>
    %1058 = arith.mulf %1057, %306 : vector<8x256xf32>
    %1059 = vector.broadcast %161 : f32 to vector<8x256xf32>
    %1060 = arith.mulf %1059, %1058 : vector<8x256xf32>
    %1061 = arith.addf %1047, %1060 : vector<8x256xf32>
    %1062 = vector.broadcast %197 : f32 to vector<8x256xf32>
    %1063 = arith.mulf %1062, %1058 : vector<8x256xf32>
    %1064 = arith.addf %1050, %1063 : vector<8x256xf32>
    %1065 = vector.broadcast %233 : f32 to vector<8x256xf32>
    %1066 = arith.mulf %1065, %1058 : vector<8x256xf32>
    %1067 = arith.addf %1053, %1066 : vector<8x256xf32>
    %1068 = vector.broadcast %269 : f32 to vector<8x256xf32>
    %1069 = arith.mulf %1068, %1058 : vector<8x256xf32>
    %1070 = arith.addf %1056, %1069 : vector<8x256xf32>
    %c17_i32_215 = arith.constant 17 : i32
    %1071 = tpu.dynamic_rotate %816 by %c17_i32_215 dim 1 : vector<8x256xf32>, i32 -> vector<8x256xf32>
    %1072 = arith.mulf %1071, %299 : vector<8x256xf32>
    %1073 = vector.broadcast %162 : f32 to vector<8x256xf32>
    %1074 = arith.mulf %1073, %1072 : vector<8x256xf32>
    %1075 = arith.addf %1061, %1074 : vector<8x256xf32>
    %1076 = vector.broadcast %198 : f32 to vector<8x256xf32>
    %1077 = arith.mulf %1076, %1072 : vector<8x256xf32>
    %1078 = arith.addf %1064, %1077 : vector<8x256xf32>
    %1079 = vector.broadcast %234 : f32 to vector<8x256xf32>
    %1080 = arith.mulf %1079, %1072 : vector<8x256xf32>
    %1081 = arith.addf %1067, %1080 : vector<8x256xf32>
    %1082 = vector.broadcast %270 : f32 to vector<8x256xf32>
    %1083 = arith.mulf %1082, %1072 : vector<8x256xf32>
    %1084 = arith.addf %1070, %1083 : vector<8x256xf32>
    %c16_i32_216 = arith.constant 16 : i32
    %1085 = tpu.dynamic_rotate %816 by %c16_i32_216 dim 1 : vector<8x256xf32>, i32 -> vector<8x256xf32>
    %1086 = arith.mulf %1085, %300 : vector<8x256xf32>
    %1087 = vector.broadcast %163 : f32 to vector<8x256xf32>
    %1088 = arith.mulf %1087, %1086 : vector<8x256xf32>
    %1089 = arith.addf %1075, %1088 : vector<8x256xf32>
    %1090 = vector.broadcast %199 : f32 to vector<8x256xf32>
    %1091 = arith.mulf %1090, %1086 : vector<8x256xf32>
    %1092 = arith.addf %1078, %1091 : vector<8x256xf32>
    %1093 = vector.broadcast %235 : f32 to vector<8x256xf32>
    %1094 = arith.mulf %1093, %1086 : vector<8x256xf32>
    %1095 = arith.addf %1081, %1094 : vector<8x256xf32>
    %1096 = vector.broadcast %271 : f32 to vector<8x256xf32>
    %1097 = arith.mulf %1096, %1086 : vector<8x256xf32>
    %1098 = arith.addf %1084, %1097 : vector<8x256xf32>
    %c15_i32_217 = arith.constant 15 : i32
    %1099 = tpu.dynamic_rotate %816 by %c15_i32_217 dim 1 : vector<8x256xf32>, i32 -> vector<8x256xf32>
    %1100 = arith.mulf %1099, %301 : vector<8x256xf32>
    %1101 = vector.broadcast %164 : f32 to vector<8x256xf32>
    %1102 = arith.mulf %1101, %1100 : vector<8x256xf32>
    %1103 = arith.addf %1089, %1102 : vector<8x256xf32>
    %1104 = vector.broadcast %200 : f32 to vector<8x256xf32>
    %1105 = arith.mulf %1104, %1100 : vector<8x256xf32>
    %1106 = arith.addf %1092, %1105 : vector<8x256xf32>
    %1107 = vector.broadcast %236 : f32 to vector<8x256xf32>
    %1108 = arith.mulf %1107, %1100 : vector<8x256xf32>
    %1109 = arith.addf %1095, %1108 : vector<8x256xf32>
    %1110 = vector.broadcast %272 : f32 to vector<8x256xf32>
    %1111 = arith.mulf %1110, %1100 : vector<8x256xf32>
    %1112 = arith.addf %1098, %1111 : vector<8x256xf32>
    %c1_i32_218 = arith.constant 1 : i32
    %1113 = tpu.dynamic_rotate %816 by %c1_i32_218 dim 1 : vector<8x256xf32>, i32 -> vector<8x256xf32>
    %1114 = arith.mulf %1113, %302 : vector<8x256xf32>
    %1115 = vector.broadcast %165 : f32 to vector<8x256xf32>
    %1116 = arith.mulf %1115, %1114 : vector<8x256xf32>
    %1117 = arith.addf %1103, %1116 : vector<8x256xf32>
    %1118 = vector.broadcast %201 : f32 to vector<8x256xf32>
    %1119 = arith.mulf %1118, %1114 : vector<8x256xf32>
    %1120 = arith.addf %1106, %1119 : vector<8x256xf32>
    %1121 = vector.broadcast %237 : f32 to vector<8x256xf32>
    %1122 = arith.mulf %1121, %1114 : vector<8x256xf32>
    %1123 = arith.addf %1109, %1122 : vector<8x256xf32>
    %1124 = vector.broadcast %273 : f32 to vector<8x256xf32>
    %1125 = arith.mulf %1124, %1114 : vector<8x256xf32>
    %1126 = arith.addf %1112, %1125 : vector<8x256xf32>
    %1127 = vector.broadcast %166 : f32 to vector<8x256xf32>
    %1128 = arith.mulf %1127, %816 : vector<8x256xf32>
    %1129 = arith.addf %1117, %1128 : vector<8x256xf32>
    %1130 = vector.broadcast %202 : f32 to vector<8x256xf32>
    %1131 = arith.mulf %1130, %816 : vector<8x256xf32>
    %1132 = arith.addf %1120, %1131 : vector<8x256xf32>
    %1133 = vector.broadcast %238 : f32 to vector<8x256xf32>
    %1134 = arith.mulf %1133, %816 : vector<8x256xf32>
    %1135 = arith.addf %1123, %1134 : vector<8x256xf32>
    %1136 = vector.broadcast %274 : f32 to vector<8x256xf32>
    %1137 = arith.mulf %1136, %816 : vector<8x256xf32>
    %1138 = arith.addf %1126, %1137 : vector<8x256xf32>
    %c255_i32_219 = arith.constant 255 : i32
    %1139 = tpu.dynamic_rotate %816 by %c255_i32_219 dim 1 : vector<8x256xf32>, i32 -> vector<8x256xf32>
    %1140 = arith.mulf %1139, %303 : vector<8x256xf32>
    %1141 = vector.broadcast %167 : f32 to vector<8x256xf32>
    %1142 = arith.mulf %1141, %1140 : vector<8x256xf32>
    %1143 = arith.addf %1129, %1142 : vector<8x256xf32>
    %1144 = vector.broadcast %203 : f32 to vector<8x256xf32>
    %1145 = arith.mulf %1144, %1140 : vector<8x256xf32>
    %1146 = arith.addf %1132, %1145 : vector<8x256xf32>
    %1147 = vector.broadcast %239 : f32 to vector<8x256xf32>
    %1148 = arith.mulf %1147, %1140 : vector<8x256xf32>
    %1149 = arith.addf %1135, %1148 : vector<8x256xf32>
    %1150 = vector.broadcast %275 : f32 to vector<8x256xf32>
    %1151 = arith.mulf %1150, %1140 : vector<8x256xf32>
    %1152 = arith.addf %1138, %1151 : vector<8x256xf32>
    %c241_i32_220 = arith.constant 241 : i32
    %1153 = tpu.dynamic_rotate %816 by %c241_i32_220 dim 1 : vector<8x256xf32>, i32 -> vector<8x256xf32>
    %1154 = arith.mulf %1153, %304 : vector<8x256xf32>
    %1155 = vector.broadcast %168 : f32 to vector<8x256xf32>
    %1156 = arith.mulf %1155, %1154 : vector<8x256xf32>
    %1157 = arith.addf %1143, %1156 : vector<8x256xf32>
    %1158 = vector.broadcast %204 : f32 to vector<8x256xf32>
    %1159 = arith.mulf %1158, %1154 : vector<8x256xf32>
    %1160 = arith.addf %1146, %1159 : vector<8x256xf32>
    %1161 = vector.broadcast %240 : f32 to vector<8x256xf32>
    %1162 = arith.mulf %1161, %1154 : vector<8x256xf32>
    %1163 = arith.addf %1149, %1162 : vector<8x256xf32>
    %1164 = vector.broadcast %276 : f32 to vector<8x256xf32>
    %1165 = arith.mulf %1164, %1154 : vector<8x256xf32>
    %1166 = arith.addf %1152, %1165 : vector<8x256xf32>
    %c240_i32_221 = arith.constant 240 : i32
    %1167 = tpu.dynamic_rotate %816 by %c240_i32_221 dim 1 : vector<8x256xf32>, i32 -> vector<8x256xf32>
    %1168 = arith.mulf %1167, %305 : vector<8x256xf32>
    %1169 = vector.broadcast %169 : f32 to vector<8x256xf32>
    %1170 = arith.mulf %1169, %1168 : vector<8x256xf32>
    %1171 = arith.addf %1157, %1170 : vector<8x256xf32>
    %1172 = vector.broadcast %205 : f32 to vector<8x256xf32>
    %1173 = arith.mulf %1172, %1168 : vector<8x256xf32>
    %1174 = arith.addf %1160, %1173 : vector<8x256xf32>
    %1175 = vector.broadcast %241 : f32 to vector<8x256xf32>
    %1176 = arith.mulf %1175, %1168 : vector<8x256xf32>
    %1177 = arith.addf %1163, %1176 : vector<8x256xf32>
    %1178 = vector.broadcast %277 : f32 to vector<8x256xf32>
    %1179 = arith.mulf %1178, %1168 : vector<8x256xf32>
    %1180 = arith.addf %1166, %1179 : vector<8x256xf32>
    %c239_i32_222 = arith.constant 239 : i32
    %1181 = tpu.dynamic_rotate %816 by %c239_i32_222 dim 1 : vector<8x256xf32>, i32 -> vector<8x256xf32>
    %1182 = arith.mulf %1181, %306 : vector<8x256xf32>
    %1183 = vector.broadcast %170 : f32 to vector<8x256xf32>
    %1184 = arith.mulf %1183, %1182 : vector<8x256xf32>
    %1185 = arith.addf %1171, %1184 : vector<8x256xf32>
    %1186 = vector.broadcast %206 : f32 to vector<8x256xf32>
    %1187 = arith.mulf %1186, %1182 : vector<8x256xf32>
    %1188 = arith.addf %1174, %1187 : vector<8x256xf32>
    %1189 = vector.broadcast %242 : f32 to vector<8x256xf32>
    %1190 = arith.mulf %1189, %1182 : vector<8x256xf32>
    %1191 = arith.addf %1177, %1190 : vector<8x256xf32>
    %1192 = vector.broadcast %278 : f32 to vector<8x256xf32>
    %1193 = arith.mulf %1192, %1182 : vector<8x256xf32>
    %1194 = arith.addf %1180, %1193 : vector<8x256xf32>
    %c17_i32_223 = arith.constant 17 : i32
    %1195 = tpu.dynamic_rotate %818 by %c17_i32_223 dim 1 : vector<8x256xf32>, i32 -> vector<8x256xf32>
    %1196 = arith.mulf %1195, %299 : vector<8x256xf32>
    %1197 = vector.broadcast %171 : f32 to vector<8x256xf32>
    %1198 = arith.mulf %1197, %1196 : vector<8x256xf32>
    %1199 = arith.addf %1185, %1198 : vector<8x256xf32>
    %1200 = vector.broadcast %207 : f32 to vector<8x256xf32>
    %1201 = arith.mulf %1200, %1196 : vector<8x256xf32>
    %1202 = arith.addf %1188, %1201 : vector<8x256xf32>
    %1203 = vector.broadcast %243 : f32 to vector<8x256xf32>
    %1204 = arith.mulf %1203, %1196 : vector<8x256xf32>
    %1205 = arith.addf %1191, %1204 : vector<8x256xf32>
    %1206 = vector.broadcast %279 : f32 to vector<8x256xf32>
    %1207 = arith.mulf %1206, %1196 : vector<8x256xf32>
    %1208 = arith.addf %1194, %1207 : vector<8x256xf32>
    %c16_i32_224 = arith.constant 16 : i32
    %1209 = tpu.dynamic_rotate %818 by %c16_i32_224 dim 1 : vector<8x256xf32>, i32 -> vector<8x256xf32>
    %1210 = arith.mulf %1209, %300 : vector<8x256xf32>
    %1211 = vector.broadcast %172 : f32 to vector<8x256xf32>
    %1212 = arith.mulf %1211, %1210 : vector<8x256xf32>
    %1213 = arith.addf %1199, %1212 : vector<8x256xf32>
    %1214 = vector.broadcast %208 : f32 to vector<8x256xf32>
    %1215 = arith.mulf %1214, %1210 : vector<8x256xf32>
    %1216 = arith.addf %1202, %1215 : vector<8x256xf32>
    %1217 = vector.broadcast %244 : f32 to vector<8x256xf32>
    %1218 = arith.mulf %1217, %1210 : vector<8x256xf32>
    %1219 = arith.addf %1205, %1218 : vector<8x256xf32>
    %1220 = vector.broadcast %280 : f32 to vector<8x256xf32>
    %1221 = arith.mulf %1220, %1210 : vector<8x256xf32>
    %1222 = arith.addf %1208, %1221 : vector<8x256xf32>
    %c15_i32_225 = arith.constant 15 : i32
    %1223 = tpu.dynamic_rotate %818 by %c15_i32_225 dim 1 : vector<8x256xf32>, i32 -> vector<8x256xf32>
    %1224 = arith.mulf %1223, %301 : vector<8x256xf32>
    %1225 = vector.broadcast %173 : f32 to vector<8x256xf32>
    %1226 = arith.mulf %1225, %1224 : vector<8x256xf32>
    %1227 = arith.addf %1213, %1226 : vector<8x256xf32>
    %1228 = vector.broadcast %209 : f32 to vector<8x256xf32>
    %1229 = arith.mulf %1228, %1224 : vector<8x256xf32>
    %1230 = arith.addf %1216, %1229 : vector<8x256xf32>
    %1231 = vector.broadcast %245 : f32 to vector<8x256xf32>
    %1232 = arith.mulf %1231, %1224 : vector<8x256xf32>
    %1233 = arith.addf %1219, %1232 : vector<8x256xf32>
    %1234 = vector.broadcast %281 : f32 to vector<8x256xf32>
    %1235 = arith.mulf %1234, %1224 : vector<8x256xf32>
    %1236 = arith.addf %1222, %1235 : vector<8x256xf32>
    %c1_i32_226 = arith.constant 1 : i32
    %1237 = tpu.dynamic_rotate %818 by %c1_i32_226 dim 1 : vector<8x256xf32>, i32 -> vector<8x256xf32>
    %1238 = arith.mulf %1237, %302 : vector<8x256xf32>
    %1239 = vector.broadcast %174 : f32 to vector<8x256xf32>
    %1240 = arith.mulf %1239, %1238 : vector<8x256xf32>
    %1241 = arith.addf %1227, %1240 : vector<8x256xf32>
    %1242 = vector.broadcast %210 : f32 to vector<8x256xf32>
    %1243 = arith.mulf %1242, %1238 : vector<8x256xf32>
    %1244 = arith.addf %1230, %1243 : vector<8x256xf32>
    %1245 = vector.broadcast %246 : f32 to vector<8x256xf32>
    %1246 = arith.mulf %1245, %1238 : vector<8x256xf32>
    %1247 = arith.addf %1233, %1246 : vector<8x256xf32>
    %1248 = vector.broadcast %282 : f32 to vector<8x256xf32>
    %1249 = arith.mulf %1248, %1238 : vector<8x256xf32>
    %1250 = arith.addf %1236, %1249 : vector<8x256xf32>
    %1251 = vector.broadcast %175 : f32 to vector<8x256xf32>
    %1252 = arith.mulf %1251, %818 : vector<8x256xf32>
    %1253 = arith.addf %1241, %1252 : vector<8x256xf32>
    %1254 = vector.broadcast %211 : f32 to vector<8x256xf32>
    %1255 = arith.mulf %1254, %818 : vector<8x256xf32>
    %1256 = arith.addf %1244, %1255 : vector<8x256xf32>
    %1257 = vector.broadcast %247 : f32 to vector<8x256xf32>
    %1258 = arith.mulf %1257, %818 : vector<8x256xf32>
    %1259 = arith.addf %1247, %1258 : vector<8x256xf32>
    %1260 = vector.broadcast %283 : f32 to vector<8x256xf32>
    %1261 = arith.mulf %1260, %818 : vector<8x256xf32>
    %1262 = arith.addf %1250, %1261 : vector<8x256xf32>
    %c255_i32_227 = arith.constant 255 : i32
    %1263 = tpu.dynamic_rotate %818 by %c255_i32_227 dim 1 : vector<8x256xf32>, i32 -> vector<8x256xf32>
    %1264 = arith.mulf %1263, %303 : vector<8x256xf32>
    %1265 = vector.broadcast %176 : f32 to vector<8x256xf32>
    %1266 = arith.mulf %1265, %1264 : vector<8x256xf32>
    %1267 = arith.addf %1253, %1266 : vector<8x256xf32>
    %1268 = vector.broadcast %212 : f32 to vector<8x256xf32>
    %1269 = arith.mulf %1268, %1264 : vector<8x256xf32>
    %1270 = arith.addf %1256, %1269 : vector<8x256xf32>
    %1271 = vector.broadcast %248 : f32 to vector<8x256xf32>
    %1272 = arith.mulf %1271, %1264 : vector<8x256xf32>
    %1273 = arith.addf %1259, %1272 : vector<8x256xf32>
    %1274 = vector.broadcast %284 : f32 to vector<8x256xf32>
    %1275 = arith.mulf %1274, %1264 : vector<8x256xf32>
    %1276 = arith.addf %1262, %1275 : vector<8x256xf32>
    %c241_i32_228 = arith.constant 241 : i32
    %1277 = tpu.dynamic_rotate %818 by %c241_i32_228 dim 1 : vector<8x256xf32>, i32 -> vector<8x256xf32>
    %1278 = arith.mulf %1277, %304 : vector<8x256xf32>
    %1279 = vector.broadcast %177 : f32 to vector<8x256xf32>
    %1280 = arith.mulf %1279, %1278 : vector<8x256xf32>
    %1281 = arith.addf %1267, %1280 : vector<8x256xf32>
    %1282 = vector.broadcast %213 : f32 to vector<8x256xf32>
    %1283 = arith.mulf %1282, %1278 : vector<8x256xf32>
    %1284 = arith.addf %1270, %1283 : vector<8x256xf32>
    %1285 = vector.broadcast %249 : f32 to vector<8x256xf32>
    %1286 = arith.mulf %1285, %1278 : vector<8x256xf32>
    %1287 = arith.addf %1273, %1286 : vector<8x256xf32>
    %1288 = vector.broadcast %285 : f32 to vector<8x256xf32>
    %1289 = arith.mulf %1288, %1278 : vector<8x256xf32>
    %1290 = arith.addf %1276, %1289 : vector<8x256xf32>
    %c240_i32_229 = arith.constant 240 : i32
    %1291 = tpu.dynamic_rotate %818 by %c240_i32_229 dim 1 : vector<8x256xf32>, i32 -> vector<8x256xf32>
    %1292 = arith.mulf %1291, %305 : vector<8x256xf32>
    %1293 = vector.broadcast %178 : f32 to vector<8x256xf32>
    %1294 = arith.mulf %1293, %1292 : vector<8x256xf32>
    %1295 = arith.addf %1281, %1294 : vector<8x256xf32>
    %1296 = vector.broadcast %214 : f32 to vector<8x256xf32>
    %1297 = arith.mulf %1296, %1292 : vector<8x256xf32>
    %1298 = arith.addf %1284, %1297 : vector<8x256xf32>
    %1299 = vector.broadcast %250 : f32 to vector<8x256xf32>
    %1300 = arith.mulf %1299, %1292 : vector<8x256xf32>
    %1301 = arith.addf %1287, %1300 : vector<8x256xf32>
    %1302 = vector.broadcast %286 : f32 to vector<8x256xf32>
    %1303 = arith.mulf %1302, %1292 : vector<8x256xf32>
    %1304 = arith.addf %1290, %1303 : vector<8x256xf32>
    %c239_i32_230 = arith.constant 239 : i32
    %1305 = tpu.dynamic_rotate %818 by %c239_i32_230 dim 1 : vector<8x256xf32>, i32 -> vector<8x256xf32>
    %1306 = arith.mulf %1305, %306 : vector<8x256xf32>
    %1307 = vector.broadcast %179 : f32 to vector<8x256xf32>
    %1308 = arith.mulf %1307, %1306 : vector<8x256xf32>
    %1309 = arith.addf %1295, %1308 : vector<8x256xf32>
    %1310 = vector.broadcast %215 : f32 to vector<8x256xf32>
    %1311 = arith.mulf %1310, %1306 : vector<8x256xf32>
    %1312 = arith.addf %1298, %1311 : vector<8x256xf32>
    %1313 = vector.broadcast %251 : f32 to vector<8x256xf32>
    %1314 = arith.mulf %1313, %1306 : vector<8x256xf32>
    %1315 = arith.addf %1301, %1314 : vector<8x256xf32>
    %1316 = vector.broadcast %287 : f32 to vector<8x256xf32>
    %1317 = arith.mulf %1316, %1306 : vector<8x256xf32>
    %1318 = arith.addf %1304, %1317 : vector<8x256xf32>
    %cst_231 = arith.constant dense<0.000000e+00> : vector<8xf32>
    %1319 = vector.multi_reduction <add>, %1309, %cst_231 [1] : vector<8x256xf32> to vector<8xf32>
    %1320 = vector.shape_cast %1319 : vector<8xf32> to vector<8x1xf32>
    %cst_232 = arith.constant 3.906250e-03 : f32
    %1321 = vector.broadcast %cst_232 : f32 to vector<8x1xf32>
    %1322 = arith.mulf %1320, %1321 : vector<8x1xf32>
    %cst_233 = arith.constant dense<0.000000e+00> : vector<8xf32>
    %1323 = vector.multi_reduction <add>, %1312, %cst_233 [1] : vector<8x256xf32> to vector<8xf32>
    %1324 = vector.shape_cast %1323 : vector<8xf32> to vector<8x1xf32>
    %cst_234 = arith.constant 3.906250e-03 : f32
    %1325 = vector.broadcast %cst_234 : f32 to vector<8x1xf32>
    %1326 = arith.mulf %1324, %1325 : vector<8x1xf32>
    %cst_235 = arith.constant dense<0.000000e+00> : vector<8xf32>
    %1327 = vector.multi_reduction <add>, %1315, %cst_235 [1] : vector<8x256xf32> to vector<8xf32>
    %1328 = vector.shape_cast %1327 : vector<8xf32> to vector<8x1xf32>
    %cst_236 = arith.constant 3.906250e-03 : f32
    %1329 = vector.broadcast %cst_236 : f32 to vector<8x1xf32>
    %1330 = arith.mulf %1328, %1329 : vector<8x1xf32>
    %cst_237 = arith.constant dense<0.000000e+00> : vector<8xf32>
    %1331 = vector.multi_reduction <add>, %1318, %cst_237 [1] : vector<8x256xf32> to vector<8xf32>
    %1332 = vector.shape_cast %1331 : vector<8xf32> to vector<8x1xf32>
    %cst_238 = arith.constant 3.906250e-03 : f32
    %1333 = vector.broadcast %cst_238 : f32 to vector<8x1xf32>
    %1334 = arith.mulf %1332, %1333 : vector<8x1xf32>
    %1335 = vector.broadcast %297 : f32 to vector<8x1xf32>
    %1336 = arith.mulf %1335, %1322 : vector<8x1xf32>
    %1337 = vector.broadcast %298 : f32 to vector<8x1xf32>
    %1338 = arith.mulf %1337, %1326 : vector<8x1xf32>
    %1339 = arith.addf %1336, %1338 : vector<8x1xf32>
    %1340 = arith.negf %1339 : vector<8x1xf32>
    %1341 = math.exp %1340 : vector<8x1xf32>
    %cst_239 = arith.constant 1.000000e+00 : f32
    %1342 = vector.broadcast %cst_239 : f32 to vector<8x1xf32>
    %1343 = arith.addf %1342, %1341 : vector<8x1xf32>
    %1344 = arith.divf %1342, %1343 : vector<8x1xf32>
    %c0_240 = arith.constant 0 : index
    %c0_241 = arith.constant 0 : index
    %1345 = vector.load %arg1[%c0_240, %c0_241] : memref<8x1024xf32, #tpu.memory_space<vmem>>, vector<8x256xf32>
    %1346 = vector.broadcast %1344 : vector<8x1xf32> to vector<8x256xf32>
    %1347 = arith.mulf %1309, %1346 : vector<8x256xf32>
    %1348 = arith.addf %1347, %1345 : vector<8x256xf32>
    %cst_242 = arith.constant 0.000000e+00 : f32
    %1349 = vector.broadcast %cst_242 : f32 to vector<8x256xf32>
    %1350 = arith.maximumf %1348, %1349 : vector<8x256xf32>
    %c0_243 = arith.constant 0 : index
    %c0_244 = arith.constant 0 : index
    %1351 = vector.load %arg8[%c0_243, %c0_244] : memref<8x1024xf32, #tpu.memory_space<vmem>>, vector<8x256xf32>
    tpu.vector_store %arg8[%c0_243, %c0_244], %1350 {strides = array<i32>} : memref<8x1024xf32, #tpu.memory_space<vmem>>, vector<8x256xf32>,
    %1352 = vector.broadcast %297 : f32 to vector<8x1xf32>
    %1353 = arith.mulf %1352, %1326 : vector<8x1xf32>
    %1354 = vector.broadcast %296 : f32 to vector<8x1xf32>
    %1355 = arith.mulf %1354, %1322 : vector<8x1xf32>
    %1356 = arith.addf %1353, %1355 : vector<8x1xf32>
    %1357 = vector.broadcast %298 : f32 to vector<8x1xf32>
    %1358 = arith.mulf %1357, %1330 : vector<8x1xf32>
    %1359 = arith.addf %1356, %1358 : vector<8x1xf32>
    %1360 = arith.negf %1359 : vector<8x1xf32>
    %1361 = math.exp %1360 : vector<8x1xf32>
    %cst_245 = arith.constant 1.000000e+00 : f32
    %1362 = vector.broadcast %cst_245 : f32 to vector<8x1xf32>
    %1363 = arith.addf %1362, %1361 : vector<8x1xf32>
    %1364 = arith.divf %1362, %1363 : vector<8x1xf32>
    %c0_246 = arith.constant 0 : index
    %c256_247 = arith.constant 256 : index
    %1365 = vector.load %arg1[%c0_246, %c256_247] : memref<8x1024xf32, #tpu.memory_space<vmem>>, vector<8x256xf32>
    %1366 = vector.broadcast %1364 : vector<8x1xf32> to vector<8x256xf32>
    %1367 = arith.mulf %1312, %1366 : vector<8x256xf32>
    %1368 = arith.addf %1367, %1365 : vector<8x256xf32>
    %cst_248 = arith.constant 0.000000e+00 : f32
    %1369 = vector.broadcast %cst_248 : f32 to vector<8x256xf32>
    %1370 = arith.maximumf %1368, %1369 : vector<8x256xf32>
    %c0_249 = arith.constant 0 : index
    %c256_250 = arith.constant 256 : index
    %1371 = vector.load %arg8[%c0_249, %c256_250] : memref<8x1024xf32, #tpu.memory_space<vmem>>, vector<8x256xf32>
    tpu.vector_store %arg8[%c0_249, %c256_250], %1370 {strides = array<i32>} : memref<8x1024xf32, #tpu.memory_space<vmem>>, vector<8x256xf32>,
    %1372 = vector.broadcast %297 : f32 to vector<8x1xf32>
    %1373 = arith.mulf %1372, %1330 : vector<8x1xf32>
    %1374 = vector.broadcast %296 : f32 to vector<8x1xf32>
    %1375 = arith.mulf %1374, %1326 : vector<8x1xf32>
    %1376 = arith.addf %1373, %1375 : vector<8x1xf32>
    %1377 = vector.broadcast %298 : f32 to vector<8x1xf32>
    %1378 = arith.mulf %1377, %1334 : vector<8x1xf32>
    %1379 = arith.addf %1376, %1378 : vector<8x1xf32>
    %1380 = arith.negf %1379 : vector<8x1xf32>
    %1381 = math.exp %1380 : vector<8x1xf32>
    %cst_251 = arith.constant 1.000000e+00 : f32
    %1382 = vector.broadcast %cst_251 : f32 to vector<8x1xf32>
    %1383 = arith.addf %1382, %1381 : vector<8x1xf32>
    %1384 = arith.divf %1382, %1383 : vector<8x1xf32>
    %c0_252 = arith.constant 0 : index
    %c512_253 = arith.constant 512 : index
    %1385 = vector.load %arg1[%c0_252, %c512_253] : memref<8x1024xf32, #tpu.memory_space<vmem>>, vector<8x256xf32>
    %1386 = vector.broadcast %1384 : vector<8x1xf32> to vector<8x256xf32>
    %1387 = arith.mulf %1315, %1386 : vector<8x256xf32>
    %1388 = arith.addf %1387, %1385 : vector<8x256xf32>
    %cst_254 = arith.constant 0.000000e+00 : f32
    %1389 = vector.broadcast %cst_254 : f32 to vector<8x256xf32>
    %1390 = arith.maximumf %1388, %1389 : vector<8x256xf32>
    %c0_255 = arith.constant 0 : index
    %c512_256 = arith.constant 512 : index
    %1391 = vector.load %arg8[%c0_255, %c512_256] : memref<8x1024xf32, #tpu.memory_space<vmem>>, vector<8x256xf32>
    tpu.vector_store %arg8[%c0_255, %c512_256], %1390 {strides = array<i32>} : memref<8x1024xf32, #tpu.memory_space<vmem>>, vector<8x256xf32>,
    %1392 = vector.broadcast %297 : f32 to vector<8x1xf32>
    %1393 = arith.mulf %1392, %1334 : vector<8x1xf32>
    %1394 = vector.broadcast %296 : f32 to vector<8x1xf32>
    %1395 = arith.mulf %1394, %1330 : vector<8x1xf32>
    %1396 = arith.addf %1393, %1395 : vector<8x1xf32>
    %1397 = arith.negf %1396 : vector<8x1xf32>
    %1398 = math.exp %1397 : vector<8x1xf32>
    %cst_257 = arith.constant 1.000000e+00 : f32
    %1399 = vector.broadcast %cst_257 : f32 to vector<8x1xf32>
    %1400 = arith.addf %1399, %1398 : vector<8x1xf32>
    %1401 = arith.divf %1399, %1400 : vector<8x1xf32>
    %c0_258 = arith.constant 0 : index
    %c768_259 = arith.constant 768 : index
    %1402 = vector.load %arg1[%c0_258, %c768_259] : memref<8x1024xf32, #tpu.memory_space<vmem>>, vector<8x256xf32>
    %1403 = vector.broadcast %1401 : vector<8x1xf32> to vector<8x256xf32>
    %1404 = arith.mulf %1318, %1403 : vector<8x256xf32>
    %1405 = arith.addf %1404, %1402 : vector<8x256xf32>
    %cst_260 = arith.constant 0.000000e+00 : f32
    %1406 = vector.broadcast %cst_260 : f32 to vector<8x256xf32>
    %1407 = arith.maximumf %1405, %1406 : vector<8x256xf32>
    %c0_261 = arith.constant 0 : index
    %c768_262 = arith.constant 768 : index
    %1408 = vector.load %arg8[%c0_261, %c768_262] : memref<8x1024xf32, #tpu.memory_space<vmem>>, vector<8x256xf32>
    tpu.vector_store %arg8[%c0_261, %c768_262], %1407 {strides = array<i32>} : memref<8x1024xf32, #tpu.memory_space<vmem>>, vector<8x256xf32>,
    return
  }
  func.func @transform_0(%arg0: i32) -> (i32, i32) {
    %c0_i32 = arith.constant 0 : i32
    %c0_i32_0 = arith.constant 0 : i32
    return %arg0, %c0_i32 : i32, i32
  }
  func.func @transform_1(%arg0: i32) -> (i32, i32) {
    %c0_i32 = arith.constant 0 : i32
    %c0_i32_0 = arith.constant 0 : i32
    %c0_i32_1 = arith.constant 0 : i32
    return %c0_i32, %c0_i32_0 : i32, i32
  }
  func.func @transform_2(%arg0: i32) -> i32 {
    %c0_i32 = arith.constant 0 : i32
    %c0_i32_0 = arith.constant 0 : i32
    return %c0_i32 : i32
  }
  func.func @transform_3(%arg0: i32) -> i32 {
    %c0_i32 = arith.constant 0 : i32
    %c0_i32_0 = arith.constant 0 : i32
    return %c0_i32 : i32
  }
  func.func @transform_4(%arg0: i32) -> i32 {
    %c0_i32 = arith.constant 0 : i32
    %c0_i32_0 = arith.constant 0 : i32
    return %c0_i32 : i32
  }
  func.func @transform_5(%arg0: i32) -> i32 {
    %c0_i32 = arith.constant 0 : i32
    %c0_i32_0 = arith.constant 0 : i32
    return %c0_i32 : i32
  }
  func.func @transform_6(%arg0: i32) -> i32 {
    %c0_i32 = arith.constant 0 : i32
    %c0_i32_0 = arith.constant 0 : i32
    return %c0_i32 : i32
  }
  func.func @transform_7(%arg0: i32) -> (i32, i32) {
    %c0_i32 = arith.constant 0 : i32
    %c0_i32_0 = arith.constant 0 : i32
    return %arg0, %c0_i32 : i32, i32
  }
}

</mosaic_0001>

<llo_original>
// kernel: tpu_custom_call.1
$region0: #{tpu_custom_call.1}
  #allocation0 [shape = 'u32[]', space=smem, size = 0x4, offset = 0x4, fixed_abs, tag = 'smem constant byte address 0x4 - core index']
  #allocation1 [shape = 'u32[144,128]{1,0:T(1,128)}', space=vmem, size = 0x12000, scoped, tag = 'internal scratch']
  %s0 = inlined_call_operand.hbm [shape: f32[8,1024], index: 0, kind: input, shape index: {}]
  %s1 = inlined_call_operand.hbm [shape: f32[8,2304], index: 1, kind: input, shape index: {}]
  %s2 = inlined_call_operand.vmem [shape: f32[144], index: 2, kind: input, shape index: {}]
  %s3 = inlined_call_operand.vmem [shape: f32[4], index: 3, kind: input, shape index: {}]
  %s4 = inlined_call_operand.vmem [shape: f32[144], index: 4, kind: input, shape index: {}]
  %s5 = inlined_call_operand.vmem [shape: f32[4], index: 5, kind: input, shape index: {}]
  %s6 = inlined_call_operand.vmem [shape: f32[3], index: 6, kind: input, shape index: {}]
  %s7 = inlined_call_operand.hbm [shape: f32[8,1024], index: 7, kind: output, shape index: {}]
  %s8 = sld [smem:[#allocation0]]
  $region66: #{tpu_custom_call.1} parent=0
    _
  %s10 = ssub.s32 1, %s8
  %s11 = scalar_select 0, %s10, %s8
  $region1: #{tpu_custom_call.1} parent=0
    #allocation2 [shape = 'u8[32768]{0}', space=vmem, size = 0x8000, scoped, tag = 'input window, operand 0, single buffered']
    #allocation3 [shape = 's32[1]{0}', space=sflag, size = 0x4, scoped, tag = 'scoped memory for tpu_custom_call.1']
    #allocation4 [shape = 's32[1]{0}', space=sflag, size = 0x4, scoped, tag = 'scoped memory for tpu_custom_call.1']
    #allocation5 [shape = 's32[1]{0}', space=sflag, size = 0x4, scoped, tag = 'scoped memory for tpu_custom_call.1']
    #allocation6 [shape = 'u8[73728]{0}', space=vmem, size = 0x12000, scoped, tag = 'input window, operand 1, single buffered']
    #allocation7 [shape = 's32[1]{0}', space=sflag, size = 0x4, scoped, tag = 'scoped memory for tpu_custom_call.1']
    #allocation8 [shape = 'u8[1024]{0}', space=smem, size = 0x400, scoped, tag = 'input window, operand 2, single buffered']
    #allocation9 [shape = 'u8[512]{0}', space=smem, size = 0x200, scoped, tag = 'input window, operand 3, single buffered']
    #allocation10 [shape = 's32[1]{0}', space=sflag, size = 0x4, scoped, tag = 'scoped memory for tpu_custom_call.1']
    #allocation11 [shape = 'u8[1024]{0}', space=smem, size = 0x400, scoped, tag = 'input window, operand 4, single buffered']
    #allocation12 [shape = 'u8[512]{0}', space=smem, size = 0x200, scoped, tag = 'input window, operand 5, single buffered']
    #allocation13 [shape = 's32[1]{0}', space=sflag, size = 0x4, scoped, tag = 'scoped memory for tpu_custom_call.1']
    #allocation14 [shape = 'u8[512]{0}', space=smem, size = 0x200, scoped, tag = 'input window, operand 6, single buffered']
    #allocation15 [shape = 'u8[32768]{0}', space=vmem, size = 0x8000, scoped, tag = 'output window, operand 0, single buffered']
    %12 = vsyncpa [#allocation3], 0
    %13 = vsyncpa [#allocation7], 0
    %14 = vsyncpa [#allocation5], 0
    %15 = vsyncpa [#allocation10], 0
    %16 = vsyncpa [#allocation13], 0
    %17 = vsyncpa [#allocation4], 0
    // Predicated region
    $region2: #{tpu_custom_call.1} parent=1 // pred_check
      _
    $region3: #{tpu_custom_call.1} parent=1 // pred_check_branch
      %19 = sbr.rel (0) target = $region5
    $region4: #{tpu_custom_call.1} parent=1 // pred_region
      %s21 = ssub.s32 1024, 1024
      %22 = vsyncadd [#allocation3], %s21
      %s24 = sshll.u32 [#allocation2], 4
      %s25 = int_to_ptr.vmem [resolvable:$true] %s24
      %27 = dma.hbm_to_vmem [thread:$0]  %s0, 1024, %s25, [#allocation3]
    $region5: #{tpu_custom_call.1} parent=1 // pred_fallthru
      _
    // Predicated region
    $region6: #{tpu_custom_call.1} parent=1 // pred_check
      _
    $region7: #{tpu_custom_call.1} parent=1 // pred_check_branch
      %29 = sbr.rel (0) target = $region9
    $region8: #{tpu_custom_call.1} parent=1 // pred_region
      %s31 = ssub.s32 2304, 2304
      %32 = vsyncadd [#allocation7], %s31
      %s34 = sshll.u32 [#allocation6], 4
      %s35 = int_to_ptr.vmem [resolvable:$true] %s34
      %37 = dma.hbm_to_vmem [thread:$0]  %s1, 2304, %s35, [#allocation7]
    $region9: #{tpu_custom_call.1} parent=1 // pred_fallthru
      _
    // Predicated region
    $region10: #{tpu_custom_call.1} parent=1 // pred_check
      _
    $region11: #{tpu_custom_call.1} parent=1 // pred_check_branch
      %39 = sbr.rel (0) target = $region13
    $region12: #{tpu_custom_call.1} parent=1 // pred_region
      %s41 = ssub.s32 32, 32
      %42 = vsyncadd [#allocation5], %s41
      %s44 = sshll.u32 %s2, 4
      %s45 = int_to_ptr.vmem [resolvable:$true] %s44
      %47 = dma.vmem_to_smem %s45, 32, [#allocation8], [#allocation5]
    $region13: #{tpu_custom_call.1} parent=1 // pred_fallthru
      _
    // Predicated region
    $region14: #{tpu_custom_call.1} parent=1 // pred_check
      _
    $region15: #{tpu_custom_call.1} parent=1 // pred_check_branch
      %49 = sbr.rel (0) target = $region17
    $region16: #{tpu_custom_call.1} parent=1 // pred_region
      %s51 = ssub.s32 16, 16
      %52 = vsyncadd [#allocation10], %s51
      %s54 = sshll.u32 %s3, 4
      %s55 = int_to_ptr.vmem [resolvable:$true] %s54
      %57 = dma.vmem_to_smem %s55, 16, [#allocation9], [#allocation10]
    $region17: #{tpu_custom_call.1} parent=1 // pred_fallthru
      _
    // Predicated region
    $region18: #{tpu_custom_call.1} parent=1 // pred_check
      _
    $region19: #{tpu_custom_call.1} parent=1 // pred_check_branch
      %59 = sbr.rel (0) target = $region21
    $region20: #{tpu_custom_call.1} parent=1 // pred_region
      %s61 = ssub.s32 32, 32
      %62 = vsyncadd [#allocation10], %s61
      %s64 = sshll.u32 %s4, 4
      %s65 = int_to_ptr.vmem [resolvable:$true] %s64
      %67 = dma.vmem_to_smem %s65, 32, [#allocation11], [#allocation10]
    $region21: #{tpu_custom_call.1} parent=1 // pred_fallthru
      _
    // Predicated region
    $region22: #{tpu_custom_call.1} parent=1 // pred_check
      _
    $region23: #{tpu_custom_call.1} parent=1 // pred_check_branch
      %69 = sbr.rel (0) target = $region25
    $region24: #{tpu_custom_call.1} parent=1 // pred_region
      %s71 = ssub.s32 16, 16
      %72 = vsyncadd [#allocation13], %s71
      %s74 = sshll.u32 %s5, 4
      %s75 = int_to_ptr.vmem [resolvable:$true] %s74
      %77 = dma.vmem_to_smem %s75, 16, [#allocation12], [#allocation13]
    $region25: #{tpu_custom_call.1} parent=1 // pred_fallthru
      _
    // Predicated region
    $region26: #{tpu_custom_call.1} parent=1 // pred_check
      _
    $region27: #{tpu_custom_call.1} parent=1 // pred_check_branch
      %79 = sbr.rel (0) target = $region29
    $region28: #{tpu_custom_call.1} parent=1 // pred_region
      %s81 = ssub.s32 16, 16
      %82 = vsyncadd [#allocation13], %s81
      %s84 = sshll.u32 %s6, 4
      %s85 = int_to_ptr.vmem [resolvable:$true] %s84
      %87 = dma.vmem_to_smem %s85, 16, [#allocation14], [#allocation13]
    $region29: #{tpu_custom_call.1} parent=1 // pred_fallthru
      _
    // Predicated region
    $region30: #{tpu_custom_call.1} parent=1 // pred_check
      _
    $region31: #{tpu_custom_call.1} parent=1 // pred_check_branch
      %89 = sbr.rel (0) target = $region33
    $region32: #{tpu_custom_call.1} parent=1 // pred_region
      %90 = dma.done [#allocation3], 1024
    $region33: #{tpu_custom_call.1} parent=1 // pred_fallthru
      _
    // Predicated region
    $region34: #{tpu_custom_call.1} parent=1 // pred_check
      _
    $region35: #{tpu_custom_call.1} parent=1 // pred_check_branch
      %92 = sbr.rel (0) target = $region37
    $region36: #{tpu_custom_call.1} parent=1 // pred_region
      %93 = dma.done [#allocation7], 2304
    $region37: #{tpu_custom_call.1} parent=1 // pred_fallthru
      _
    // Predicated region
    $region38: #{tpu_custom_call.1} parent=1 // pred_check
      _
    $region39: #{tpu_custom_call.1} parent=1 // pred_check_branch
      %95 = sbr.rel (0) target = $region41
    $region40: #{tpu_custom_call.1} parent=1 // pred_region
      %96 = dma.done [#allocation5], 32
    $region41: #{tpu_custom_call.1} parent=1 // pred_fallthru
      _
    // Predicated region
    $region42: #{tpu_custom_call.1} parent=1 // pred_check
      _
    $region43: #{tpu_custom_call.1} parent=1 // pred_check_branch
      %98 = sbr.rel (0) target = $region45
    $region44: #{tpu_custom_call.1} parent=1 // pred_region
      %99 = dma.done [#allocation10], 16
    $region45: #{tpu_custom_call.1} parent=1 // pred_fallthru
      _
    // Predicated region
    $region46: #{tpu_custom_call.1} parent=1 // pred_check
      _
    $region47: #{tpu_custom_call.1} parent=1 // pred_check_branch
      %101 = sbr.rel (0) target = $region49
    $region48: #{tpu_custom_call.1} parent=1 // pred_region
      %102 = dma.done [#allocation10], 32
    $region49: #{tpu_custom_call.1} parent=1 // pred_fallthru
      _
    // Predicated region
    $region50: #{tpu_custom_call.1} parent=1 // pred_check
      _
    $region51: #{tpu_custom_call.1} parent=1 // pred_check_branch
      %104 = sbr.rel (0) target = $region53
    $region52: #{tpu_custom_call.1} parent=1 // pred_region
      %105 = dma.done [#allocation13], 16
    $region53: #{tpu_custom_call.1} parent=1 // pred_fallthru
      _
    // Predicated region
    $region54: #{tpu_custom_call.1} parent=1 // pred_check
      _
    $region55: #{tpu_custom_call.1} parent=1 // pred_check_branch
      %107 = sbr.rel (0) target = $region57
    $region56: #{tpu_custom_call.1} parent=1 // pred_region
      %108 = dma.done [#allocation13], 16
    $region57: #{tpu_custom_call.1} parent=1 // pred_fallthru
      _
    %109 = sfence
    %s110 = sld [smem:[#allocation8]]
    %s111 = sld [smem:[#allocation8 + $0x1]]
    %s112 = sld [smem:[#allocation8 + $0x2]]
    %s113 = sld [smem:[#allocation8 + $0x3]]
    %s114 = sld [smem:[#allocation8 + $0x4]]
    %s115 = sld [smem:[#allocation8 + $0x5]]
    %s116 = sld [smem:[#allocation8 + $0x6]]
    %s117 = sld [smem:[#allocation8 + $0x7]]
    %s118 = sld [smem:[#allocation8 + $0x8]]
    %s119 = sld [smem:[#allocation8 + $0x9]]
    %s120 = sld [smem:[#allocation8 + $0xa]]
    %s121 = sld [smem:[#allocation8 + $0xb]]
    %s122 = sld [smem:[#allocation8 + $0xc]]
    %s123 = sld [smem:[#allocation8 + $0xd]]
    %s124 = sld [smem:[#allocation8 + $0xe]]
    %s125 = sld [smem:[#allocation8 + $0xf]]
    %s126 = sld [smem:[#allocation8 + $0x10]]
    %s127 = sld [smem:[#allocation8 + $0x11]]
    %s128 = sld [smem:[#allocation8 + $0x12]]
    %s129 = sld [smem:[#allocation8 + $0x13]]
    %s130 = sld [smem:[#allocation8 + $0x14]]
    %s131 = sld [smem:[#allocation8 + $0x15]]
    %s132 = sld [smem:[#allocation8 + $0x16]]
    %s133 = sld [smem:[#allocation8 + $0x17]]
    %s134 = sld [smem:[#allocation8 + $0x18]]
    %s135 = sld [smem:[#allocation8 + $0x19]]
    %s136 = sld [smem:[#allocation8 + $0x1a]]
    %s137 = sld [smem:[#allocation8 + $0x1b]]
    %s138 = sld [smem:[#allocation8 + $0x1c]]
    %s139 = sld [smem:[#allocation8 + $0x1d]]
    %s140 = sld [smem:[#allocation8 + $0x1e]]
    %s141 = sld [smem:[#allocation8 + $0x1f]]
    %s142 = sld [smem:[#allocation8 + $0x20]]
    %s143 = sld [smem:[#allocation8 + $0x21]]
    %s144 = sld [smem:[#allocation8 + $0x22]]
    %s145 = sld [smem:[#allocation8 + $0x23]]
    %s146 = sld [smem:[#allocation8 + $0x24]]
    %s147 = sld [smem:[#allocation8 + $0x25]]
    %s148 = sld [smem:[#allocation8 + $0x26]]
    %s149 = sld [smem:[#allocation8 + $0x27]]
    %s150 = sld [smem:[#allocation8 + $0x28]]
    %s151 = sld [smem:[#allocation8 + $0x29]]
    %s152 = sld [smem:[#allocation8 + $0x2a]]
    %s153 = sld [smem:[#allocation8 + $0x2b]]
    %s154 = sld [smem:[#allocation8 + $0x2c]]
    %s155 = sld [smem:[#allocation8 + $0x2d]]
    %s156 = sld [smem:[#allocation8 + $0x2e]]
    %s157 = sld [smem:[#allocation8 + $0x2f]]
    %s158 = sld [smem:[#allocation8 + $0x30]]
    %s159 = sld [smem:[#allocation8 + $0x31]]
    %s160 = sld [smem:[#allocation8 + $0x32]]
    %s161 = sld [smem:[#allocation8 + $0x33]]
    %s162 = sld [smem:[#allocation8 + $0x34]]
    %s163 = sld [smem:[#allocation8 + $0x35]]
    %s164 = sld [smem:[#allocation8 + $0x36]]
    %s165 = sld [smem:[#allocation8 + $0x37]]
    %s166 = sld [smem:[#allocation8 + $0x38]]
    %s167 = sld [smem:[#allocation8 + $0x39]]
    %s168 = sld [smem:[#allocation8 + $0x3a]]
    %s169 = sld [smem:[#allocation8 + $0x3b]]
    %s170 = sld [smem:[#allocation8 + $0x3c]]
    %s171 = sld [smem:[#allocation8 + $0x3d]]
    %s172 = sld [smem:[#allocation8 + $0x3e]]
    %s173 = sld [smem:[#allocation8 + $0x3f]]
    %s174 = sld [smem:[#allocation8 + $0x40]]
    %s175 = sld [smem:[#allocation8 + $0x41]]
    %s176 = sld [smem:[#allocation8 + $0x42]]
    %s177 = sld [smem:[#allocation8 + $0x43]]
    %s178 = sld [smem:[#allocation8 + $0x44]]
    %s179 = sld [smem:[#allocation8 + $0x45]]
    %s180 = sld [smem:[#allocation8 + $0x46]]
    %s181 = sld [smem:[#allocation8 + $0x47]]
    %s182 = sld [smem:[#allocation8 + $0x48]]
    %s183 = sld [smem:[#allocation8 + $0x49]]
    %s184 = sld [smem:[#allocation8 + $0x4a]]
    %s185 = sld [smem:[#allocation8 + $0x4b]]
    %s186 = sld [smem:[#allocation8 + $0x4c]]
    %s187 = sld [smem:[#allocation8 + $0x4d]]
    %s188 = sld [smem:[#allocation8 + $0x4e]]
    %s189 = sld [smem:[#allocation8 + $0x4f]]
    %s190 = sld [smem:[#allocation8 + $0x50]]
    %s191 = sld [smem:[#allocation8 + $0x51]]
    %s192 = sld [smem:[#allocation8 + $0x52]]
    %s193 = sld [smem:[#allocation8 + $0x53]]
    %s194 = sld [smem:[#allocation8 + $0x54]]
    %s195 = sld [smem:[#allocation8 + $0x55]]
    %s196 = sld [smem:[#allocation8 + $0x56]]
    %s197 = sld [smem:[#allocation8 + $0x57]]
    %s198 = sld [smem:[#allocation8 + $0x58]]
    %s199 = sld [smem:[#allocation8 + $0x59]]
    %s200 = sld [smem:[#allocation8 + $0x5a]]
    %s201 = sld [smem:[#allocation8 + $0x5b]]
    %s202 = sld [smem:[#allocation8 + $0x5c]]
    %s203 = sld [smem:[#allocation8 + $0x5d]]
    %s204 = sld [smem:[#allocation8 + $0x5e]]
    %s205 = sld [smem:[#allocation8 + $0x5f]]
    %s206 = sld [smem:[#allocation8 + $0x60]]
    %s207 = sld [smem:[#allocation8 + $0x61]]
    %s208 = sld [smem:[#allocation8 + $0x62]]
    %s209 = sld [smem:[#allocation8 + $0x63]]
    %s210 = sld [smem:[#allocation8 + $0x64]]
    %s211 = sld [smem:[#allocation8 + $0x65]]
    %s212 = sld [smem:[#allocation8 + $0x66]]
    %s213 = sld [smem:[#allocation8 + $0x67]]
    %s214 = sld [smem:[#allocation8 + $0x68]]
    %s215 = sld [smem:[#allocation8 + $0x69]]
    %s216 = sld [smem:[#allocation8 + $0x6a]]
    %s217 = sld [smem:[#allocation8 + $0x6b]]
    %s218 = sld [smem:[#allocation8 + $0x6c]]
    %s219 = sld [smem:[#allocation8 + $0x6d]]
    %s220 = sld [smem:[#allocation8 + $0x6e]]
    %s221 = sld [smem:[#allocation8 + $0x6f]]
    %s222 = sld [smem:[#allocation8 + $0x70]]
    %s223 = sld [smem:[#allocation8 + $0x71]]
    %s224 = sld [smem:[#allocation8 + $0x72]]
    %s225 = sld [smem:[#allocation8 + $0x73]]
    %s226 = sld [smem:[#allocation8 + $0x74]]
    %s227 = sld [smem:[#allocation8 + $0x75]]
    %s228 = sld [smem:[#allocation8 + $0x76]]
    %s229 = sld [smem:[#allocation8 + $0x77]]
    %s230 = sld [smem:[#allocation8 + $0x78]]
    %s231 = sld [smem:[#allocation8 + $0x79]]
    %s232 = sld [smem:[#allocation8 + $0x7a]]
    %s233 = sld [smem:[#allocation8 + $0x7b]]
    %s234 = sld [smem:[#allocation8 + $0x7c]]
    %s235 = sld [smem:[#allocation8 + $0x7d]]
    %s236 = sld [smem:[#allocation8 + $0x7e]]
    %s237 = sld [smem:[#allocation8 + $0x7f]]
    %s238 = sld [smem:[#allocation8 + $0x80]]
    %s239 = sld [smem:[#allocation8 + $0x81]]
    %s240 = sld [smem:[#allocation8 + $0x82]]
    %s241 = sld [smem:[#allocation8 + $0x83]]
    %s242 = sld [smem:[#allocation8 + $0x84]]
    %s243 = sld [smem:[#allocation8 + $0x85]]
    %s244 = sld [smem:[#allocation8 + $0x86]]
    %s245 = sld [smem:[#allocation8 + $0x87]]
    %s246 = sld [smem:[#allocation8 + $0x88]]
    %s247 = sld [smem:[#allocation8 + $0x89]]
    %s248 = sld [smem:[#allocation8 + $0x8a]]
    %s249 = sld [smem:[#allocation8 + $0x8b]]
    %s250 = sld [smem:[#allocation8 + $0x8c]]
    %s251 = sld [smem:[#allocation8 + $0x8d]]
    %s252 = sld [smem:[#allocation8 + $0x8e]]
    %s253 = sld [smem:[#allocation8 + $0x8f]]
    %s254 = sld [smem:[#allocation11]]
    %s255 = sld [smem:[#allocation11 + $0x1]]
    %s256 = sld [smem:[#allocation11 + $0x2]]
    %s257 = sld [smem:[#allocation11 + $0x3]]
    %s258 = sld [smem:[#allocation11 + $0x4]]
    %s259 = sld [smem:[#allocation11 + $0x5]]
    %s260 = sld [smem:[#allocation11 + $0x6]]
    %s261 = sld [smem:[#allocation11 + $0x7]]
    %s262 = sld [smem:[#allocation11 + $0x8]]
    %s263 = sld [smem:[#allocation11 + $0x9]]
    %s264 = sld [smem:[#allocation11 + $0xa]]
    %s265 = sld [smem:[#allocation11 + $0xb]]
    %s266 = sld [smem:[#allocation11 + $0xc]]
    %s267 = sld [smem:[#allocation11 + $0xd]]
    %s268 = sld [smem:[#allocation11 + $0xe]]
    %s269 = sld [smem:[#allocation11 + $0xf]]
    %s270 = sld [smem:[#allocation11 + $0x10]]
    %s271 = sld [smem:[#allocation11 + $0x11]]
    %s272 = sld [smem:[#allocation11 + $0x12]]
    %s273 = sld [smem:[#allocation11 + $0x13]]
    %s274 = sld [smem:[#allocation11 + $0x14]]
    %s275 = sld [smem:[#allocation11 + $0x15]]
    %s276 = sld [smem:[#allocation11 + $0x16]]
    %s277 = sld [smem:[#allocation11 + $0x17]]
    %s278 = sld [smem:[#allocation11 + $0x18]]
    %s279 = sld [smem:[#allocation11 + $0x19]]
    %s280 = sld [smem:[#allocation11 + $0x1a]]
    %s281 = sld [smem:[#allocation11 + $0x1b]]
    %s282 = sld [smem:[#allocation11 + $0x1c]]
    %s283 = sld [smem:[#allocation11 + $0x1d]]
    %s284 = sld [smem:[#allocation11 + $0x1e]]
    %s285 = sld [smem:[#allocation11 + $0x1f]]
    %s286 = sld [smem:[#allocation11 + $0x20]]
    %s287 = sld [smem:[#allocation11 + $0x21]]
    %s288 = sld [smem:[#allocation11 + $0x22]]
    %s289 = sld [smem:[#allocation11 + $0x23]]
    %s290 = sld [smem:[#allocation11 + $0x24]]
    %s291 = sld [smem:[#allocation11 + $0x25]]
    %s292 = sld [smem:[#allocation11 + $0x26]]
    %s293 = sld [smem:[#allocation11 + $0x27]]
    %s294 = sld [smem:[#allocation11 + $0x28]]
    %s295 = sld [smem:[#allocation11 + $0x29]]
    %s296 = sld [smem:[#allocation11 + $0x2a]]
    %s297 = sld [smem:[#allocation11 + $0x2b]]
    %s298 = sld [smem:[#allocation11 + $0x2c]]
    %s299 = sld [smem:[#allocation11 + $0x2d]]
    %s300 = sld [smem:[#allocation11 + $0x2e]]
    %s301 = sld [smem:[#allocation11 + $0x2f]]
    %s302 = sld [smem:[#allocation11 + $0x30]]
    %s303 = sld [smem:[#allocation11 + $0x31]]
    %s304 = sld [smem:[#allocation11 + $0x32]]
    %s305 = sld [smem:[#allocation11 + $0x33]]
    %s306 = sld [smem:[#allocation11 + $0x34]]
    %s307 = sld [smem:[#allocation11 + $0x35]]
    %s308 = sld [smem:[#allocation11 + $0x36]]
    %s309 = sld [smem:[#allocation11 + $0x37]]
    %s310 = sld [smem:[#allocation11 + $0x38]]
    %s311 = sld [smem:[#allocation11 + $0x39]]
    %s312 = sld [smem:[#allocation11 + $0x3a]]
    %s313 = sld [smem:[#allocation11 + $0x3b]]
    %s314 = sld [smem:[#allocation11 + $0x3c]]
    %s315 = sld [smem:[#allocation11 + $0x3d]]
    %s316 = sld [smem:[#allocation11 + $0x3e]]
    %s317 = sld [smem:[#allocation11 + $0x3f]]
    %s318 = sld [smem:[#allocation11 + $0x40]]
    %s319 = sld [smem:[#allocation11 + $0x41]]
    %s320 = sld [smem:[#allocation11 + $0x42]]
    %s321 = sld [smem:[#allocation11 + $0x43]]
    %s322 = sld [smem:[#allocation11 + $0x44]]
    %s323 = sld [smem:[#allocation11 + $0x45]]
    %s324 = sld [smem:[#allocation11 + $0x46]]
    %s325 = sld [smem:[#allocation11 + $0x47]]
    %s326 = sld [smem:[#allocation11 + $0x48]]
    %s327 = sld [smem:[#allocation11 + $0x49]]
    %s328 = sld [smem:[#allocation11 + $0x4a]]
    %s329 = sld [smem:[#allocation11 + $0x4b]]
    %s330 = sld [smem:[#allocation11 + $0x4c]]
    %s331 = sld [smem:[#allocation11 + $0x4d]]
    %s332 = sld [smem:[#allocation11 + $0x4e]]
    %s333 = sld [smem:[#allocation11 + $0x4f]]
    %s334 = sld [smem:[#allocation11 + $0x50]]
    %s335 = sld [smem:[#allocation11 + $0x51]]
    %s336 = sld [smem:[#allocation11 + $0x52]]
    %s337 = sld [smem:[#allocation11 + $0x53]]
    %s338 = sld [smem:[#allocation11 + $0x54]]
    %s339 = sld [smem:[#allocation11 + $0x55]]
    %s340 = sld [smem:[#allocation11 + $0x56]]
    %s341 = sld [smem:[#allocation11 + $0x57]]
    %s342 = sld [smem:[#allocation11 + $0x58]]
    %s343 = sld [smem:[#allocation11 + $0x59]]
    %s344 = sld [smem:[#allocation11 + $0x5a]]
    %s345 = sld [smem:[#allocation11 + $0x5b]]
    %s346 = sld [smem:[#allocation11 + $0x5c]]
    %s347 = sld [smem:[#allocation11 + $0x5d]]
    %s348 = sld [smem:[#allocation11 + $0x5e]]
    %s349 = sld [smem:[#allocation11 + $0x5f]]
    %s350 = sld [smem:[#allocation11 + $0x60]]
    %s351 = sld [smem:[#allocation11 + $0x61]]
    %s352 = sld [smem:[#allocation11 + $0x62]]
    %s353 = sld [smem:[#allocation11 + $0x63]]
    %s354 = sld [smem:[#allocation11 + $0x64]]
    %s355 = sld [smem:[#allocation11 + $0x65]]
    %s356 = sld [smem:[#allocation11 + $0x66]]
    %s357 = sld [smem:[#allocation11 + $0x67]]
    %s358 = sld [smem:[#allocation11 + $0x68]]
    %s359 = sld [smem:[#allocation11 + $0x69]]
    %s360 = sld [smem:[#allocation11 + $0x6a]]
    %s361 = sld [smem:[#allocation11 + $0x6b]]
    %s362 = sld [smem:[#allocation11 + $0x6c]]
    %s363 = sld [smem:[#allocation11 + $0x6d]]
    %s364 = sld [smem:[#allocation11 + $0x6e]]
    %s365 = sld [smem:[#allocation11 + $0x6f]]
    %s366 = sld [smem:[#allocation11 + $0x70]]
    %s367 = sld [smem:[#allocation11 + $0x71]]
    %s368 = sld [smem:[#allocation11 + $0x72]]
    %s369 = sld [smem:[#allocation11 + $0x73]]
    %s370 = sld [smem:[#allocation11 + $0x74]]
    %s371 = sld [smem:[#allocation11 + $0x75]]
    %s372 = sld [smem:[#allocation11 + $0x76]]
    %s373 = sld [smem:[#allocation11 + $0x77]]
    %s374 = sld [smem:[#allocation11 + $0x78]]
    %s375 = sld [smem:[#allocation11 + $0x79]]
    %s376 = sld [smem:[#allocation11 + $0x7a]]
    %s377 = sld [smem:[#allocation11 + $0x7b]]
    %s378 = sld [smem:[#allocation11 + $0x7c]]
    %s379 = sld [smem:[#allocation11 + $0x7d]]
    %s380 = sld [smem:[#allocation11 + $0x7e]]
    %s381 = sld [smem:[#allocation11 + $0x7f]]
    %s382 = sld [smem:[#allocation11 + $0x80]]
    %s383 = sld [smem:[#allocation11 + $0x81]]
    %s384 = sld [smem:[#allocation11 + $0x82]]
    %s385 = sld [smem:[#allocation11 + $0x83]]
    %s386 = sld [smem:[#allocation11 + $0x84]]
    %s387 = sld [smem:[#allocation11 + $0x85]]
    %s388 = sld [smem:[#allocation11 + $0x86]]
    %s389 = sld [smem:[#allocation11 + $0x87]]
    %s390 = sld [smem:[#allocation11 + $0x88]]
    %s391 = sld [smem:[#allocation11 + $0x89]]
    %s392 = sld [smem:[#allocation11 + $0x8a]]
    %s393 = sld [smem:[#allocation11 + $0x8b]]
    %s394 = sld [smem:[#allocation11 + $0x8c]]
    %s395 = sld [smem:[#allocation11 + $0x8d]]
    %s396 = sld [smem:[#allocation11 + $0x8e]]
    %s397 = sld [smem:[#allocation11 + $0x8f]]
    %s398 = sld [smem:[#allocation9]]
    %s399 = sld [smem:[#allocation9 + $0x1]]
    %s400 = sld [smem:[#allocation9 + $0x2]]
    %s401 = sld [smem:[#allocation9 + $0x3]]
    %s402 = sld [smem:[#allocation12]]
    %s403 = sld [smem:[#allocation12 + $0x1]]
    %s404 = sld [smem:[#allocation12 + $0x2]]
    %s405 = sld [smem:[#allocation12 + $0x3]]
    %s406 = sld [smem:[#allocation14]]
    %s407 = sld [smem:[#allocation14 + $0x1]]
    %s408 = sld [smem:[#allocation14 + $0x2]]
    %v409 = vld [vmem:[#allocation6] sm:$0xff]
    %v410 = vld [vmem:[#allocation6 + $0x8] sm:$0xff]
    %v411 = vld [vmem:[#allocation6 + $0x10] sm:$0xff]
    %v412 = vld [vmem:[#allocation6 + $0x18] sm:$0xff]
    %v413 = vld [vmem:[#allocation6 + $0x20] sm:$0xff]
    %v414 = vld [vmem:[#allocation6 + $0x28] sm:$0xff]
    %v415 = vld [vmem:[#allocation6 + $0x30] sm:$0xff]
    %v416 = vld [vmem:[#allocation6 + $0x38] sm:$0xff]
    %v417 = vld [vmem:[#allocation6 + $0x50] sm:$0xff]
    %v418 = vld [vmem:[#allocation6 + $0x58] sm:$0xff]
    %v419 = vld [vmem:[#allocation6 + $0x60] sm:$0xff]
    %v420 = vld [vmem:[#allocation6 + $0x68] sm:$0xff]
    %v421 = vld [vmem:[#allocation6 + $0x70] sm:$0xff]
    %v422 = vld [vmem:[#allocation6 + $0x78] sm:$0xff]
    %v423 = vld [vmem:[#allocation6 + $0x80] sm:$0xff]
    %v424 = vld [vmem:[#allocation6 + $0x88] sm:$0xff]
    %v425 = vld [vmem:[#allocation2] sm:$0xff]
    %v426 = vld [vmem:[#allocation2 + $0x8] sm:$0xff]
    %v427 = vld [vmem:[#allocation2 + $0x10] sm:$0xff]
    %v428 = vld [vmem:[#allocation2 + $0x18] sm:$0xff]
    %v429 = vld [vmem:[#allocation2 + $0x20] sm:$0xff]
    %v430 = vld [vmem:[#allocation2 + $0x28] sm:$0xff]
    %v431 = vld [vmem:[#allocation2 + $0x30] sm:$0xff]
    %v432 = vld [vmem:[#allocation2 + $0x38] sm:$0xff]
    %v433 = vstv %s398
    %v434 = vstv %s399
    %v435 = vstv %s400
    %v436 = vstv %s401
    %437 = vrot.lane.b32.xlu0 %v425, 17
    %v438 = vpop.permute.xlu0 %437
    %439 = vrot.lane.b32.xlu0 %v426, 17
    %v440 = vpop.permute.xlu0 %439
    %v441 = vlaneseq
    %v442 = vand.u32 %v441, 127
    %vm443 = vcmp.lt.s32.totalorder %v442, 17
    %v444 = vsel %vm443, %v438, %v440
    %v445 = vsel %vm443, %v440, %v438
    %v446 = vmul.f32 %v445, %v409
    %v447 = vmul.f32 %v444, %v410
    %v448 = vstv %s110
    %v449 = vmul.f32 %v448, %v446
    %v450 = vmul.f32 %v448, %v447
    %v451 = vadd.f32 %v433, %v449
    %v452 = vadd.f32 %v433, %v450
    %v453 = vstv %s146
    %v454 = vmul.f32 %v453, %v446
    %v455 = vmul.f32 %v453, %v447
    %v456 = vadd.f32 %v434, %v454
    %v457 = vadd.f32 %v434, %v455
    %v458 = vstv %s182
    %v459 = vmul.f32 %v458, %v446
    %v460 = vmul.f32 %v458, %v447
    %v461 = vadd.f32 %v435, %v459
    %v462 = vadd.f32 %v435, %v460
    %v463 = vstv %s218
    %v464 = vmul.f32 %v463, %v446
    %v465 = vmul.f32 %v463, %v447
    %v466 = vadd.f32 %v436, %v464
    %v467 = vadd.f32 %v436, %v465
    %468 = vrot.lane.b32.xlu0 %v425, 16
    %v469 = vpop.permute.xlu0 %468
    %470 = vrot.lane.b32.xlu0 %v426, 16
    %v471 = vpop.permute.xlu0 %470
    %vm472 = vcmp.lt.s32.totalorder %v442, 16
    %v473 = vsel %vm472, %v469, %v471
    %v474 = vsel %vm472, %v471, %v469
    %v475 = vmul.f32 %v474, %v411
    %v476 = vmul.f32 %v473, %v412
    %v477 = vstv %s111
    %v478 = vmul.f32 %v477, %v475
    %v479 = vmul.f32 %v477, %v476
    %v480 = vadd.f32 %v451, %v478
    %v481 = vadd.f32 %v452, %v479
    %v482 = vstv %s147
    %v483 = vmul.f32 %v482, %v475
    %v484 = vmul.f32 %v482, %v476
    %v485 = vadd.f32 %v456, %v483
    %v486 = vadd.f32 %v457, %v484
    %v487 = vstv %s183
    %v488 = vmul.f32 %v487, %v475
    %v489 = vmul.f32 %v487, %v476
    %v490 = vadd.f32 %v461, %v488
    %v491 = vadd.f32 %v462, %v489
    %v492 = vstv %s219
    %v493 = vmul.f32 %v492, %v475
    %v494 = vmul.f32 %v492, %v476
    %v495 = vadd.f32 %v466, %v493
    %v496 = vadd.f32 %v467, %v494
    %497 = vrot.lane.b32.xlu0 %v425, 15
    %v498 = vpop.permute.xlu0 %497
    %499 = vrot.lane.b32.xlu0 %v426, 15
    %v500 = vpop.permute.xlu0 %499
    %vm501 = vcmp.lt.s32.totalorder %v442, 15
    %v502 = vsel %vm501, %v498, %v500
    %v503 = vsel %vm501, %v500, %v498
    %v504 = vmul.f32 %v503, %v413
    %v505 = vmul.f32 %v502, %v414
    %v506 = vstv %s112
    %v507 = vmul.f32 %v506, %v504
    %v508 = vmul.f32 %v506, %v505
    %v509 = vadd.f32 %v480, %v507
    %v510 = vadd.f32 %v481, %v508
    %v511 = vstv %s148
    %v512 = vmul.f32 %v511, %v504
    %v513 = vmul.f32 %v511, %v505
    %v514 = vadd.f32 %v485, %v512
    %v515 = vadd.f32 %v486, %v513
    %v516 = vstv %s184
    %v517 = vmul.f32 %v516, %v504
    %v518 = vmul.f32 %v516, %v505
    %v519 = vadd.f32 %v490, %v517
    %v520 = vadd.f32 %v491, %v518
    %v521 = vstv %s220
    %v522 = vmul.f32 %v521, %v504
    %v523 = vmul.f32 %v521, %v505
    %v524 = vadd.f32 %v495, %v522
    %v525 = vadd.f32 %v496, %v523
    %526 = vrot.lane.b32.xlu0 %v425, 1
    %v527 = vpop.permute.xlu0 %526
    %528 = vrot.lane.b32.xlu0 %v426, 1
    %v529 = vpop.permute.xlu0 %528
    %vm530 = vcmp.lt.s32.totalorder %v442, 1
    %v531 = vsel %vm530, %v527, %v529
    %v532 = vsel %vm530, %v529, %v527
    %v533 = vmul.f32 %v532, %v415
    %v534 = vmul.f32 %v531, %v416
    %v535 = vstv %s113
    %v536 = vmul.f32 %v535, %v533
    %v537 = vmul.f32 %v535, %v534
    %v538 = vadd.f32 %v509, %v536
    %v539 = vadd.f32 %v510, %v537
    %v540 = vstv %s149
    %v541 = vmul.f32 %v540, %v533
    %v542 = vmul.f32 %v540, %v534
    %v543 = vadd.f32 %v514, %v541
    %v544 = vadd.f32 %v515, %v542
    %v545 = vstv %s185
    %v546 = vmul.f32 %v545, %v533
    %v547 = vmul.f32 %v545, %v534
    %v548 = vadd.f32 %v519, %v546
    %v549 = vadd.f32 %v520, %v547
    %v550 = vstv %s221
    %v551 = vmul.f32 %v550, %v533
    %v552 = vmul.f32 %v550, %v534
    %v553 = vadd.f32 %v524, %v551
    %v554 = vadd.f32 %v525, %v552
    %v555 = vstv %s114
    %v556 = vmul.f32 %v555, %v425
    %v557 = vmul.f32 %v555, %v426
    %v558 = vadd.f32 %v538, %v556
    %v559 = vadd.f32 %v539, %v557
    %v560 = vstv %s150
    %v561 = vmul.f32 %v560, %v425
    %v562 = vmul.f32 %v560, %v426
    %v563 = vadd.f32 %v543, %v561
    %v564 = vadd.f32 %v544, %v562
    %v565 = vstv %s186
    %v566 = vmul.f32 %v565, %v425
    %v567 = vmul.f32 %v565, %v426
    %v568 = vadd.f32 %v548, %v566
    %v569 = vadd.f32 %v549, %v567
    %v570 = vstv %s222
    %v571 = vmul.f32 %v570, %v425
    %v572 = vmul.f32 %v570, %v426
    %v573 = vadd.f32 %v553, %v571
    %v574 = vadd.f32 %v554, %v572
    %575 = vrot.lane.b32.xlu0 %v425, 127
    %v576 = vpop.permute.xlu0 %575
    %577 = vrot.lane.b32.xlu0 %v426, 127
    %v578 = vpop.permute.xlu0 %577
    %vm579 = vcmp.lt.s32.totalorder %v442, 127
    %v580 = vsel %vm579, %v576, %v578
    %v581 = vsel %vm579, %v578, %v576
    %v582 = vmul.f32 %v580, %v417
    %v583 = vmul.f32 %v581, %v418
    %v584 = vstv %s115
    %v585 = vmul.f32 %v584, %v582
    %v586 = vmul.f32 %v584, %v583
    %v587 = vadd.f32 %v558, %v585
    %v588 = vadd.f32 %v559, %v586
    %v589 = vstv %s151
    %v590 = vmul.f32 %v589, %v582
    %v591 = vmul.f32 %v589, %v583
    %v592 = vadd.f32 %v563, %v590
    %v593 = vadd.f32 %v564, %v591
    %v594 = vstv %s187
    %v595 = vmul.f32 %v594, %v582
    %v596 = vmul.f32 %v594, %v583
    %v597 = vadd.f32 %v568, %v595
    %v598 = vadd.f32 %v569, %v596
    %v599 = vstv %s223
    %v600 = vmul.f32 %v599, %v582
    %v601 = vmul.f32 %v599, %v583
    %v602 = vadd.f32 %v573, %v600
    %v603 = vadd.f32 %v574, %v601
    %604 = vrot.lane.b32.xlu0 %v425, 113
    %v605 = vpop.permute.xlu0 %604
    %606 = vrot.lane.b32.xlu0 %v426, 113
    %v607 = vpop.permute.xlu0 %606
    %vm608 = vcmp.lt.s32.totalorder %v442, 113
    %v609 = vsel %vm608, %v605, %v607
    %v610 = vsel %vm608, %v607, %v605
    %v611 = vmul.f32 %v609, %v419
    %v612 = vmul.f32 %v610, %v420
    %v613 = vstv %s116
    %v614 = vmul.f32 %v613, %v611
    %v615 = vmul.f32 %v613, %v612
    %v616 = vadd.f32 %v587, %v614
    %v617 = vadd.f32 %v588, %v615
    %v618 = vstv %s152
    %v619 = vmul.f32 %v618, %v611
    %v620 = vmul.f32 %v618, %v612
    %v621 = vadd.f32 %v592, %v619
    %v622 = vadd.f32 %v593, %v620
    %v623 = vstv %s188
    %v624 = vmul.f32 %v623, %v611
    %v625 = vmul.f32 %v623, %v612
    %v626 = vadd.f32 %v597, %v624
    %v627 = vadd.f32 %v598, %v625
    %v628 = vstv %s224
    %v629 = vmul.f32 %v628, %v611
    %v630 = vmul.f32 %v628, %v612
    %v631 = vadd.f32 %v602, %v629
    %v632 = vadd.f32 %v603, %v630
    %633 = vrot.lane.b32.xlu0 %v425, 112
    %v634 = vpop.permute.xlu0 %633
    %635 = vrot.lane.b32.xlu0 %v426, 112
    %v636 = vpop.permute.xlu0 %635
    %vm637 = vcmp.lt.s32.totalorder %v442, 112
    %v638 = vsel %vm637, %v634, %v636
    %v639 = vsel %vm637, %v636, %v634
    %v640 = vmul.f32 %v638, %v421
    %v641 = vmul.f32 %v639, %v422
    %v642 = vstv %s117
    %v643 = vmul.f32 %v642, %v640
    %v644 = vmul.f32 %v642, %v641
    %v645 = vadd.f32 %v616, %v643
    %v646 = vadd.f32 %v617, %v644
    %v647 = vstv %s153
    %v648 = vmul.f32 %v647, %v640
    %v649 = vmul.f32 %v647, %v641
    %v650 = vadd.f32 %v621, %v648
    %v651 = vadd.f32 %v622, %v649
    %v652 = vstv %s189
    %v653 = vmul.f32 %v652, %v640
    %v654 = vmul.f32 %v652, %v641
    %v655 = vadd.f32 %v626, %v653
    %v656 = vadd.f32 %v627, %v654
    %v657 = vstv %s225
    %v658 = vmul.f32 %v657, %v640
    %v659 = vmul.f32 %v657, %v641
    %v660 = vadd.f32 %v631, %v658
    %v661 = vadd.f32 %v632, %v659
    %662 = vrot.lane.b32.xlu0 %v425, 111
    %v663 = vpop.permute.xlu0 %662
    %664 = vrot.lane.b32.xlu0 %v426, 111
    %v665 = vpop.permute.xlu0 %664
    %vm666 = vcmp.lt.s32.totalorder %v442, 111
    %v667 = vsel %vm666, %v663, %v665
    %v668 = vsel %vm666, %v665, %v663
    %v669 = vmul.f32 %v667, %v423
    %v670 = vmul.f32 %v668, %v424
    %v671 = vstv %s118
    %v672 = vmul.f32 %v671, %v669
    %v673 = vmul.f32 %v671, %v670
    %v674 = vadd.f32 %v645, %v672
    %v675 = vadd.f32 %v646, %v673
    %v676 = vstv %s154
    %v677 = vmul.f32 %v676, %v669
    %v678 = vmul.f32 %v676, %v670
    %v679 = vadd.f32 %v650, %v677
    %v680 = vadd.f32 %v651, %v678
    %v681 = vstv %s190
    %v682 = vmul.f32 %v681, %v669
    %v683 = vmul.f32 %v681, %v670
    %v684 = vadd.f32 %v655, %v682
    %v685 = vadd.f32 %v656, %v683
    %v686 = vstv %s226
    %v687 = vmul.f32 %v686, %v669
    %v688 = vmul.f32 %v686, %v670
    %v689 = vadd.f32 %v660, %v687
    %v690 = vadd.f32 %v661, %v688
    %691 = vrot.lane.b32.xlu0 %v427, 17
    %v692 = vpop.permute.xlu0 %691
    %693 = vrot.lane.b32.xlu0 %v428, 17
    %v694 = vpop.permute.xlu0 %693
    %v695 = vsel %vm443, %v692, %v694
    %v696 = vsel %vm443, %v694, %v692
    %v697 = vmul.f32 %v696, %v409
    %v698 = vmul.f32 %v695, %v410
    %v699 = vstv %s119
    %v700 = vmul.f32 %v699, %v697
    %v701 = vmul.f32 %v699, %v698
    %v702 = vadd.f32 %v674, %v700
    %v703 = vadd.f32 %v675, %v701
    %v704 = vstv %s155
    %v705 = vmul.f32 %v704, %v697
    %v706 = vmul.f32 %v704, %v698
    %v707 = vadd.f32 %v679, %v705
    %v708 = vadd.f32 %v680, %v706
    %v709 = vstv %s191
    %v710 = vmul.f32 %v709, %v697
    %v711 = vmul.f32 %v709, %v698
    %v712 = vadd.f32 %v684, %v710
    %v713 = vadd.f32 %v685, %v711
    %v714 = vstv %s227
    %v715 = vmul.f32 %v714, %v697
    %v716 = vmul.f32 %v714, %v698
    %v717 = vadd.f32 %v689, %v715
    %v718 = vadd.f32 %v690, %v716
    %719 = vrot.lane.b32.xlu0 %v427, 16
    %v720 = vpop.permute.xlu0 %719
    %721 = vrot.lane.b32.xlu0 %v428, 16
    %v722 = vpop.permute.xlu0 %721
    %v723 = vsel %vm472, %v720, %v722
    %v724 = vsel %vm472, %v722, %v720
    %v725 = vmul.f32 %v724, %v411
    %v726 = vmul.f32 %v723, %v412
    %v727 = vstv %s120
    %v728 = vmul.f32 %v727, %v725
    %v729 = vmul.f32 %v727, %v726
    %v730 = vadd.f32 %v702, %v728
    %v731 = vadd.f32 %v703, %v729
    %v732 = vstv %s156
    %v733 = vmul.f32 %v732, %v725
    %v734 = vmul.f32 %v732, %v726
    %v735 = vadd.f32 %v707, %v733
    %v736 = vadd.f32 %v708, %v734
    %v737 = vstv %s192
    %v738 = vmul.f32 %v737, %v725
    %v739 = vmul.f32 %v737, %v726
    %v740 = vadd.f32 %v712, %v738
    %v741 = vadd.f32 %v713, %v739
    %v742 = vstv %s228
    %v743 = vmul.f32 %v742, %v725
    %v744 = vmul.f32 %v742, %v726
    %v745 = vadd.f32 %v717, %v743
    %v746 = vadd.f32 %v718, %v744
    %747 = vrot.lane.b32.xlu0 %v427, 15
    %v748 = vpop.permute.xlu0 %747
    %749 = vrot.lane.b32.xlu0 %v428, 15
    %v750 = vpop.permute.xlu0 %749
    %v751 = vsel %vm501, %v748, %v750
    %v752 = vsel %vm501, %v750, %v748
    %v753 = vmul.f32 %v752, %v413
    %v754 = vmul.f32 %v751, %v414
    %v755 = vstv %s121
    %v756 = vmul.f32 %v755, %v753
    %v757 = vmul.f32 %v755, %v754
    %v758 = vadd.f32 %v730, %v756
    %v759 = vadd.f32 %v731, %v757
    %v760 = vstv %s157
    %v761 = vmul.f32 %v760, %v753
    %v762 = vmul.f32 %v760, %v754
    %v763 = vadd.f32 %v735, %v761
    %v764 = vadd.f32 %v736, %v762
    %v765 = vstv %s193
    %v766 = vmul.f32 %v765, %v753
    %v767 = vmul.f32 %v765, %v754
    %v768 = vadd.f32 %v740, %v766
    %v769 = vadd.f32 %v741, %v767
    %v770 = vstv %s229
    %v771 = vmul.f32 %v770, %v753
    %v772 = vmul.f32 %v770, %v754
    %v773 = vadd.f32 %v745, %v771
    %v774 = vadd.f32 %v746, %v772
    %775 = vrot.lane.b32.xlu0 %v427, 1
    %v776 = vpop.permute.xlu0 %775
    %777 = vrot.lane.b32.xlu0 %v428, 1
    %v778 = vpop.permute.xlu0 %777
    %v779 = vsel %vm530, %v776, %v778
    %v780 = vsel %vm530, %v778, %v776
    %v781 = vmul.f32 %v780, %v415
    %v782 = vmul.f32 %v779, %v416
    %v783 = vstv %s122
    %v784 = vmul.f32 %v783, %v781
    %v785 = vmul.f32 %v783, %v782
    %v786 = vadd.f32 %v758, %v784
    %v787 = vadd.f32 %v759, %v785
    %v788 = vstv %s158
    %v789 = vmul.f32 %v788, %v781
    %v790 = vmul.f32 %v788, %v782
    %v791 = vadd.f32 %v763, %v789
    %v792 = vadd.f32 %v764, %v790
    %v793 = vstv %s194
    %v794 = vmul.f32 %v793, %v781
    %v795 = vmul.f32 %v793, %v782
    %v796 = vadd.f32 %v768, %v794
    %v797 = vadd.f32 %v769, %v795
    %v798 = vstv %s230
    %v799 = vmul.f32 %v798, %v781
    %v800 = vmul.f32 %v798, %v782
    %v801 = vadd.f32 %v773, %v799
    %v802 = vadd.f32 %v774, %v800
    %v803 = vstv %s123
    %v804 = vmul.f32 %v803, %v427
    %v805 = vmul.f32 %v803, %v428
    %v806 = vadd.f32 %v786, %v804
    %v807 = vadd.f32 %v787, %v805
    %v808 = vstv %s159
    %v809 = vmul.f32 %v808, %v427
    %v810 = vmul.f32 %v808, %v428
    %v811 = vadd.f32 %v791, %v809
    %v812 = vadd.f32 %v792, %v810
    %v813 = vstv %s195
    %v814 = vmul.f32 %v813, %v427
    %v815 = vmul.f32 %v813, %v428
    %v816 = vadd.f32 %v796, %v814
    %v817 = vadd.f32 %v797, %v815
    %v818 = vstv %s231
    %v819 = vmul.f32 %v818, %v427
    %v820 = vmul.f32 %v818, %v428
    %v821 = vadd.f32 %v801, %v819
    %v822 = vadd.f32 %v802, %v820
    %823 = vrot.lane.b32.xlu0 %v427, 127
    %v824 = vpop.permute.xlu0 %823
    %825 = vrot.lane.b32.xlu0 %v428, 127
    %v826 = vpop.permute.xlu0 %825
    %v827 = vsel %vm579, %v824, %v826
    %v828 = vsel %vm579, %v826, %v824
    %v829 = vmul.f32 %v827, %v417
    %v830 = vmul.f32 %v828, %v418
    %v831 = vstv %s124
    %v832 = vmul.f32 %v831, %v829
    %v833 = vmul.f32 %v831, %v830
    %v834 = vadd.f32 %v806, %v832
    %v835 = vadd.f32 %v807, %v833
    %v836 = vstv %s160
    %v837 = vmul.f32 %v836, %v829
    %v838 = vmul.f32 %v836, %v830
    %v839 = vadd.f32 %v811, %v837
    %v840 = vadd.f32 %v812, %v838
    %v841 = vstv %s196
    %v842 = vmul.f32 %v841, %v829
    %v843 = vmul.f32 %v841, %v830
    %v844 = vadd.f32 %v816, %v842
    %v845 = vadd.f32 %v817, %v843
    %v846 = vstv %s232
    %v847 = vmul.f32 %v846, %v829
    %v848 = vmul.f32 %v846, %v830
    %v849 = vadd.f32 %v821, %v847
    %v850 = vadd.f32 %v822, %v848
    %851 = vrot.lane.b32.xlu0 %v427, 113
    %v852 = vpop.permute.xlu0 %851
    %853 = vrot.lane.b32.xlu0 %v428, 113
    %v854 = vpop.permute.xlu0 %853
    %v855 = vsel %vm608, %v852, %v854
    %v856 = vsel %vm608, %v854, %v852
    %v857 = vmul.f32 %v855, %v419
    %v858 = vmul.f32 %v856, %v420
    %v859 = vstv %s125
    %v860 = vmul.f32 %v859, %v857
    %v861 = vmul.f32 %v859, %v858
    %v862 = vadd.f32 %v834, %v860
    %v863 = vadd.f32 %v835, %v861
    %v864 = vstv %s161
    %v865 = vmul.f32 %v864, %v857
    %v866 = vmul.f32 %v864, %v858
    %v867 = vadd.f32 %v839, %v865
    %v868 = vadd.f32 %v840, %v866
    %v869 = vstv %s197
    %v870 = vmul.f32 %v869, %v857
    %v871 = vmul.f32 %v869, %v858
    %v872 = vadd.f32 %v844, %v870
    %v873 = vadd.f32 %v845, %v871
    %v874 = vstv %s233
    %v875 = vmul.f32 %v874, %v857
    %v876 = vmul.f32 %v874, %v858
    %v877 = vadd.f32 %v849, %v875
    %v878 = vadd.f32 %v850, %v876
    %879 = vrot.lane.b32.xlu0 %v427, 112
    %v880 = vpop.permute.xlu0 %879
    %881 = vrot.lane.b32.xlu0 %v428, 112
    %v882 = vpop.permute.xlu0 %881
    %v883 = vsel %vm637, %v880, %v882
    %v884 = vsel %vm637, %v882, %v880
    %v885 = vmul.f32 %v883, %v421
    %v886 = vmul.f32 %v884, %v422
    %v887 = vstv %s126
    %v888 = vmul.f32 %v887, %v885
    %v889 = vmul.f32 %v887, %v886
    %v890 = vadd.f32 %v862, %v888
    %v891 = vadd.f32 %v863, %v889
    %v892 = vstv %s162
    %v893 = vmul.f32 %v892, %v885
    %v894 = vmul.f32 %v892, %v886
    %v895 = vadd.f32 %v867, %v893
    %v896 = vadd.f32 %v868, %v894
    %v897 = vstv %s198
    %v898 = vmul.f32 %v897, %v885
    %v899 = vmul.f32 %v897, %v886
    %v900 = vadd.f32 %v872, %v898
    %v901 = vadd.f32 %v873, %v899
    %v902 = vstv %s234
    %v903 = vmul.f32 %v902, %v885
    %v904 = vmul.f32 %v902, %v886
    %v905 = vadd.f32 %v877, %v903
    %v906 = vadd.f32 %v878, %v904
    %907 = vrot.lane.b32.xlu0 %v427, 111
    %v908 = vpop.permute.xlu0 %907
    %909 = vrot.lane.b32.xlu0 %v428, 111
    %v910 = vpop.permute.xlu0 %909
    %v911 = vsel %vm666, %v908, %v910
    %v912 = vsel %vm666, %v910, %v908
    %v913 = vmul.f32 %v911, %v423
    %v914 = vmul.f32 %v912, %v424
    %v915 = vstv %s127
    %v916 = vmul.f32 %v915, %v913
    %v917 = vmul.f32 %v915, %v914
    %v918 = vadd.f32 %v890, %v916
    %v919 = vadd.f32 %v891, %v917
    %v920 = vstv %s163
    %v921 = vmul.f32 %v920, %v913
    %v922 = vmul.f32 %v920, %v914
    %v923 = vadd.f32 %v895, %v921
    %v924 = vadd.f32 %v896, %v922
    %v925 = vstv %s199
    %v926 = vmul.f32 %v925, %v913
    %v927 = vmul.f32 %v925, %v914
    %v928 = vadd.f32 %v900, %v926
    %v929 = vadd.f32 %v901, %v927
    %v930 = vstv %s235
    %v931 = vmul.f32 %v930, %v913
    %v932 = vmul.f32 %v930, %v914
    %v933 = vadd.f32 %v905, %v931
    %v934 = vadd.f32 %v906, %v932
    %935 = vrot.lane.b32.xlu0 %v429, 17
    %v936 = vpop.permute.xlu0 %935
    %937 = vrot.lane.b32.xlu0 %v430, 17
    %v938 = vpop.permute.xlu0 %937
    %v939 = vsel %vm443, %v936, %v938
    %v940 = vsel %vm443, %v938, %v936
    %v941 = vmul.f32 %v940, %v409
    %v942 = vmul.f32 %v939, %v410
    %v943 = vstv %s128
    %v944 = vmul.f32 %v943, %v941
    %v945 = vmul.f32 %v943, %v942
    %v946 = vadd.f32 %v918, %v944
    %v947 = vadd.f32 %v919, %v945
    %v948 = vstv %s164
    %v949 = vmul.f32 %v948, %v941
    %v950 = vmul.f32 %v948, %v942
    %v951 = vadd.f32 %v923, %v949
    %v952 = vadd.f32 %v924, %v950
    %v953 = vstv %s200
    %v954 = vmul.f32 %v953, %v941
    %v955 = vmul.f32 %v953, %v942
    %v956 = vadd.f32 %v928, %v954
    %v957 = vadd.f32 %v929, %v955
    %v958 = vstv %s236
    %v959 = vmul.f32 %v958, %v941
    %v960 = vmul.f32 %v958, %v942
    %v961 = vadd.f32 %v933, %v959
    %v962 = vadd.f32 %v934, %v960
    %963 = vrot.lane.b32.xlu0 %v429, 16
    %v964 = vpop.permute.xlu0 %963
    %965 = vrot.lane.b32.xlu0 %v430, 16
    %v966 = vpop.permute.xlu0 %965
    %v967 = vsel %vm472, %v964, %v966
    %v968 = vsel %vm472, %v966, %v964
    %v969 = vmul.f32 %v968, %v411
    %v970 = vmul.f32 %v967, %v412
    %v971 = vstv %s129
    %v972 = vmul.f32 %v971, %v969
    %v973 = vmul.f32 %v971, %v970
    %v974 = vadd.f32 %v946, %v972
    %v975 = vadd.f32 %v947, %v973
    %v976 = vstv %s165
    %v977 = vmul.f32 %v976, %v969
    %v978 = vmul.f32 %v976, %v970
    %v979 = vadd.f32 %v951, %v977
    %v980 = vadd.f32 %v952, %v978
    %v981 = vstv %s201
    %v982 = vmul.f32 %v981, %v969
    %v983 = vmul.f32 %v981, %v970
    %v984 = vadd.f32 %v956, %v982
    %v985 = vadd.f32 %v957, %v983
    %v986 = vstv %s237
    %v987 = vmul.f32 %v986, %v969
    %v988 = vmul.f32 %v986, %v970
    %v989 = vadd.f32 %v961, %v987
    %v990 = vadd.f32 %v962, %v988
    %991 = vrot.lane.b32.xlu0 %v429, 15
    %v992 = vpop.permute.xlu0 %991
    %993 = vrot.lane.b32.xlu0 %v430, 15
    %v994 = vpop.permute.xlu0 %993
    %v995 = vsel %vm501, %v992, %v994
    %v996 = vsel %vm501, %v994, %v992
    %v997 = vmul.f32 %v996, %v413
    %v998 = vmul.f32 %v995, %v414
    %v999 = vstv %s130
    %v1000 = vmul.f32 %v999, %v997
    %v1001 = vmul.f32 %v999, %v998
    %v1002 = vadd.f32 %v974, %v1000
    %v1003 = vadd.f32 %v975, %v1001
    %v1004 = vstv %s166
    %v1005 = vmul.f32 %v1004, %v997
    %v1006 = vmul.f32 %v1004, %v998
    %v1007 = vadd.f32 %v979, %v1005
    %v1008 = vadd.f32 %v980, %v1006
    %v1009 = vstv %s202
    %v1010 = vmul.f32 %v1009, %v997
    %v1011 = vmul.f32 %v1009, %v998
    %v1012 = vadd.f32 %v984, %v1010
    %v1013 = vadd.f32 %v985, %v1011
    %v1014 = vstv %s238
    %v1015 = vmul.f32 %v1014, %v997
    %v1016 = vmul.f32 %v1014, %v998
    %v1017 = vadd.f32 %v989, %v1015
    %v1018 = vadd.f32 %v990, %v1016
    %1019 = vrot.lane.b32.xlu0 %v429, 1
    %v1020 = vpop.permute.xlu0 %1019
    %1021 = vrot.lane.b32.xlu0 %v430, 1
    %v1022 = vpop.permute.xlu0 %1021
    %v1023 = vsel %vm530, %v1020, %v1022
    %v1024 = vsel %vm530, %v1022, %v1020
    %v1025 = vmul.f32 %v1024, %v415
    %v1026 = vmul.f32 %v1023, %v416
    %v1027 = vstv %s131
    %v1028 = vmul.f32 %v1027, %v1025
    %v1029 = vmul.f32 %v1027, %v1026
    %v1030 = vadd.f32 %v1002, %v1028
    %v1031 = vadd.f32 %v1003, %v1029
    %v1032 = vstv %s167
    %v1033 = vmul.f32 %v1032, %v1025
    %v1034 = vmul.f32 %v1032, %v1026
    %v1035 = vadd.f32 %v1007, %v1033
    %v1036 = vadd.f32 %v1008, %v1034
    %v1037 = vstv %s203
    %v1038 = vmul.f32 %v1037, %v1025
    %v1039 = vmul.f32 %v1037, %v1026
    %v1040 = vadd.f32 %v1012, %v1038
    %v1041 = vadd.f32 %v1013, %v1039
    %v1042 = vstv %s239
    %v1043 = vmul.f32 %v1042, %v1025
    %v1044 = vmul.f32 %v1042, %v1026
    %v1045 = vadd.f32 %v1017, %v1043
    %v1046 = vadd.f32 %v1018, %v1044
    %v1047 = vstv %s132
    %v1048 = vmul.f32 %v1047, %v429
    %v1049 = vmul.f32 %v1047, %v430
    %v1050 = vadd.f32 %v1030, %v1048
    %v1051 = vadd.f32 %v1031, %v1049
    %v1052 = vstv %s168
    %v1053 = vmul.f32 %v1052, %v429
    %v1054 = vmul.f32 %v1052, %v430
    %v1055 = vadd.f32 %v1035, %v1053
    %v1056 = vadd.f32 %v1036, %v1054
    %v1057 = vstv %s204
    %v1058 = vmul.f32 %v1057, %v429
    %v1059 = vmul.f32 %v1057, %v430
    %v1060 = vadd.f32 %v1040, %v1058
    %v1061 = vadd.f32 %v1041, %v1059
    %v1062 = vstv %s240
    %v1063 = vmul.f32 %v1062, %v429
    %v1064 = vmul.f32 %v1062, %v430
    %v1065 = vadd.f32 %v1045, %v1063
    %v1066 = vadd.f32 %v1046, %v1064
    %1067 = vrot.lane.b32.xlu0 %v429, 127
    %v1068 = vpop.permute.xlu0 %1067
    %1069 = vrot.lane.b32.xlu0 %v430, 127
    %v1070 = vpop.permute.xlu0 %1069
    %v1071 = vsel %vm579, %v1068, %v1070
    %v1072 = vsel %vm579, %v1070, %v1068
    %v1073 = vmul.f32 %v1071, %v417
    %v1074 = vmul.f32 %v1072, %v418
    %v1075 = vstv %s133
    %v1076 = vmul.f32 %v1075, %v1073
    %v1077 = vmul.f32 %v1075, %v1074
    %v1078 = vadd.f32 %v1050, %v1076
    %v1079 = vadd.f32 %v1051, %v1077
    %v1080 = vstv %s169
    %v1081 = vmul.f32 %v1080, %v1073
    %v1082 = vmul.f32 %v1080, %v1074
    %v1083 = vadd.f32 %v1055, %v1081
    %v1084 = vadd.f32 %v1056, %v1082
    %v1085 = vstv %s205
    %v1086 = vmul.f32 %v1085, %v1073
    %v1087 = vmul.f32 %v1085, %v1074
    %v1088 = vadd.f32 %v1060, %v1086
    %v1089 = vadd.f32 %v1061, %v1087
    %v1090 = vstv %s241
    %v1091 = vmul.f32 %v1090, %v1073
    %v1092 = vmul.f32 %v1090, %v1074
    %v1093 = vadd.f32 %v1065, %v1091
    %v1094 = vadd.f32 %v1066, %v1092
    %1095 = vrot.lane.b32.xlu0 %v429, 113
    %v1096 = vpop.permute.xlu0 %1095
    %1097 = vrot.lane.b32.xlu0 %v430, 113
    %v1098 = vpop.permute.xlu0 %1097
    %v1099 = vsel %vm608, %v1096, %v1098
    %v1100 = vsel %vm608, %v1098, %v1096
    %v1101 = vmul.f32 %v1099, %v419
    %v1102 = vmul.f32 %v1100, %v420
    %v1103 = vstv %s134
    %v1104 = vmul.f32 %v1103, %v1101
    %v1105 = vmul.f32 %v1103, %v1102
    %v1106 = vadd.f32 %v1078, %v1104
    %v1107 = vadd.f32 %v1079, %v1105
    %v1108 = vstv %s170
    %v1109 = vmul.f32 %v1108, %v1101
    %v1110 = vmul.f32 %v1108, %v1102
    %v1111 = vadd.f32 %v1083, %v1109
    %v1112 = vadd.f32 %v1084, %v1110
    %v1113 = vstv %s206
    %v1114 = vmul.f32 %v1113, %v1101
    %v1115 = vmul.f32 %v1113, %v1102
    %v1116 = vadd.f32 %v1088, %v1114
    %v1117 = vadd.f32 %v1089, %v1115
    %v1118 = vstv %s242
    %v1119 = vmul.f32 %v1118, %v1101
    %v1120 = vmul.f32 %v1118, %v1102
    %v1121 = vadd.f32 %v1093, %v1119
    %v1122 = vadd.f32 %v1094, %v1120
    %1123 = vrot.lane.b32.xlu0 %v429, 112
    %v1124 = vpop.permute.xlu0 %1123
    %1125 = vrot.lane.b32.xlu0 %v430, 112
    %v1126 = vpop.permute.xlu0 %1125
    %v1127 = vsel %vm637, %v1124, %v1126
    %v1128 = vsel %vm637, %v1126, %v1124
    %v1129 = vmul.f32 %v1127, %v421
    %v1130 = vmul.f32 %v1128, %v422
    %v1131 = vstv %s135
    %v1132 = vmul.f32 %v1131, %v1129
    %v1133 = vmul.f32 %v1131, %v1130
    %v1134 = vadd.f32 %v1106, %v1132
    %v1135 = vadd.f32 %v1107, %v1133
    %v1136 = vstv %s171
    %v1137 = vmul.f32 %v1136, %v1129
    %v1138 = vmul.f32 %v1136, %v1130
    %v1139 = vadd.f32 %v1111, %v1137
    %v1140 = vadd.f32 %v1112, %v1138
    %v1141 = vstv %s207
    %v1142 = vmul.f32 %v1141, %v1129
    %v1143 = vmul.f32 %v1141, %v1130
    %v1144 = vadd.f32 %v1116, %v1142
    %v1145 = vadd.f32 %v1117, %v1143
    %v1146 = vstv %s243
    %v1147 = vmul.f32 %v1146, %v1129
    %v1148 = vmul.f32 %v1146, %v1130
    %v1149 = vadd.f32 %v1121, %v1147
    %v1150 = vadd.f32 %v1122, %v1148
    %1151 = vrot.lane.b32.xlu0 %v429, 111
    %v1152 = vpop.permute.xlu0 %1151
    %1153 = vrot.lane.b32.xlu0 %v430, 111
    %v1154 = vpop.permute.xlu0 %1153
    %v1155 = vsel %vm666, %v1152, %v1154
    %v1156 = vsel %vm666, %v1154, %v1152
    %v1157 = vmul.f32 %v1155, %v423
    %v1158 = vmul.f32 %v1156, %v424
    %v1159 = vstv %s136
    %v1160 = vmul.f32 %v1159, %v1157
    %v1161 = vmul.f32 %v1159, %v1158
    %v1162 = vadd.f32 %v1134, %v1160
    %v1163 = vadd.f32 %v1135, %v1161
    %v1164 = vstv %s172
    %v1165 = vmul.f32 %v1164, %v1157
    %v1166 = vmul.f32 %v1164, %v1158
    %v1167 = vadd.f32 %v1139, %v1165
    %v1168 = vadd.f32 %v1140, %v1166
    %v1169 = vstv %s208
    %v1170 = vmul.f32 %v1169, %v1157
    %v1171 = vmul.f32 %v1169, %v1158
    %v1172 = vadd.f32 %v1144, %v1170
    %v1173 = vadd.f32 %v1145, %v1171
    %v1174 = vstv %s244
    %v1175 = vmul.f32 %v1174, %v1157
    %v1176 = vmul.f32 %v1174, %v1158
    %v1177 = vadd.f32 %v1149, %v1175
    %v1178 = vadd.f32 %v1150, %v1176
    %1179 = vrot.lane.b32.xlu0 %v431, 17
    %v1180 = vpop.permute.xlu0 %1179
    %1181 = vrot.lane.b32.xlu0 %v432, 17
    %v1182 = vpop.permute.xlu0 %1181
    %v1183 = vsel %vm443, %v1180, %v1182
    %v1184 = vsel %vm443, %v1182, %v1180
    %v1185 = vmul.f32 %v1184, %v409
    %v1186 = vmul.f32 %v1183, %v410
    %v1187 = vstv %s137
    %v1188 = vmul.f32 %v1187, %v1185
    %v1189 = vmul.f32 %v1187, %v1186
    %v1190 = vadd.f32 %v1162, %v1188
    %v1191 = vadd.f32 %v1163, %v1189
    %v1192 = vstv %s173
    %v1193 = vmul.f32 %v1192, %v1185
    %v1194 = vmul.f32 %v1192, %v1186
    %v1195 = vadd.f32 %v1167, %v1193
    %v1196 = vadd.f32 %v1168, %v1194
    %v1197 = vstv %s209
    %v1198 = vmul.f32 %v1197, %v1185
    %v1199 = vmul.f32 %v1197, %v1186
    %v1200 = vadd.f32 %v1172, %v1198
    %v1201 = vadd.f32 %v1173, %v1199
    %v1202 = vstv %s245
    %v1203 = vmul.f32 %v1202, %v1185
    %v1204 = vmul.f32 %v1202, %v1186
    %v1205 = vadd.f32 %v1177, %v1203
    %v1206 = vadd.f32 %v1178, %v1204
    %1207 = vrot.lane.b32.xlu0 %v431, 16
    %v1208 = vpop.permute.xlu0 %1207
    %1209 = vrot.lane.b32.xlu0 %v432, 16
    %v1210 = vpop.permute.xlu0 %1209
    %v1211 = vsel %vm472, %v1208, %v1210
    %v1212 = vsel %vm472, %v1210, %v1208
    %v1213 = vmul.f32 %v1212, %v411
    %v1214 = vmul.f32 %v1211, %v412
    %v1215 = vstv %s138
    %v1216 = vmul.f32 %v1215, %v1213
    %v1217 = vmul.f32 %v1215, %v1214
    %v1218 = vadd.f32 %v1190, %v1216
    %v1219 = vadd.f32 %v1191, %v1217
    %v1220 = vstv %s174
    %v1221 = vmul.f32 %v1220, %v1213
    %v1222 = vmul.f32 %v1220, %v1214
    %v1223 = vadd.f32 %v1195, %v1221
    %v1224 = vadd.f32 %v1196, %v1222
    %v1225 = vstv %s210
    %v1226 = vmul.f32 %v1225, %v1213
    %v1227 = vmul.f32 %v1225, %v1214
    %v1228 = vadd.f32 %v1200, %v1226
    %v1229 = vadd.f32 %v1201, %v1227
    %v1230 = vstv %s246
    %v1231 = vmul.f32 %v1230, %v1213
    %v1232 = vmul.f32 %v1230, %v1214
    %v1233 = vadd.f32 %v1205, %v1231
    %v1234 = vadd.f32 %v1206, %v1232
    %1235 = vrot.lane.b32.xlu0 %v431, 15
    %v1236 = vpop.permute.xlu0 %1235
    %1237 = vrot.lane.b32.xlu0 %v432, 15
    %v1238 = vpop.permute.xlu0 %1237
    %v1239 = vsel %vm501, %v1236, %v1238
    %v1240 = vsel %vm501, %v1238, %v1236
    %v1241 = vmul.f32 %v1240, %v413
    %v1242 = vmul.f32 %v1239, %v414
    %v1243 = vstv %s139
    %v1244 = vmul.f32 %v1243, %v1241
    %v1245 = vmul.f32 %v1243, %v1242
    %v1246 = vadd.f32 %v1218, %v1244
    %v1247 = vadd.f32 %v1219, %v1245
    %v1248 = vstv %s175
    %v1249 = vmul.f32 %v1248, %v1241
    %v1250 = vmul.f32 %v1248, %v1242
    %v1251 = vadd.f32 %v1223, %v1249
    %v1252 = vadd.f32 %v1224, %v1250
    %v1253 = vstv %s211
    %v1254 = vmul.f32 %v1253, %v1241
    %v1255 = vmul.f32 %v1253, %v1242
    %v1256 = vadd.f32 %v1228, %v1254
    %v1257 = vadd.f32 %v1229, %v1255
    %v1258 = vstv %s247
    %v1259 = vmul.f32 %v1258, %v1241
    %v1260 = vmul.f32 %v1258, %v1242
    %v1261 = vadd.f32 %v1233, %v1259
    %v1262 = vadd.f32 %v1234, %v1260
    %1263 = vrot.lane.b32.xlu0 %v431, 1
    %v1264 = vpop.permute.xlu0 %1263
    %1265 = vrot.lane.b32.xlu0 %v432, 1
    %v1266 = vpop.permute.xlu0 %1265
    %v1267 = vsel %vm530, %v1264, %v1266
    %v1268 = vsel %vm530, %v1266, %v1264
    %v1269 = vmul.f32 %v1268, %v415
    %v1270 = vmul.f32 %v1267, %v416
    %v1271 = vstv %s140
    %v1272 = vmul.f32 %v1271, %v1269
    %v1273 = vmul.f32 %v1271, %v1270
    %v1274 = vadd.f32 %v1246, %v1272
    %v1275 = vadd.f32 %v1247, %v1273
    %v1276 = vstv %s176
    %v1277 = vmul.f32 %v1276, %v1269
    %v1278 = vmul.f32 %v1276, %v1270
    %v1279 = vadd.f32 %v1251, %v1277
    %v1280 = vadd.f32 %v1252, %v1278
    %v1281 = vstv %s212
    %v1282 = vmul.f32 %v1281, %v1269
    %v1283 = vmul.f32 %v1281, %v1270
    %v1284 = vadd.f32 %v1256, %v1282
    %v1285 = vadd.f32 %v1257, %v1283
    %v1286 = vstv %s248
    %v1287 = vmul.f32 %v1286, %v1269
    %v1288 = vmul.f32 %v1286, %v1270
    %v1289 = vadd.f32 %v1261, %v1287
    %v1290 = vadd.f32 %v1262, %v1288
    %v1291 = vstv %s141
    %v1292 = vmul.f32 %v1291, %v431
    %v1293 = vmul.f32 %v1291, %v432
    %v1294 = vadd.f32 %v1274, %v1292
    %v1295 = vadd.f32 %v1275, %v1293
    %v1296 = vstv %s177
    %v1297 = vmul.f32 %v1296, %v431
    %v1298 = vmul.f32 %v1296, %v432
    %v1299 = vadd.f32 %v1279, %v1297
    %v1300 = vadd.f32 %v1280, %v1298
    %v1301 = vstv %s213
    %v1302 = vmul.f32 %v1301, %v431
    %v1303 = vmul.f32 %v1301, %v432
    %v1304 = vadd.f32 %v1284, %v1302
    %v1305 = vadd.f32 %v1285, %v1303
    %v1306 = vstv %s249
    %v1307 = vmul.f32 %v1306, %v431
    %v1308 = vmul.f32 %v1306, %v432
    %v1309 = vadd.f32 %v1289, %v1307
    %v1310 = vadd.f32 %v1290, %v1308
    %1311 = vrot.lane.b32.xlu0 %v431, 127
    %v1312 = vpop.permute.xlu0 %1311
    %1313 = vrot.lane.b32.xlu0 %v432, 127
    %v1314 = vpop.permute.xlu0 %1313
    %v1315 = vsel %vm579, %v1312, %v1314
    %v1316 = vsel %vm579, %v1314, %v1312
    %v1317 = vmul.f32 %v1315, %v417
    %v1318 = vmul.f32 %v1316, %v418
    %v1319 = vstv %s142
    %v1320 = vmul.f32 %v1319, %v1317
    %v1321 = vmul.f32 %v1319, %v1318
    %v1322 = vadd.f32 %v1294, %v1320
    %v1323 = vadd.f32 %v1295, %v1321
    %v1324 = vstv %s178
    %v1325 = vmul.f32 %v1324, %v1317
    %v1326 = vmul.f32 %v1324, %v1318
    %v1327 = vadd.f32 %v1299, %v1325
    %v1328 = vadd.f32 %v1300, %v1326
    %v1329 = vstv %s214
    %v1330 = vmul.f32 %v1329, %v1317
    %v1331 = vmul.f32 %v1329, %v1318
    %v1332 = vadd.f32 %v1304, %v1330
    %v1333 = vadd.f32 %v1305, %v1331
    %v1334 = vstv %s250
    %v1335 = vmul.f32 %v1334, %v1317
    %v1336 = vmul.f32 %v1334, %v1318
    %v1337 = vadd.f32 %v1309, %v1335
    %v1338 = vadd.f32 %v1310, %v1336
    %1339 = vrot.lane.b32.xlu0 %v431, 113
    %v1340 = vpop.permute.xlu0 %1339
    %1341 = vrot.lane.b32.xlu0 %v432, 113
    %v1342 = vpop.permute.xlu0 %1341
    %v1343 = vsel %vm608, %v1340, %v1342
    %v1344 = vsel %vm608, %v1342, %v1340
    %v1345 = vmul.f32 %v1343, %v419
    %v1346 = vmul.f32 %v1344, %v420
    %v1347 = vstv %s143
    %v1348 = vmul.f32 %v1347, %v1345
    %v1349 = vmul.f32 %v1347, %v1346
    %v1350 = vadd.f32 %v1322, %v1348
    %v1351 = vadd.f32 %v1323, %v1349
    %v1352 = vstv %s179
    %v1353 = vmul.f32 %v1352, %v1345
    %v1354 = vmul.f32 %v1352, %v1346
    %v1355 = vadd.f32 %v1327, %v1353
    %v1356 = vadd.f32 %v1328, %v1354
    %v1357 = vstv %s215
    %v1358 = vmul.f32 %v1357, %v1345
    %v1359 = vmul.f32 %v1357, %v1346
    %v1360 = vadd.f32 %v1332, %v1358
    %v1361 = vadd.f32 %v1333, %v1359
    %v1362 = vstv %s251
    %v1363 = vmul.f32 %v1362, %v1345
    %v1364 = vmul.f32 %v1362, %v1346
    %v1365 = vadd.f32 %v1337, %v1363
    %v1366 = vadd.f32 %v1338, %v1364
    %1367 = vrot.lane.b32.xlu0 %v431, 112
    %v1368 = vpop.permute.xlu0 %1367
    %1369 = vrot.lane.b32.xlu0 %v432, 112
    %v1370 = vpop.permute.xlu0 %1369
    %v1371 = vsel %vm637, %v1368, %v1370
    %v1372 = vsel %vm637, %v1370, %v1368
    %v1373 = vmul.f32 %v1371, %v421
    %v1374 = vmul.f32 %v1372, %v422
    %v1375 = vstv %s144
    %v1376 = vmul.f32 %v1375, %v1373
    %v1377 = vmul.f32 %v1375, %v1374
    %v1378 = vadd.f32 %v1350, %v1376
    %v1379 = vadd.f32 %v1351, %v1377
    %v1380 = vstv %s180
    %v1381 = vmul.f32 %v1380, %v1373
    %v1382 = vmul.f32 %v1380, %v1374
    %v1383 = vadd.f32 %v1355, %v1381
    %v1384 = vadd.f32 %v1356, %v1382
    %v1385 = vstv %s216
    %v1386 = vmul.f32 %v1385, %v1373
    %v1387 = vmul.f32 %v1385, %v1374
    %v1388 = vadd.f32 %v1360, %v1386
    %v1389 = vadd.f32 %v1361, %v1387
    %v1390 = vstv %s252
    %v1391 = vmul.f32 %v1390, %v1373
    %v1392 = vmul.f32 %v1390, %v1374
    %v1393 = vadd.f32 %v1365, %v1391
    %v1394 = vadd.f32 %v1366, %v1392
    %1395 = vrot.lane.b32.xlu0 %v431, 111
    %v1396 = vpop.permute.xlu0 %1395
    %1397 = vrot.lane.b32.xlu0 %v432, 111
    %v1398 = vpop.permute.xlu0 %1397
    %v1399 = vsel %vm666, %v1396, %v1398
    %v1400 = vsel %vm666, %v1398, %v1396
    %v1401 = vmul.f32 %v1399, %v423
    %v1402 = vmul.f32 %v1400, %v424
    %v1403 = vstv %s145
    %v1404 = vmul.f32 %v1403, %v1401
    %v1405 = vmul.f32 %v1403, %v1402
    %v1406 = vadd.f32 %v1378, %v1404
    %v1407 = vadd.f32 %v1379, %v1405
    %v1408 = vstv %s181
    %v1409 = vmul.f32 %v1408, %v1401
    %v1410 = vmul.f32 %v1408, %v1402
    %v1411 = vadd.f32 %v1383, %v1409
    %v1412 = vadd.f32 %v1384, %v1410
    %v1413 = vstv %s217
    %v1414 = vmul.f32 %v1413, %v1401
    %v1415 = vmul.f32 %v1413, %v1402
    %v1416 = vadd.f32 %v1388, %v1414
    %v1417 = vadd.f32 %v1389, %v1415
    %v1418 = vstv %s253
    %v1419 = vmul.f32 %v1418, %v1401
    %v1420 = vmul.f32 %v1418, %v1402
    %v1421 = vadd.f32 %v1393, %v1419
    %v1422 = vadd.f32 %v1394, %v1420
    %v1423 = vmax.f32 %v1406, 0.0
    %v1424 = vmax.f32 %v1407, 0.0
    %v1425 = vmax.f32 %v1411, 0.0
    %v1426 = vmax.f32 %v1412, 0.0
    %v1427 = vmax.f32 %v1416, 0.0
    %v1428 = vmax.f32 %v1417, 0.0
    %v1429 = vmax.f32 %v1421, 0.0
    %v1430 = vmax.f32 %v1422, 0.0
    %v1431 = vstv %s402
    %v1432 = vstv %s403
    %v1433 = vstv %s404
    %v1434 = vstv %s405
    %1435 = vrot.lane.b32.xlu0 %v1423, 17
    %v1436 = vpop.permute.xlu0 %1435
    %1437 = vrot.lane.b32.xlu0 %v1424, 17
    %v1438 = vpop.permute.xlu0 %1437
    %v1439 = vsel %vm443, %v1436, %v1438
    %v1440 = vsel %vm443, %v1438, %v1436
    %v1441 = vmul.f32 %v1440, %v409
    %v1442 = vmul.f32 %v1439, %v410
    %v1443 = vstv %s254
    %v1444 = vmul.f32 %v1443, %v1441
    %v1445 = vmul.f32 %v1443, %v1442
    %v1446 = vadd.f32 %v1431, %v1444
    %v1447 = vadd.f32 %v1431, %v1445
    %v1448 = vstv %s290
    %v1449 = vmul.f32 %v1448, %v1441
    %v1450 = vmul.f32 %v1448, %v1442
    %v1451 = vadd.f32 %v1432, %v1449
    %v1452 = vadd.f32 %v1432, %v1450
    %v1453 = vstv %s326
    %v1454 = vmul.f32 %v1453, %v1441
    %v1455 = vmul.f32 %v1453, %v1442
    %v1456 = vadd.f32 %v1433, %v1454
    %v1457 = vadd.f32 %v1433, %v1455
    %v1458 = vstv %s362
    %v1459 = vmul.f32 %v1458, %v1441
    %v1460 = vmul.f32 %v1458, %v1442
    %v1461 = vadd.f32 %v1434, %v1459
    %v1462 = vadd.f32 %v1434, %v1460
    %1463 = vrot.lane.b32.xlu0 %v1423, 16
    %v1464 = vpop.permute.xlu0 %1463
    %1465 = vrot.lane.b32.xlu0 %v1424, 16
    %v1466 = vpop.permute.xlu0 %1465
    %v1467 = vsel %vm472, %v1464, %v1466
    %v1468 = vsel %vm472, %v1466, %v1464
    %v1469 = vmul.f32 %v1468, %v411
    %v1470 = vmul.f32 %v1467, %v412
    %v1471 = vstv %s255
    %v1472 = vmul.f32 %v1471, %v1469
    %v1473 = vmul.f32 %v1471, %v1470
    %v1474 = vadd.f32 %v1446, %v1472
    %v1475 = vadd.f32 %v1447, %v1473
    %v1476 = vstv %s291
    %v1477 = vmul.f32 %v1476, %v1469
    %v1478 = vmul.f32 %v1476, %v1470
    %v1479 = vadd.f32 %v1451, %v1477
    %v1480 = vadd.f32 %v1452, %v1478
    %v1481 = vstv %s327
    %v1482 = vmul.f32 %v1481, %v1469
    %v1483 = vmul.f32 %v1481, %v1470
    %v1484 = vadd.f32 %v1456, %v1482
    %v1485 = vadd.f32 %v1457, %v1483
    %v1486 = vstv %s363
    %v1487 = vmul.f32 %v1486, %v1469
    %v1488 = vmul.f32 %v1486, %v1470
    %v1489 = vadd.f32 %v1461, %v1487
    %v1490 = vadd.f32 %v1462, %v1488
    %1491 = vrot.lane.b32.xlu0 %v1423, 15
    %v1492 = vpop.permute.xlu0 %1491
    %1493 = vrot.lane.b32.xlu0 %v1424, 15
    %v1494 = vpop.permute.xlu0 %1493
    %v1495 = vsel %vm501, %v1492, %v1494
    %v1496 = vsel %vm501, %v1494, %v1492
    %v1497 = vmul.f32 %v1496, %v413
    %v1498 = vmul.f32 %v1495, %v414
    %v1499 = vstv %s256
    %v1500 = vmul.f32 %v1499, %v1497
    %v1501 = vmul.f32 %v1499, %v1498
    %v1502 = vadd.f32 %v1474, %v1500
    %v1503 = vadd.f32 %v1475, %v1501
    %v1504 = vstv %s292
    %v1505 = vmul.f32 %v1504, %v1497
    %v1506 = vmul.f32 %v1504, %v1498
    %v1507 = vadd.f32 %v1479, %v1505
    %v1508 = vadd.f32 %v1480, %v1506
    %v1509 = vstv %s328
    %v1510 = vmul.f32 %v1509, %v1497
    %v1511 = vmul.f32 %v1509, %v1498
    %v1512 = vadd.f32 %v1484, %v1510
    %v1513 = vadd.f32 %v1485, %v1511
    %v1514 = vstv %s364
    %v1515 = vmul.f32 %v1514, %v1497
    %v1516 = vmul.f32 %v1514, %v1498
    %v1517 = vadd.f32 %v1489, %v1515
    %v1518 = vadd.f32 %v1490, %v1516
    %1519 = vrot.lane.b32.xlu0 %v1423, 1
    %v1520 = vpop.permute.xlu0 %1519
    %1521 = vrot.lane.b32.xlu0 %v1424, 1
    %v1522 = vpop.permute.xlu0 %1521
    %v1523 = vsel %vm530, %v1520, %v1522
    %v1524 = vsel %vm530, %v1522, %v1520
    %v1525 = vmul.f32 %v1524, %v415
    %v1526 = vmul.f32 %v1523, %v416
    %v1527 = vstv %s257
    %v1528 = vmul.f32 %v1527, %v1525
    %v1529 = vmul.f32 %v1527, %v1526
    %v1530 = vadd.f32 %v1502, %v1528
    %v1531 = vadd.f32 %v1503, %v1529
    %v1532 = vstv %s293
    %v1533 = vmul.f32 %v1532, %v1525
    %v1534 = vmul.f32 %v1532, %v1526
    %v1535 = vadd.f32 %v1507, %v1533
    %v1536 = vadd.f32 %v1508, %v1534
    %v1537 = vstv %s329
    %v1538 = vmul.f32 %v1537, %v1525
    %v1539 = vmul.f32 %v1537, %v1526
    %v1540 = vadd.f32 %v1512, %v1538
    %v1541 = vadd.f32 %v1513, %v1539
    %v1542 = vstv %s365
    %v1543 = vmul.f32 %v1542, %v1525
    %v1544 = vmul.f32 %v1542, %v1526
    %v1545 = vadd.f32 %v1517, %v1543
    %v1546 = vadd.f32 %v1518, %v1544
    %v1547 = vstv %s258
    %v1548 = vmul.f32 %v1547, %v1423
    %v1549 = vmul.f32 %v1547, %v1424
    %v1550 = vadd.f32 %v1530, %v1548
    %v1551 = vadd.f32 %v1531, %v1549
    %v1552 = vstv %s294
    %v1553 = vmul.f32 %v1552, %v1423
    %v1554 = vmul.f32 %v1552, %v1424
    %v1555 = vadd.f32 %v1535, %v1553
    %v1556 = vadd.f32 %v1536, %v1554
    %v1557 = vstv %s330
    %v1558 = vmul.f32 %v1557, %v1423
    %v1559 = vmul.f32 %v1557, %v1424
    %v1560 = vadd.f32 %v1540, %v1558
    %v1561 = vadd.f32 %v1541, %v1559
    %v1562 = vstv %s366
    %v1563 = vmul.f32 %v1562, %v1423
    %v1564 = vmul.f32 %v1562, %v1424
    %v1565 = vadd.f32 %v1545, %v1563
    %v1566 = vadd.f32 %v1546, %v1564
    %1567 = vrot.lane.b32.xlu0 %v1423, 127
    %v1568 = vpop.permute.xlu0 %1567
    %1569 = vrot.lane.b32.xlu0 %v1424, 127
    %v1570 = vpop.permute.xlu0 %1569
    %v1571 = vsel %vm579, %v1568, %v1570
    %v1572 = vsel %vm579, %v1570, %v1568
    %v1573 = vmul.f32 %v1571, %v417
    %v1574 = vmul.f32 %v1572, %v418
    %v1575 = vstv %s259
    %v1576 = vmul.f32 %v1575, %v1573
    %v1577 = vmul.f32 %v1575, %v1574
    %v1578 = vadd.f32 %v1550, %v1576
    %v1579 = vadd.f32 %v1551, %v1577
    %v1580 = vstv %s295
    %v1581 = vmul.f32 %v1580, %v1573
    %v1582 = vmul.f32 %v1580, %v1574
    %v1583 = vadd.f32 %v1555, %v1581
    %v1584 = vadd.f32 %v1556, %v1582
    %v1585 = vstv %s331
    %v1586 = vmul.f32 %v1585, %v1573
    %v1587 = vmul.f32 %v1585, %v1574
    %v1588 = vadd.f32 %v1560, %v1586
    %v1589 = vadd.f32 %v1561, %v1587
    %v1590 = vstv %s367
    %v1591 = vmul.f32 %v1590, %v1573
    %v1592 = vmul.f32 %v1590, %v1574
    %v1593 = vadd.f32 %v1565, %v1591
    %v1594 = vadd.f32 %v1566, %v1592
    %1595 = vrot.lane.b32.xlu0 %v1423, 113
    %v1596 = vpop.permute.xlu0 %1595
    %1597 = vrot.lane.b32.xlu0 %v1424, 113
    %v1598 = vpop.permute.xlu0 %1597
    %v1599 = vsel %vm608, %v1596, %v1598
    %v1600 = vsel %vm608, %v1598, %v1596
    %v1601 = vmul.f32 %v1599, %v419
    %v1602 = vmul.f32 %v1600, %v420
    %v1603 = vstv %s260
    %v1604 = vmul.f32 %v1603, %v1601
    %v1605 = vmul.f32 %v1603, %v1602
    %v1606 = vadd.f32 %v1578, %v1604
    %v1607 = vadd.f32 %v1579, %v1605
    %v1608 = vstv %s296
    %v1609 = vmul.f32 %v1608, %v1601
    %v1610 = vmul.f32 %v1608, %v1602
    %v1611 = vadd.f32 %v1583, %v1609
    %v1612 = vadd.f32 %v1584, %v1610
    %v1613 = vstv %s332
    %v1614 = vmul.f32 %v1613, %v1601
    %v1615 = vmul.f32 %v1613, %v1602
    %v1616 = vadd.f32 %v1588, %v1614
    %v1617 = vadd.f32 %v1589, %v1615
    %v1618 = vstv %s368
    %v1619 = vmul.f32 %v1618, %v1601
    %v1620 = vmul.f32 %v1618, %v1602
    %v1621 = vadd.f32 %v1593, %v1619
    %v1622 = vadd.f32 %v1594, %v1620
    %1623 = vrot.lane.b32.xlu0 %v1423, 112
    %v1624 = vpop.permute.xlu0 %1623
    %1625 = vrot.lane.b32.xlu0 %v1424, 112
    %v1626 = vpop.permute.xlu0 %1625
    %v1627 = vsel %vm637, %v1624, %v1626
    %v1628 = vsel %vm637, %v1626, %v1624
    %v1629 = vmul.f32 %v1627, %v421
    %v1630 = vmul.f32 %v1628, %v422
    %v1631 = vstv %s261
    %v1632 = vmul.f32 %v1631, %v1629
    %v1633 = vmul.f32 %v1631, %v1630
    %v1634 = vadd.f32 %v1606, %v1632
    %v1635 = vadd.f32 %v1607, %v1633
    %v1636 = vstv %s297
    %v1637 = vmul.f32 %v1636, %v1629
    %v1638 = vmul.f32 %v1636, %v1630
    %v1639 = vadd.f32 %v1611, %v1637
    %v1640 = vadd.f32 %v1612, %v1638
    %v1641 = vstv %s333
    %v1642 = vmul.f32 %v1641, %v1629
    %v1643 = vmul.f32 %v1641, %v1630
    %v1644 = vadd.f32 %v1616, %v1642
    %v1645 = vadd.f32 %v1617, %v1643
    %v1646 = vstv %s369
    %v1647 = vmul.f32 %v1646, %v1629
    %v1648 = vmul.f32 %v1646, %v1630
    %v1649 = vadd.f32 %v1621, %v1647
    %v1650 = vadd.f32 %v1622, %v1648
    %1651 = vrot.lane.b32.xlu0 %v1423, 111
    %v1652 = vpop.permute.xlu0 %1651
    %1653 = vrot.lane.b32.xlu0 %v1424, 111
    %v1654 = vpop.permute.xlu0 %1653
    %v1655 = vsel %vm666, %v1652, %v1654
    %v1656 = vsel %vm666, %v1654, %v1652
    %v1657 = vmul.f32 %v1655, %v423
    %v1658 = vmul.f32 %v1656, %v424
    %v1659 = vstv %s262
    %v1660 = vmul.f32 %v1659, %v1657
    %v1661 = vmul.f32 %v1659, %v1658
    %v1662 = vadd.f32 %v1634, %v1660
    %v1663 = vadd.f32 %v1635, %v1661
    %v1664 = vstv %s298
    %v1665 = vmul.f32 %v1664, %v1657
    %v1666 = vmul.f32 %v1664, %v1658
    %v1667 = vadd.f32 %v1639, %v1665
    %v1668 = vadd.f32 %v1640, %v1666
    %v1669 = vstv %s334
    %v1670 = vmul.f32 %v1669, %v1657
    %v1671 = vmul.f32 %v1669, %v1658
    %v1672 = vadd.f32 %v1644, %v1670
    %v1673 = vadd.f32 %v1645, %v1671
    %v1674 = vstv %s370
    %v1675 = vmul.f32 %v1674, %v1657
    %v1676 = vmul.f32 %v1674, %v1658
    %v1677 = vadd.f32 %v1649, %v1675
    %v1678 = vadd.f32 %v1650, %v1676
    %1679 = vrot.lane.b32.xlu0 %v1425, 17
    %v1680 = vpop.permute.xlu0 %1679
    %1681 = vrot.lane.b32.xlu0 %v1426, 17
    %v1682 = vpop.permute.xlu0 %1681
    %v1683 = vsel %vm443, %v1680, %v1682
    %v1684 = vsel %vm443, %v1682, %v1680
    %v1685 = vmul.f32 %v1684, %v409
    %v1686 = vmul.f32 %v1683, %v410
    %v1687 = vstv %s263
    %v1688 = vmul.f32 %v1687, %v1685
    %v1689 = vmul.f32 %v1687, %v1686
    %v1690 = vadd.f32 %v1662, %v1688
    %v1691 = vadd.f32 %v1663, %v1689
    %v1692 = vstv %s299
    %v1693 = vmul.f32 %v1692, %v1685
    %v1694 = vmul.f32 %v1692, %v1686
    %v1695 = vadd.f32 %v1667, %v1693
    %v1696 = vadd.f32 %v1668, %v1694
    %v1697 = vstv %s335
    %v1698 = vmul.f32 %v1697, %v1685
    %v1699 = vmul.f32 %v1697, %v1686
    %v1700 = vadd.f32 %v1672, %v1698
    %v1701 = vadd.f32 %v1673, %v1699
    %v1702 = vstv %s371
    %v1703 = vmul.f32 %v1702, %v1685
    %v1704 = vmul.f32 %v1702, %v1686
    %v1705 = vadd.f32 %v1677, %v1703
    %v1706 = vadd.f32 %v1678, %v1704
    %1707 = vrot.lane.b32.xlu0 %v1425, 16
    %v1708 = vpop.permute.xlu0 %1707
    %1709 = vrot.lane.b32.xlu0 %v1426, 16
    %v1710 = vpop.permute.xlu0 %1709
    %v1711 = vsel %vm472, %v1708, %v1710
    %v1712 = vsel %vm472, %v1710, %v1708
    %v1713 = vmul.f32 %v1712, %v411
    %v1714 = vmul.f32 %v1711, %v412
    %v1715 = vstv %s264
    %v1716 = vmul.f32 %v1715, %v1713
    %v1717 = vmul.f32 %v1715, %v1714
    %v1718 = vadd.f32 %v1690, %v1716
    %v1719 = vadd.f32 %v1691, %v1717
    %v1720 = vstv %s300
    %v1721 = vmul.f32 %v1720, %v1713
    %v1722 = vmul.f32 %v1720, %v1714
    %v1723 = vadd.f32 %v1695, %v1721
    %v1724 = vadd.f32 %v1696, %v1722
    %v1725 = vstv %s336
    %v1726 = vmul.f32 %v1725, %v1713
    %v1727 = vmul.f32 %v1725, %v1714
    %v1728 = vadd.f32 %v1700, %v1726
    %v1729 = vadd.f32 %v1701, %v1727
    %v1730 = vstv %s372
    %v1731 = vmul.f32 %v1730, %v1713
    %v1732 = vmul.f32 %v1730, %v1714
    %v1733 = vadd.f32 %v1705, %v1731
    %v1734 = vadd.f32 %v1706, %v1732
    %1735 = vrot.lane.b32.xlu0 %v1425, 15
    %v1736 = vpop.permute.xlu0 %1735
    %1737 = vrot.lane.b32.xlu0 %v1426, 15
    %v1738 = vpop.permute.xlu0 %1737
    %v1739 = vsel %vm501, %v1736, %v1738
    %v1740 = vsel %vm501, %v1738, %v1736
    %v1741 = vmul.f32 %v1740, %v413
    %v1742 = vmul.f32 %v1739, %v414
    %v1743 = vstv %s265
    %v1744 = vmul.f32 %v1743, %v1741
    %v1745 = vmul.f32 %v1743, %v1742
    %v1746 = vadd.f32 %v1718, %v1744
    %v1747 = vadd.f32 %v1719, %v1745
    %v1748 = vstv %s301
    %v1749 = vmul.f32 %v1748, %v1741
    %v1750 = vmul.f32 %v1748, %v1742
    %v1751 = vadd.f32 %v1723, %v1749
    %v1752 = vadd.f32 %v1724, %v1750
    %v1753 = vstv %s337
    %v1754 = vmul.f32 %v1753, %v1741
    %v1755 = vmul.f32 %v1753, %v1742
    %v1756 = vadd.f32 %v1728, %v1754
    %v1757 = vadd.f32 %v1729, %v1755
    %v1758 = vstv %s373
    %v1759 = vmul.f32 %v1758, %v1741
    %v1760 = vmul.f32 %v1758, %v1742
    %v1761 = vadd.f32 %v1733, %v1759
    %v1762 = vadd.f32 %v1734, %v1760
    %1763 = vrot.lane.b32.xlu0 %v1425, 1
    %v1764 = vpop.permute.xlu0 %1763
    %1765 = vrot.lane.b32.xlu0 %v1426, 1
    %v1766 = vpop.permute.xlu0 %1765
    %v1767 = vsel %vm530, %v1764, %v1766
    %v1768 = vsel %vm530, %v1766, %v1764
    %v1769 = vmul.f32 %v1768, %v415
    %v1770 = vmul.f32 %v1767, %v416
    %v1771 = vstv %s266
    %v1772 = vmul.f32 %v1771, %v1769
    %v1773 = vmul.f32 %v1771, %v1770
    %v1774 = vadd.f32 %v1746, %v1772
    %v1775 = vadd.f32 %v1747, %v1773
    %v1776 = vstv %s302
    %v1777 = vmul.f32 %v1776, %v1769
    %v1778 = vmul.f32 %v1776, %v1770
    %v1779 = vadd.f32 %v1751, %v1777
    %v1780 = vadd.f32 %v1752, %v1778
    %v1781 = vstv %s338
    %v1782 = vmul.f32 %v1781, %v1769
    %v1783 = vmul.f32 %v1781, %v1770
    %v1784 = vadd.f32 %v1756, %v1782
    %v1785 = vadd.f32 %v1757, %v1783
    %v1786 = vstv %s374
    %v1787 = vmul.f32 %v1786, %v1769
    %v1788 = vmul.f32 %v1786, %v1770
    %v1789 = vadd.f32 %v1761, %v1787
    %v1790 = vadd.f32 %v1762, %v1788
    %v1791 = vstv %s267
    %v1792 = vmul.f32 %v1791, %v1425
    %v1793 = vmul.f32 %v1791, %v1426
    %v1794 = vadd.f32 %v1774, %v1792
    %v1795 = vadd.f32 %v1775, %v1793
    %v1796 = vstv %s303
    %v1797 = vmul.f32 %v1796, %v1425
    %v1798 = vmul.f32 %v1796, %v1426
    %v1799 = vadd.f32 %v1779, %v1797
    %v1800 = vadd.f32 %v1780, %v1798
    %v1801 = vstv %s339
    %v1802 = vmul.f32 %v1801, %v1425
    %v1803 = vmul.f32 %v1801, %v1426
    %v1804 = vadd.f32 %v1784, %v1802
    %v1805 = vadd.f32 %v1785, %v1803
    %v1806 = vstv %s375
    %v1807 = vmul.f32 %v1806, %v1425
    %v1808 = vmul.f32 %v1806, %v1426
    %v1809 = vadd.f32 %v1789, %v1807
    %v1810 = vadd.f32 %v1790, %v1808
    %1811 = vrot.lane.b32.xlu0 %v1425, 127
    %v1812 = vpop.permute.xlu0 %1811
    %1813 = vrot.lane.b32.xlu0 %v1426, 127
    %v1814 = vpop.permute.xlu0 %1813
    %v1815 = vsel %vm579, %v1812, %v1814
    %v1816 = vsel %vm579, %v1814, %v1812
    %v1817 = vmul.f32 %v1815, %v417
    %v1818 = vmul.f32 %v1816, %v418
    %v1819 = vstv %s268
    %v1820 = vmul.f32 %v1819, %v1817
    %v1821 = vmul.f32 %v1819, %v1818
    %v1822 = vadd.f32 %v1794, %v1820
    %v1823 = vadd.f32 %v1795, %v1821
    %v1824 = vstv %s304
    %v1825 = vmul.f32 %v1824, %v1817
    %v1826 = vmul.f32 %v1824, %v1818
    %v1827 = vadd.f32 %v1799, %v1825
    %v1828 = vadd.f32 %v1800, %v1826
    %v1829 = vstv %s340
    %v1830 = vmul.f32 %v1829, %v1817
    %v1831 = vmul.f32 %v1829, %v1818
    %v1832 = vadd.f32 %v1804, %v1830
    %v1833 = vadd.f32 %v1805, %v1831
    %v1834 = vstv %s376
    %v1835 = vmul.f32 %v1834, %v1817
    %v1836 = vmul.f32 %v1834, %v1818
    %v1837 = vadd.f32 %v1809, %v1835
    %v1838 = vadd.f32 %v1810, %v1836
    %1839 = vrot.lane.b32.xlu0 %v1425, 113
    %v1840 = vpop.permute.xlu0 %1839
    %1841 = vrot.lane.b32.xlu0 %v1426, 113
    %v1842 = vpop.permute.xlu0 %1841
    %v1843 = vsel %vm608, %v1840, %v1842
    %v1844 = vsel %vm608, %v1842, %v1840
    %v1845 = vmul.f32 %v1843, %v419
    %v1846 = vmul.f32 %v1844, %v420
    %v1847 = vstv %s269
    %v1848 = vmul.f32 %v1847, %v1845
    %v1849 = vmul.f32 %v1847, %v1846
    %v1850 = vadd.f32 %v1822, %v1848
    %v1851 = vadd.f32 %v1823, %v1849
    %v1852 = vstv %s305
    %v1853 = vmul.f32 %v1852, %v1845
    %v1854 = vmul.f32 %v1852, %v1846
    %v1855 = vadd.f32 %v1827, %v1853
    %v1856 = vadd.f32 %v1828, %v1854
    %v1857 = vstv %s341
    %v1858 = vmul.f32 %v1857, %v1845
    %v1859 = vmul.f32 %v1857, %v1846
    %v1860 = vadd.f32 %v1832, %v1858
    %v1861 = vadd.f32 %v1833, %v1859
    %v1862 = vstv %s377
    %v1863 = vmul.f32 %v1862, %v1845
    %v1864 = vmul.f32 %v1862, %v1846
    %v1865 = vadd.f32 %v1837, %v1863
    %v1866 = vadd.f32 %v1838, %v1864
    %1867 = vrot.lane.b32.xlu0 %v1425, 112
    %v1868 = vpop.permute.xlu0 %1867
    %1869 = vrot.lane.b32.xlu0 %v1426, 112
    %v1870 = vpop.permute.xlu0 %1869
    %v1871 = vsel %vm637, %v1868, %v1870
    %v1872 = vsel %vm637, %v1870, %v1868
    %v1873 = vmul.f32 %v1871, %v421
    %v1874 = vmul.f32 %v1872, %v422
    %v1875 = vstv %s270
    %v1876 = vmul.f32 %v1875, %v1873
    %v1877 = vmul.f32 %v1875, %v1874
    %v1878 = vadd.f32 %v1850, %v1876
    %v1879 = vadd.f32 %v1851, %v1877
    %v1880 = vstv %s306
    %v1881 = vmul.f32 %v1880, %v1873
    %v1882 = vmul.f32 %v1880, %v1874
    %v1883 = vadd.f32 %v1855, %v1881
    %v1884 = vadd.f32 %v1856, %v1882
    %v1885 = vstv %s342
    %v1886 = vmul.f32 %v1885, %v1873
    %v1887 = vmul.f32 %v1885, %v1874
    %v1888 = vadd.f32 %v1860, %v1886
    %v1889 = vadd.f32 %v1861, %v1887
    %v1890 = vstv %s378
    %v1891 = vmul.f32 %v1890, %v1873
    %v1892 = vmul.f32 %v1890, %v1874
    %v1893 = vadd.f32 %v1865, %v1891
    %v1894 = vadd.f32 %v1866, %v1892
    %1895 = vrot.lane.b32.xlu0 %v1425, 111
    %v1896 = vpop.permute.xlu0 %1895
    %1897 = vrot.lane.b32.xlu0 %v1426, 111
    %v1898 = vpop.permute.xlu0 %1897
    %v1899 = vsel %vm666, %v1896, %v1898
    %v1900 = vsel %vm666, %v1898, %v1896
    %v1901 = vmul.f32 %v1899, %v423
    %v1902 = vmul.f32 %v1900, %v424
    %v1903 = vstv %s271
    %v1904 = vmul.f32 %v1903, %v1901
    %v1905 = vmul.f32 %v1903, %v1902
    %v1906 = vadd.f32 %v1878, %v1904
    %v1907 = vadd.f32 %v1879, %v1905
    %v1908 = vstv %s307
    %v1909 = vmul.f32 %v1908, %v1901
    %v1910 = vmul.f32 %v1908, %v1902
    %v1911 = vadd.f32 %v1883, %v1909
    %v1912 = vadd.f32 %v1884, %v1910
    %v1913 = vstv %s343
    %v1914 = vmul.f32 %v1913, %v1901
    %v1915 = vmul.f32 %v1913, %v1902
    %v1916 = vadd.f32 %v1888, %v1914
    %v1917 = vadd.f32 %v1889, %v1915
    %v1918 = vstv %s379
    %v1919 = vmul.f32 %v1918, %v1901
    %v1920 = vmul.f32 %v1918, %v1902
    %v1921 = vadd.f32 %v1893, %v1919
    %v1922 = vadd.f32 %v1894, %v1920
    %1923 = vrot.lane.b32.xlu0 %v1427, 17
    %v1924 = vpop.permute.xlu0 %1923
    %1925 = vrot.lane.b32.xlu0 %v1428, 17
    %v1926 = vpop.permute.xlu0 %1925
    %v1927 = vsel %vm443, %v1924, %v1926
    %v1928 = vsel %vm443, %v1926, %v1924
    %v1929 = vmul.f32 %v1928, %v409
    %v1930 = vmul.f32 %v1927, %v410
    %v1931 = vstv %s272
    %v1932 = vmul.f32 %v1931, %v1929
    %v1933 = vmul.f32 %v1931, %v1930
    %v1934 = vadd.f32 %v1906, %v1932
    %v1935 = vadd.f32 %v1907, %v1933
    %v1936 = vstv %s308
    %v1937 = vmul.f32 %v1936, %v1929
    %v1938 = vmul.f32 %v1936, %v1930
    %v1939 = vadd.f32 %v1911, %v1937
    %v1940 = vadd.f32 %v1912, %v1938
    %v1941 = vstv %s344
    %v1942 = vmul.f32 %v1941, %v1929
    %v1943 = vmul.f32 %v1941, %v1930
    %v1944 = vadd.f32 %v1916, %v1942
    %v1945 = vadd.f32 %v1917, %v1943
    %v1946 = vstv %s380
    %v1947 = vmul.f32 %v1946, %v1929
    %v1948 = vmul.f32 %v1946, %v1930
    %v1949 = vadd.f32 %v1921, %v1947
    %v1950 = vadd.f32 %v1922, %v1948
    %1951 = vrot.lane.b32.xlu0 %v1427, 16
    %v1952 = vpop.permute.xlu0 %1951
    %1953 = vrot.lane.b32.xlu0 %v1428, 16
    %v1954 = vpop.permute.xlu0 %1953
    %v1955 = vsel %vm472, %v1952, %v1954
    %v1956 = vsel %vm472, %v1954, %v1952
    %v1957 = vmul.f32 %v1956, %v411
    %v1958 = vmul.f32 %v1955, %v412
    %v1959 = vstv %s273
    %v1960 = vmul.f32 %v1959, %v1957
    %v1961 = vmul.f32 %v1959, %v1958
    %v1962 = vadd.f32 %v1934, %v1960
    %v1963 = vadd.f32 %v1935, %v1961
    %v1964 = vstv %s309
    %v1965 = vmul.f32 %v1964, %v1957
    %v1966 = vmul.f32 %v1964, %v1958
    %v1967 = vadd.f32 %v1939, %v1965
    %v1968 = vadd.f32 %v1940, %v1966
    %v1969 = vstv %s345
    %v1970 = vmul.f32 %v1969, %v1957
    %v1971 = vmul.f32 %v1969, %v1958
    %v1972 = vadd.f32 %v1944, %v1970
    %v1973 = vadd.f32 %v1945, %v1971
    %v1974 = vstv %s381
    %v1975 = vmul.f32 %v1974, %v1957
    %v1976 = vmul.f32 %v1974, %v1958
    %v1977 = vadd.f32 %v1949, %v1975
    %v1978 = vadd.f32 %v1950, %v1976
    %1979 = vrot.lane.b32.xlu0 %v1427, 15
    %v1980 = vpop.permute.xlu0 %1979
    %1981 = vrot.lane.b32.xlu0 %v1428, 15
    %v1982 = vpop.permute.xlu0 %1981
    %v1983 = vsel %vm501, %v1980, %v1982
    %v1984 = vsel %vm501, %v1982, %v1980
    %v1985 = vmul.f32 %v1984, %v413
    %v1986 = vmul.f32 %v1983, %v414
    %v1987 = vstv %s274
    %v1988 = vmul.f32 %v1987, %v1985
    %v1989 = vmul.f32 %v1987, %v1986
    %v1990 = vadd.f32 %v1962, %v1988
    %v1991 = vadd.f32 %v1963, %v1989
    %v1992 = vstv %s310
    %v1993 = vmul.f32 %v1992, %v1985
    %v1994 = vmul.f32 %v1992, %v1986
    %v1995 = vadd.f32 %v1967, %v1993
    %v1996 = vadd.f32 %v1968, %v1994
    %v1997 = vstv %s346
    %v1998 = vmul.f32 %v1997, %v1985
    %v1999 = vmul.f32 %v1997, %v1986
    %v2000 = vadd.f32 %v1972, %v1998
    %v2001 = vadd.f32 %v1973, %v1999
    %v2002 = vstv %s382
    %v2003 = vmul.f32 %v2002, %v1985
    %v2004 = vmul.f32 %v2002, %v1986
    %v2005 = vadd.f32 %v1977, %v2003
    %v2006 = vadd.f32 %v1978, %v2004
    %2007 = vrot.lane.b32.xlu0 %v1427, 1
    %v2008 = vpop.permute.xlu0 %2007
    %2009 = vrot.lane.b32.xlu0 %v1428, 1
    %v2010 = vpop.permute.xlu0 %2009
    %v2011 = vsel %vm530, %v2008, %v2010
    %v2012 = vsel %vm530, %v2010, %v2008
    %v2013 = vmul.f32 %v2012, %v415
    %v2014 = vmul.f32 %v2011, %v416
    %v2015 = vstv %s275
    %v2016 = vmul.f32 %v2015, %v2013
    %v2017 = vmul.f32 %v2015, %v2014
    %v2018 = vadd.f32 %v1990, %v2016
    %v2019 = vadd.f32 %v1991, %v2017
    %v2020 = vstv %s311
    %v2021 = vmul.f32 %v2020, %v2013
    %v2022 = vmul.f32 %v2020, %v2014
    %v2023 = vadd.f32 %v1995, %v2021
    %v2024 = vadd.f32 %v1996, %v2022
    %v2025 = vstv %s347
    %v2026 = vmul.f32 %v2025, %v2013
    %v2027 = vmul.f32 %v2025, %v2014
    %v2028 = vadd.f32 %v2000, %v2026
    %v2029 = vadd.f32 %v2001, %v2027
    %v2030 = vstv %s383
    %v2031 = vmul.f32 %v2030, %v2013
    %v2032 = vmul.f32 %v2030, %v2014
    %v2033 = vadd.f32 %v2005, %v2031
    %v2034 = vadd.f32 %v2006, %v2032
    %v2035 = vstv %s276
    %v2036 = vmul.f32 %v2035, %v1427
    %v2037 = vmul.f32 %v2035, %v1428
    %v2038 = vadd.f32 %v2018, %v2036
    %v2039 = vadd.f32 %v2019, %v2037
    %v2040 = vstv %s312
    %v2041 = vmul.f32 %v2040, %v1427
    %v2042 = vmul.f32 %v2040, %v1428
    %v2043 = vadd.f32 %v2023, %v2041
    %v2044 = vadd.f32 %v2024, %v2042
    %v2045 = vstv %s348
    %v2046 = vmul.f32 %v2045, %v1427
    %v2047 = vmul.f32 %v2045, %v1428
    %v2048 = vadd.f32 %v2028, %v2046
    %v2049 = vadd.f32 %v2029, %v2047
    %v2050 = vstv %s384
    %v2051 = vmul.f32 %v2050, %v1427
    %v2052 = vmul.f32 %v2050, %v1428
    %v2053 = vadd.f32 %v2033, %v2051
    %v2054 = vadd.f32 %v2034, %v2052
    %2055 = vrot.lane.b32.xlu0 %v1427, 127
    %v2056 = vpop.permute.xlu0 %2055
    %2057 = vrot.lane.b32.xlu0 %v1428, 127
    %v2058 = vpop.permute.xlu0 %2057
    %v2059 = vsel %vm579, %v2056, %v2058
    %v2060 = vsel %vm579, %v2058, %v2056
    %v2061 = vmul.f32 %v2059, %v417
    %v2062 = vmul.f32 %v2060, %v418
    %v2063 = vstv %s277
    %v2064 = vmul.f32 %v2063, %v2061
    %v2065 = vmul.f32 %v2063, %v2062
    %v2066 = vadd.f32 %v2038, %v2064
    %v2067 = vadd.f32 %v2039, %v2065
    %v2068 = vstv %s313
    %v2069 = vmul.f32 %v2068, %v2061
    %v2070 = vmul.f32 %v2068, %v2062
    %v2071 = vadd.f32 %v2043, %v2069
    %v2072 = vadd.f32 %v2044, %v2070
    %v2073 = vstv %s349
    %v2074 = vmul.f32 %v2073, %v2061
    %v2075 = vmul.f32 %v2073, %v2062
    %v2076 = vadd.f32 %v2048, %v2074
    %v2077 = vadd.f32 %v2049, %v2075
    %v2078 = vstv %s385
    %v2079 = vmul.f32 %v2078, %v2061
    %v2080 = vmul.f32 %v2078, %v2062
    %v2081 = vadd.f32 %v2053, %v2079
    %v2082 = vadd.f32 %v2054, %v2080
    %2083 = vrot.lane.b32.xlu0 %v1427, 113
    %v2084 = vpop.permute.xlu0 %2083
    %2085 = vrot.lane.b32.xlu0 %v1428, 113
    %v2086 = vpop.permute.xlu0 %2085
    %v2087 = vsel %vm608, %v2084, %v2086
    %v2088 = vsel %vm608, %v2086, %v2084
    %v2089 = vmul.f32 %v2087, %v419
    %v2090 = vmul.f32 %v2088, %v420
    %v2091 = vstv %s278
    %v2092 = vmul.f32 %v2091, %v2089
    %v2093 = vmul.f32 %v2091, %v2090
    %v2094 = vadd.f32 %v2066, %v2092
    %v2095 = vadd.f32 %v2067, %v2093
    %v2096 = vstv %s314
    %v2097 = vmul.f32 %v2096, %v2089
    %v2098 = vmul.f32 %v2096, %v2090
    %v2099 = vadd.f32 %v2071, %v2097
    %v2100 = vadd.f32 %v2072, %v2098
    %v2101 = vstv %s350
    %v2102 = vmul.f32 %v2101, %v2089
    %v2103 = vmul.f32 %v2101, %v2090
    %v2104 = vadd.f32 %v2076, %v2102
    %v2105 = vadd.f32 %v2077, %v2103
    %v2106 = vstv %s386
    %v2107 = vmul.f32 %v2106, %v2089
    %v2108 = vmul.f32 %v2106, %v2090
    %v2109 = vadd.f32 %v2081, %v2107
    %v2110 = vadd.f32 %v2082, %v2108
    %2111 = vrot.lane.b32.xlu0 %v1427, 112
    %v2112 = vpop.permute.xlu0 %2111
    %2113 = vrot.lane.b32.xlu0 %v1428, 112
    %v2114 = vpop.permute.xlu0 %2113
    %v2115 = vsel %vm637, %v2112, %v2114
    %v2116 = vsel %vm637, %v2114, %v2112
    %v2117 = vmul.f32 %v2115, %v421
    %v2118 = vmul.f32 %v2116, %v422
    %v2119 = vstv %s279
    %v2120 = vmul.f32 %v2119, %v2117
    %v2121 = vmul.f32 %v2119, %v2118
    %v2122 = vadd.f32 %v2094, %v2120
    %v2123 = vadd.f32 %v2095, %v2121
    %v2124 = vstv %s315
    %v2125 = vmul.f32 %v2124, %v2117
    %v2126 = vmul.f32 %v2124, %v2118
    %v2127 = vadd.f32 %v2099, %v2125
    %v2128 = vadd.f32 %v2100, %v2126
    %v2129 = vstv %s351
    %v2130 = vmul.f32 %v2129, %v2117
    %v2131 = vmul.f32 %v2129, %v2118
    %v2132 = vadd.f32 %v2104, %v2130
    %v2133 = vadd.f32 %v2105, %v2131
    %v2134 = vstv %s387
    %v2135 = vmul.f32 %v2134, %v2117
    %v2136 = vmul.f32 %v2134, %v2118
    %v2137 = vadd.f32 %v2109, %v2135
    %v2138 = vadd.f32 %v2110, %v2136
    %2139 = vrot.lane.b32.xlu0 %v1427, 111
    %v2140 = vpop.permute.xlu0 %2139
    %2141 = vrot.lane.b32.xlu0 %v1428, 111
    %v2142 = vpop.permute.xlu0 %2141
    %v2143 = vsel %vm666, %v2140, %v2142
    %v2144 = vsel %vm666, %v2142, %v2140
    %v2145 = vmul.f32 %v2143, %v423
    %v2146 = vmul.f32 %v2144, %v424
    %v2147 = vstv %s280
    %v2148 = vmul.f32 %v2147, %v2145
    %v2149 = vmul.f32 %v2147, %v2146
    %v2150 = vadd.f32 %v2122, %v2148
    %v2151 = vadd.f32 %v2123, %v2149
    %v2152 = vstv %s316
    %v2153 = vmul.f32 %v2152, %v2145
    %v2154 = vmul.f32 %v2152, %v2146
    %v2155 = vadd.f32 %v2127, %v2153
    %v2156 = vadd.f32 %v2128, %v2154
    %v2157 = vstv %s352
    %v2158 = vmul.f32 %v2157, %v2145
    %v2159 = vmul.f32 %v2157, %v2146
    %v2160 = vadd.f32 %v2132, %v2158
    %v2161 = vadd.f32 %v2133, %v2159
    %v2162 = vstv %s388
    %v2163 = vmul.f32 %v2162, %v2145
    %v2164 = vmul.f32 %v2162, %v2146
    %v2165 = vadd.f32 %v2137, %v2163
    %v2166 = vadd.f32 %v2138, %v2164
    %2167 = vrot.lane.b32.xlu0 %v1429, 17
    %v2168 = vpop.permute.xlu0 %2167
    %2169 = vrot.lane.b32.xlu0 %v1430, 17
    %v2170 = vpop.permute.xlu0 %2169
    %v2171 = vsel %vm443, %v2168, %v2170
    %v2172 = vsel %vm443, %v2170, %v2168
    %v2173 = vmul.f32 %v2172, %v409
    %v2174 = vmul.f32 %v2171, %v410
    %v2175 = vstv %s281
    %v2176 = vmul.f32 %v2175, %v2173
    %v2177 = vmul.f32 %v2175, %v2174
    %v2178 = vadd.f32 %v2150, %v2176
    %v2179 = vadd.f32 %v2151, %v2177
    %v2180 = vstv %s317
    %v2181 = vmul.f32 %v2180, %v2173
    %v2182 = vmul.f32 %v2180, %v2174
    %v2183 = vadd.f32 %v2155, %v2181
    %v2184 = vadd.f32 %v2156, %v2182
    %v2185 = vstv %s353
    %v2186 = vmul.f32 %v2185, %v2173
    %v2187 = vmul.f32 %v2185, %v2174
    %v2188 = vadd.f32 %v2160, %v2186
    %v2189 = vadd.f32 %v2161, %v2187
    %v2190 = vstv %s389
    %v2191 = vmul.f32 %v2190, %v2173
    %v2192 = vmul.f32 %v2190, %v2174
    %v2193 = vadd.f32 %v2165, %v2191
    %v2194 = vadd.f32 %v2166, %v2192
    %2195 = vrot.lane.b32.xlu0 %v1429, 16
    %v2196 = vpop.permute.xlu0 %2195
    %2197 = vrot.lane.b32.xlu0 %v1430, 16
    %v2198 = vpop.permute.xlu0 %2197
    %v2199 = vsel %vm472, %v2196, %v2198
    %v2200 = vsel %vm472, %v2198, %v2196
    %v2201 = vmul.f32 %v2200, %v411
    %v2202 = vmul.f32 %v2199, %v412
    %v2203 = vstv %s282
    %v2204 = vmul.f32 %v2203, %v2201
    %v2205 = vmul.f32 %v2203, %v2202
    %v2206 = vadd.f32 %v2178, %v2204
    %v2207 = vadd.f32 %v2179, %v2205
    %v2208 = vstv %s318
    %v2209 = vmul.f32 %v2208, %v2201
    %v2210 = vmul.f32 %v2208, %v2202
    %v2211 = vadd.f32 %v2183, %v2209
    %v2212 = vadd.f32 %v2184, %v2210
    %v2213 = vstv %s354
    %v2214 = vmul.f32 %v2213, %v2201
    %v2215 = vmul.f32 %v2213, %v2202
    %v2216 = vadd.f32 %v2188, %v2214
    %v2217 = vadd.f32 %v2189, %v2215
    %v2218 = vstv %s390
    %v2219 = vmul.f32 %v2218, %v2201
    %v2220 = vmul.f32 %v2218, %v2202
    %v2221 = vadd.f32 %v2193, %v2219
    %v2222 = vadd.f32 %v2194, %v2220
    %2223 = vrot.lane.b32.xlu0 %v1429, 15
    %v2224 = vpop.permute.xlu0 %2223
    %2225 = vrot.lane.b32.xlu0 %v1430, 15
    %v2226 = vpop.permute.xlu0 %2225
    %v2227 = vsel %vm501, %v2224, %v2226
    %v2228 = vsel %vm501, %v2226, %v2224
    %v2229 = vmul.f32 %v2228, %v413
    %v2230 = vmul.f32 %v2227, %v414
    %v2231 = vstv %s283
    %v2232 = vmul.f32 %v2231, %v2229
    %v2233 = vmul.f32 %v2231, %v2230
    %v2234 = vadd.f32 %v2206, %v2232
    %v2235 = vadd.f32 %v2207, %v2233
    %v2236 = vstv %s319
    %v2237 = vmul.f32 %v2236, %v2229
    %v2238 = vmul.f32 %v2236, %v2230
    %v2239 = vadd.f32 %v2211, %v2237
    %v2240 = vadd.f32 %v2212, %v2238
    %v2241 = vstv %s355
    %v2242 = vmul.f32 %v2241, %v2229
    %v2243 = vmul.f32 %v2241, %v2230
    %v2244 = vadd.f32 %v2216, %v2242
    %v2245 = vadd.f32 %v2217, %v2243
    %v2246 = vstv %s391
    %v2247 = vmul.f32 %v2246, %v2229
    %v2248 = vmul.f32 %v2246, %v2230
    %v2249 = vadd.f32 %v2221, %v2247
    %v2250 = vadd.f32 %v2222, %v2248
    %2251 = vrot.lane.b32.xlu0 %v1429, 1
    %v2252 = vpop.permute.xlu0 %2251
    %2253 = vrot.lane.b32.xlu0 %v1430, 1
    %v2254 = vpop.permute.xlu0 %2253
    %v2255 = vsel %vm530, %v2252, %v2254
    %v2256 = vsel %vm530, %v2254, %v2252
    %v2257 = vmul.f32 %v2256, %v415
    %v2258 = vmul.f32 %v2255, %v416
    %v2259 = vstv %s284
    %v2260 = vmul.f32 %v2259, %v2257
    %v2261 = vmul.f32 %v2259, %v2258
    %v2262 = vadd.f32 %v2234, %v2260
    %v2263 = vadd.f32 %v2235, %v2261
    %v2264 = vstv %s320
    %v2265 = vmul.f32 %v2264, %v2257
    %v2266 = vmul.f32 %v2264, %v2258
    %v2267 = vadd.f32 %v2239, %v2265
    %v2268 = vadd.f32 %v2240, %v2266
    %v2269 = vstv %s356
    %v2270 = vmul.f32 %v2269, %v2257
    %v2271 = vmul.f32 %v2269, %v2258
    %v2272 = vadd.f32 %v2244, %v2270
    %v2273 = vadd.f32 %v2245, %v2271
    %v2274 = vstv %s392
    %v2275 = vmul.f32 %v2274, %v2257
    %v2276 = vmul.f32 %v2274, %v2258
    %v2277 = vadd.f32 %v2249, %v2275
    %v2278 = vadd.f32 %v2250, %v2276
    %v2279 = vstv %s285
    %v2280 = vmul.f32 %v2279, %v1429
    %v2281 = vmul.f32 %v2279, %v1430
    %v2282 = vadd.f32 %v2262, %v2280
    %v2283 = vadd.f32 %v2263, %v2281
    %v2284 = vstv %s321
    %v2285 = vmul.f32 %v2284, %v1429
    %v2286 = vmul.f32 %v2284, %v1430
    %v2287 = vadd.f32 %v2267, %v2285
    %v2288 = vadd.f32 %v2268, %v2286
    %v2289 = vstv %s357
    %v2290 = vmul.f32 %v2289, %v1429
    %v2291 = vmul.f32 %v2289, %v1430
    %v2292 = vadd.f32 %v2272, %v2290
    %v2293 = vadd.f32 %v2273, %v2291
    %v2294 = vstv %s393
    %v2295 = vmul.f32 %v2294, %v1429
    %v2296 = vmul.f32 %v2294, %v1430
    %v2297 = vadd.f32 %v2277, %v2295
    %v2298 = vadd.f32 %v2278, %v2296
    %2299 = vrot.lane.b32.xlu0 %v1429, 127
    %v2300 = vpop.permute.xlu0 %2299
    %2301 = vrot.lane.b32.xlu0 %v1430, 127
    %v2302 = vpop.permute.xlu0 %2301
    %v2303 = vsel %vm579, %v2300, %v2302
    %v2304 = vsel %vm579, %v2302, %v2300
    %v2305 = vmul.f32 %v2303, %v417
    %v2306 = vmul.f32 %v2304, %v418
    %v2307 = vstv %s286
    %v2308 = vmul.f32 %v2307, %v2305
    %v2309 = vmul.f32 %v2307, %v2306
    %v2310 = vadd.f32 %v2282, %v2308
    %v2311 = vadd.f32 %v2283, %v2309
    %v2312 = vstv %s322
    %v2313 = vmul.f32 %v2312, %v2305
    %v2314 = vmul.f32 %v2312, %v2306
    %v2315 = vadd.f32 %v2287, %v2313
    %v2316 = vadd.f32 %v2288, %v2314
    %v2317 = vstv %s358
    %v2318 = vmul.f32 %v2317, %v2305
    %v2319 = vmul.f32 %v2317, %v2306
    %v2320 = vadd.f32 %v2292, %v2318
    %v2321 = vadd.f32 %v2293, %v2319
    %v2322 = vstv %s394
    %v2323 = vmul.f32 %v2322, %v2305
    %v2324 = vmul.f32 %v2322, %v2306
    %v2325 = vadd.f32 %v2297, %v2323
    %v2326 = vadd.f32 %v2298, %v2324
    %2327 = vrot.lane.b32.xlu0 %v1429, 113
    %v2328 = vpop.permute.xlu0 %2327
    %2329 = vrot.lane.b32.xlu0 %v1430, 113
    %v2330 = vpop.permute.xlu0 %2329
    %v2331 = vsel %vm608, %v2328, %v2330
    %v2332 = vsel %vm608, %v2330, %v2328
    %v2333 = vmul.f32 %v2331, %v419
    %v2334 = vmul.f32 %v2332, %v420
    %v2335 = vstv %s287
    %v2336 = vmul.f32 %v2335, %v2333
    %v2337 = vmul.f32 %v2335, %v2334
    %v2338 = vadd.f32 %v2310, %v2336
    %v2339 = vadd.f32 %v2311, %v2337
    %v2340 = vstv %s323
    %v2341 = vmul.f32 %v2340, %v2333
    %v2342 = vmul.f32 %v2340, %v2334
    %v2343 = vadd.f32 %v2315, %v2341
    %v2344 = vadd.f32 %v2316, %v2342
    %v2345 = vstv %s359
    %v2346 = vmul.f32 %v2345, %v2333
    %v2347 = vmul.f32 %v2345, %v2334
    %v2348 = vadd.f32 %v2320, %v2346
    %v2349 = vadd.f32 %v2321, %v2347
    %v2350 = vstv %s395
    %v2351 = vmul.f32 %v2350, %v2333
    %v2352 = vmul.f32 %v2350, %v2334
    %v2353 = vadd.f32 %v2325, %v2351
    %v2354 = vadd.f32 %v2326, %v2352
    %2355 = vrot.lane.b32.xlu0 %v1429, 112
    %v2356 = vpop.permute.xlu0 %2355
    %2357 = vrot.lane.b32.xlu0 %v1430, 112
    %v2358 = vpop.permute.xlu0 %2357
    %v2359 = vsel %vm637, %v2356, %v2358
    %v2360 = vsel %vm637, %v2358, %v2356
    %v2361 = vmul.f32 %v2359, %v421
    %v2362 = vmul.f32 %v2360, %v422
    %v2363 = vstv %s288
    %v2364 = vmul.f32 %v2363, %v2361
    %v2365 = vmul.f32 %v2363, %v2362
    %v2366 = vadd.f32 %v2338, %v2364
    %v2367 = vadd.f32 %v2339, %v2365
    %v2368 = vstv %s324
    %v2369 = vmul.f32 %v2368, %v2361
    %v2370 = vmul.f32 %v2368, %v2362
    %v2371 = vadd.f32 %v2343, %v2369
    %v2372 = vadd.f32 %v2344, %v2370
    %v2373 = vstv %s360
    %v2374 = vmul.f32 %v2373, %v2361
    %v2375 = vmul.f32 %v2373, %v2362
    %v2376 = vadd.f32 %v2348, %v2374
    %v2377 = vadd.f32 %v2349, %v2375
    %v2378 = vstv %s396
    %v2379 = vmul.f32 %v2378, %v2361
    %v2380 = vmul.f32 %v2378, %v2362
    %v2381 = vadd.f32 %v2353, %v2379
    %v2382 = vadd.f32 %v2354, %v2380
    %2383 = vrot.lane.b32.xlu0 %v1429, 111
    %v2384 = vpop.permute.xlu0 %2383
    %2385 = vrot.lane.b32.xlu0 %v1430, 111
    %v2386 = vpop.permute.xlu0 %2385
    %v2387 = vsel %vm666, %v2384, %v2386
    %v2388 = vsel %vm666, %v2386, %v2384
    %v2389 = vmul.f32 %v2387, %v423
    %v2390 = vmul.f32 %v2388, %v424
    %v2391 = vstv %s289
    %v2392 = vmul.f32 %v2391, %v2389
    %v2393 = vmul.f32 %v2391, %v2390
    %v2394 = vadd.f32 %v2366, %v2392
    %v2395 = vadd.f32 %v2367, %v2393
    %v2396 = vstv %s325
    %v2397 = vmul.f32 %v2396, %v2389
    %v2398 = vmul.f32 %v2396, %v2390
    %v2399 = vadd.f32 %v2371, %v2397
    %v2400 = vadd.f32 %v2372, %v2398
    %v2401 = vstv %s361
    %v2402 = vmul.f32 %v2401, %v2389
    %v2403 = vmul.f32 %v2401, %v2390
    %v2404 = vadd.f32 %v2376, %v2402
    %v2405 = vadd.f32 %v2377, %v2403
    %v2406 = vstv %s397
    %v2407 = vmul.f32 %v2406, %v2389
    %v2408 = vmul.f32 %v2406, %v2390
    %v2409 = vadd.f32 %v2381, %v2407
    %v2410 = vadd.f32 %v2382, %v2408
    %v2411 = vadd.f32 %v2394, %v2395
    %2412 = vadd.xlane.f32.xlu0 %v2411
    %v2413 = vpop.xlane.xlu0 %2412
    %v2414 = vmul.f32 %v2413, 0.00390625
    %v2415 = vadd.f32 %v2399, %v2400
    %2416 = vadd.xlane.f32.xlu0 %v2415
    %v2417 = vpop.xlane.xlu0 %2416
    %v2418 = vmul.f32 %v2417, 0.00390625
    %v2419 = vadd.f32 %v2404, %v2405
    %2420 = vadd.xlane.f32.xlu0 %v2419
    %v2421 = vpop.xlane.xlu0 %2420
    %v2422 = vmul.f32 %v2421, 0.00390625
    %v2423 = vadd.f32 %v2409, %v2410
    %2424 = vadd.xlane.f32.xlu0 %v2423
    %v2425 = vpop.xlane.xlu0 %2424
    %v2426 = vmul.f32 %v2425, 0.00390625
    %v2427 = vstv %s407
    %v2428 = vmul.f32 %v2427, %v2414
    %v2429 = vstv %s408
    %v2430 = vmul.f32 %v2429, %v2418
    %v2431 = vadd.f32 %v2428, %v2430
    %v2432 = vxor.u32 %v2431, 2147483648
    %v2433 = vmul.f32 %v2432, 1.442695
    %v2434 = vpow.pop %v2433
    %v2435 = vadd.f32 %v2434, 1.0
    %v2436 = vrcp.pop %v2435
    %v2437 = vmul.f32 1.0, %v2436
    %v2438 = vmul.f32 %v2394, %v2437
    %v2439 = vmul.f32 %v2395, %v2437
    %v2440 = vadd.f32 %v2438, %v425
    %v2441 = vadd.f32 %v2439, %v426
    %v2442 = vmax.f32 %v2440, 0.0
    %v2443 = vmax.f32 %v2441, 0.0
    %2444 = vst [vmem:[#allocation15] sm:$0xff] %v2442
    %2445 = vst [vmem:[#allocation15 + $0x8] sm:$0xff] %v2443
    %v2446 = vmul.f32 %v2427, %v2418
    %v2447 = vstv %s406
    %v2448 = vmul.f32 %v2447, %v2414
    %v2449 = vadd.f32 %v2446, %v2448
    %v2450 = vmul.f32 %v2429, %v2422
    %v2451 = vadd.f32 %v2449, %v2450
    %v2452 = vxor.u32 %v2451, 2147483648
    %v2453 = vmul.f32 %v2452, 1.442695
    %v2454 = vpow.pop %v2453
    %v2455 = vadd.f32 %v2454, 1.0
    %v2456 = vrcp.pop %v2455
    %v2457 = vmul.f32 1.0, %v2456
    %v2458 = vld [vmem:[#allocation2 + $0x10] sm:$0xff]
    %v2459 = vld [vmem:[#allocation2 + $0x18] sm:$0xff]
    %v2460 = vmul.f32 %v2399, %v2457
    %v2461 = vmul.f32 %v2400, %v2457
    %v2462 = vadd.f32 %v2460, %v2458
    %v2463 = vadd.f32 %v2461, %v2459
    %v2464 = vmax.f32 %v2462, 0.0
    %v2465 = vmax.f32 %v2463, 0.0
    %2466 = vst [vmem:[#allocation15 + $0x10] sm:$0xff] %v2464
    %2467 = vst [vmem:[#allocation15 + $0x18] sm:$0xff] %v2465
    %v2468 = vmul.f32 %v2427, %v2422
    %v2469 = vmul.f32 %v2447, %v2418
    %v2470 = vadd.f32 %v2468, %v2469
    %v2471 = vmul.f32 %v2429, %v2426
    %v2472 = vadd.f32 %v2470, %v2471
    %v2473 = vxor.u32 %v2472, 2147483648
    %v2474 = vmul.f32 %v2473, 1.442695
    %v2475 = vpow.pop %v2474
    %v2476 = vadd.f32 %v2475, 1.0
    %v2477 = vrcp.pop %v2476
    %v2478 = vmul.f32 1.0, %v2477
    %v2479 = vld [vmem:[#allocation2 + $0x20] sm:$0xff]
    %v2480 = vld [vmem:[#allocation2 + $0x28] sm:$0xff]
    %v2481 = vmul.f32 %v2404, %v2478
    %v2482 = vmul.f32 %v2405, %v2478
    %v2483 = vadd.f32 %v2481, %v2479
    %v2484 = vadd.f32 %v2482, %v2480
    %v2485 = vmax.f32 %v2483, 0.0
    %v2486 = vmax.f32 %v2484, 0.0
    %2487 = vst [vmem:[#allocation15 + $0x20] sm:$0xff] %v2485
    %2488 = vst [vmem:[#allocation15 + $0x28] sm:$0xff] %v2486
    %v2489 = vmul.f32 %v2427, %v2426
    %v2490 = vmul.f32 %v2447, %v2422
    %v2491 = vadd.f32 %v2489, %v2490
    %v2492 = vxor.u32 %v2491, 2147483648
    %v2493 = vmul.f32 %v2492, 1.442695
    %v2494 = vpow.pop %v2493
    %v2495 = vadd.f32 %v2494, 1.0
    %v2496 = vrcp.pop %v2495
    %v2497 = vmul.f32 1.0, %v2496
    %v2498 = vld [vmem:[#allocation2 + $0x30] sm:$0xff]
    %v2499 = vld [vmem:[#allocation2 + $0x38] sm:$0xff]
    %v2500 = vmul.f32 %v2409, %v2497
    %v2501 = vmul.f32 %v2410, %v2497
    %v2502 = vadd.f32 %v2500, %v2498
    %v2503 = vadd.f32 %v2501, %v2499
    %v2504 = vmax.f32 %v2502, 0.0
    %v2505 = vmax.f32 %v2503, 0.0
    %2506 = vst [vmem:[#allocation15 + $0x30] sm:$0xff] %v2504
    %2507 = vst [vmem:[#allocation15 + $0x38] sm:$0xff] %v2505
    // Predicated region
    $region58: #{tpu_custom_call.1} parent=1 // pred_check
      _
    $region59: #{tpu_custom_call.1} parent=1 // pred_check_branch
      %2509 = sbr.rel (0) target = $region61
    $region60: #{tpu_custom_call.1} parent=1 // pred_region
      %s2511 = ssub.s32 1024, 1024
      %2512 = vsyncadd [#allocation4], %s2511
      %s2514 = sshll.u32 [#allocation15], 4
      %s2515 = int_to_ptr.vmem [resolvable:$true] %s2514
      %2517 = dma.vmem_to_hbm [thread:$0]  %s2515, 1024, %s7, [#allocation4]
    $region61: #{tpu_custom_call.1} parent=1 // pred_fallthru
      _
    // Predicated region
    $region62: #{tpu_custom_call.1} parent=1 // pred_check
      _
    $region63: #{tpu_custom_call.1} parent=1 // pred_check_branch
      %2519 = sbr.rel (0) target = $region65
    $region64: #{tpu_custom_call.1} parent=1 // pred_region
      %2520 = dma.done [#allocation4], 1024
    $region65: #{tpu_custom_call.1} parent=1 // pred_fallthru
      _
    %2521 = vsyncpa [#allocation3], 1
    %2522 = vsyncpa [#allocation7], 1
    %2523 = vsyncpa [#allocation4], 1
    %2524 = vsyncpa [#allocation5], 1
    %2525 = vsyncpa [#allocation10], 1
    %2526 = vsyncpa [#allocation13], 1

</llo_original>
